<compile_context>
chip_gen: v7x
topology: tpu7x:2x2x1
jax: 0.10.0
libtpu: 0.0.40
codegen_flags: <defaults>
</compile_context>

<pallas_src>
import math

import jax
import jax.numpy as jnp
from jax.experimental import pallas as pl
from jax.experimental.pallas import tpu as pltpu  # noqa: F401  (TPU backend assumed)

EMBED_DIM = 64
NUM_HEADS = 8
HEAD_DIM = EMBED_DIM // NUM_HEADS
E2 = 2 * EMBED_DIM              # two attention problems packed on the lane axis
NGROUPS = E2 // HEAD_DIM        # 16 (problem, head) lane-groups of HEAD_DIM lanes


# --------------------------- fused Pallas kernel -----------------------------

def _fused_forward_kernel(patches_ref, conv_w_ref, conv_b_ref, pool_mat_ref,
                          pool_w_ref, rad_w_ref, feat_b_ref, radar_ref,
                          seg_ref, segt_ref, swap_ref,
                          w_self_ref, b_self_ref, w_cross_ref, b_cross_ref,
                          fc1_w_ref, fc1_b_ref, fc2_w_ref, fc2_b_ref,
                          o_ref):
    f32 = jnp.float32

    # ---- ImageCNN stand-in: 3x3 conv as im2col matmul (bf16 operands, f32 acc).
    conv = jnp.dot(patches_ref[...], conv_w_ref[...], preferred_element_type=f32)
    conv = jnp.maximum(conv + conv_b_ref[...], 0.0)                       # (BHW, C8)

    # Global average pool as a matmul with the (B, BHW) averaging matrix.
    pooled = jnp.dot(pool_mat_ref[...], conv, preferred_element_type=f32)  # (B, C8)

    # ---- [image_feat | radar_out] produced as one (B, 2E) slab via lane-padded
    #      weights (zero columns keep the two halves independent).
    feats = jnp.dot(pooled, pool_w_ref[...], preferred_element_type=f32)
    feats = feats + jnp.dot(radar_ref[...], rad_w_ref[...],
                            preferred_element_type=f32)
    feats = jnp.maximum(feats + feat_b_ref[...], 0.0)                     # (B, 2E)

    seg = seg_ref[...]      # (2E, G): lane -> (problem, head) group indicator
    segt = segt_ref[...]    # (G, 2E)
    scale = 1.0 / math.sqrt(HEAD_DIM)

    def dual_mha(xq, xkv, w_ref, b_ref):
        """Two independent MHA problems packed on lanes; block-diag weights.

        Sequence length is the batch axis B (the reference feeds (B,1,64)
        tensors to nn.MultiheadAttention with batch_first=False, i.e. L=B, N=1).
        """
        bias = b_ref[...]                                                 # (4, 2E)
        q = jnp.dot(xq, w_ref[0], preferred_element_type=f32) + bias[0:1, :]
        k = jnp.dot(xkv, w_ref[1], preferred_element_type=f32) + bias[1:2, :]
        v = jnp.dot(xkv, w_ref[2], preferred_element_type=f32) + bias[2:3, :]
        seq = xq.shape[0]                                                 # == B
        rows = []
        for i in range(seq):                                              # B iters
            prod = q[i:i + 1, :] * k                                      # (L, 2E)
            s = jnp.dot(prod, seg, preferred_element_type=f32) * scale    # (L, G)
            m = jnp.max(s, axis=0, keepdims=True)                         # (1, G)
            p = jnp.exp(s - m)                                            # (L, G)
            denom = jnp.sum(p, axis=0, keepdims=True)                     # (1, G)
            w_att = p / denom                                             # (L, G)
            w_lane = jnp.dot(w_att, segt, preferred_element_type=f32)     # (L, 2E)
            rows.append(jnp.sum(w_lane * v, axis=0, keepdims=True))       # (1, 2E)
        attn = jnp.concatenate(rows, axis=0)                              # (L, 2E)
        return jnp.dot(attn, w_ref[3], preferred_element_type=f32) + bias[3:4, :]

    # Self attention: problem0 = image (attn_image), problem1 = sound (attn_sound).
    self_out = dual_mha(feats, feats, w_self_ref, b_self_ref)             # (B, 2E)

    # Cross attention (shared weights, exactly as in the reference module):
    #   problem0: q=image_self, kv=radar_out ; problem1: q=sound_self, kv=image_feat
    # KV slab = feats with the two 64-lane halves swapped (permutation matmul).
    kv_cross = jnp.dot(feats, swap_ref[...], preferred_element_type=f32)  # (B, 2E)
    cross_out = dual_mha(self_out, kv_cross, w_cross_ref, b_cross_ref)    # == concat

    # ---- FC_final_block stand-in: Linear(2E,64)+ReLU -> Linear(64,2).
    h1 = jnp.maximum(
        jnp.dot(cross_out, fc1_w_ref[...], preferred_element_type=f32) + fc1_b_ref[...],
        0.0)
    o_ref[...] = (jnp.dot(h1, fc2_w_ref[...], preferred_element_type=f32)
                  + fc2_b_ref[...]).astype(o_ref.dtype)


def _full_block(a):
    zeros = (0,) * a.ndim
    return pl.BlockSpec(a.shape, lambda: zeros)


# --------------------------- forward wrapper ---------------------------------

def multi_modal_attention_forward(image_input_nchw, radar_input, fp):
    """Full forward; everything after im2col runs in one fused Pallas kernel."""
    B, Cin, H, W = image_input_nchw.shape

    # im2col patches for the 3x3 'same' conv (wrapper side; negligible at this size).
    # TODO(synk): for large images, accumulate the 9 taps in-kernel from an NHWC
    # HBM ref instead of materializing the 9x-expanded patch matrix.
    x = jnp.transpose(image_input_nchw, (0, 2, 3, 1)).astype(jnp.float32)
    xp = jnp.pad(x, ((0, 0), (1, 1), (1, 1), (0, 0)))
    patches = jnp.concatenate(
        [xp[:, kh:kh + H, kw:kw + W, :] for kh in range(3) for kw in range(3)],
        axis=-1).reshape(B * H * W, 9 * Cin).astype(jnp.bfloat16)

    inputs = (patches, fp["conv_w"], fp["conv_b"], fp["pool_mat"],
              fp["pool_w_pad"], fp["rad_w_pad"], fp["feat_b"],
              radar_input.astype(jnp.float32),
              fp["seg"], fp["segt"], fp["swap"],
              fp["w_self"], fp["b_self"], fp["w_cross"], fp["b_cross"],
              fp["fc1_w"], fp["fc1_b"], fp["fc2_w"], fp["fc2_b"])

    return pl.pallas_call(
        _fused_forward_kernel,
        out_shape=jax.ShapeDtypeStruct((B, 2), jnp.float32),
        in_specs=[_full_block(a) for a in inputs],
        out_specs=pl.BlockSpec((B, 2), lambda: (0, 0)),
    )(*inputs)


# --------------------------- parameter init ----------------------------------

def _uniform(key, shape, bound):
    return jax.random.uniform(key, shape, jnp.float32, -bound, bound)


def init_linear_params(key, fan_in, fan_out):
    kw, kb = jax.random.split(key)
    bound = 1.0 / math.sqrt(fan_in)
    return _uniform(kw, (fan_in, fan_out), bound), _uniform(kb, (1, fan_out), bound)


def init_mha_params(key, embed_dim):
    ks = jax.random.split(key, 8)
    bound = 1.0 / math.sqrt(embed_dim)
    wq_t = _uniform(ks[0], (embed_dim, embed_dim), bound)  # used as x @ W (pre-transposed)
    wk_t = _uniform(ks[1], (embed_dim, embed_dim), bound)
    wv_t = _uniform(ks[2], (embed_dim, embed_dim), bound)
    wo_t = _uniform(ks[3], (embed_dim, embed_dim), bound)
    biases = jnp.stack([_uniform(ks[4 + i], (embed_dim,), bound) for i in range(4)], axis=0)
    return wq_t, wk_t, wv_t, wo_t, biases


def pack_params(params, B, H, W):
    """Build the packed / padded constant tensors consumed by the fused kernel."""
    HW = H * W
    conv_w, conv_b, pool_w, pool_b = params["image_cnn"]
    rad_w, rad_b = params["radar"]

    # Global-average-pool as a matmul: pool_mat[b, m] = 1/HW iff row m belongs to batch b.
    owner = jnp.repeat(jnp.arange(B), HW)
    pool_mat = (jnp.arange(B)[:, None] == owner[None, :]).astype(jnp.float32) / HW

    # Lane-padded feature weights so [image_feat | radar_out] come out of one slab.
    c8 = pool_w.shape[0]
    rd = rad_w.shape[0]
    pool_w_pad = jnp.concatenate([pool_w, jnp.zeros((c8, EMBED_DIM), jnp.float32)], axis=1)
    rad_w_pad = jnp.concatenate([jnp.zeros((rd, EMBED_DIM), jnp.float32), rad_w], axis=1)
    feat_b = jnp.concatenate([pool_b, rad_b], axis=1)                      # (1, 2E)

    # (problem, head) lane-segment indicator matrices.
    g_of_e = jnp.arange(E2) // HEAD_DIM
    seg = (g_of_e[:, None] == jnp.arange(NGROUPS)[None, :]).astype(jnp.float32)  # (2E, G)
    segt = seg.T                                                                 # (G, 2E)

    # Lane-half swap permutation: kv_cross = feats @ swap swaps lanes [0:64] <-> [64:128].
    lanes = jnp.arange(E2)
    swap = (lanes[:, None] == ((lanes[None, :] + EMBED_DIM) % E2)).astype(jnp.float32)

    def blockdiag(a, b):
        z = jnp.zeros_like(a)
        return jnp.concatenate([jnp.concatenate([a, z], axis=1),
                                jnp.concatenate([z, b], axis=1)], axis=0)

    wq_i, wk_i, wv_i, wo_i, b_i = params["attn_image"]
    wq_s, wk_s, wv_s, wo_s, b_s = params["attn_sound"]
    wq_c, wk_c, wv_c, wo_c, b_c = params["attn_cross"]

    w_self = jnp.stack([blockdiag(wq_i, wq_s), blockdiag(wk_i, wk_s),
                        blockdiag(wv_i, wv_s), blockdiag(wo_i, wo_s)])     # (4, 2E, 2E)
    b_self = jnp.concatenate([b_i, b_s], axis=1)                           # (4, 2E)
    w_cross = jnp.stack([blockdiag(wq_c, wq_c), blockdiag(wk_c, wk_c),
                         blockdiag(wv_c, wv_c), blockdiag(wo_c, wo_c)])    # (4, 2E, 2E)
    b_cross = jnp.concatenate([b_c, b_c], axis=1)                          # (4, 2E)

    fc1_w, fc1_b = params["fc1"]
    fc2_w, fc2_b = params["fc2"]

    return {
        "conv_w": conv_w.astype(jnp.bfloat16), "conv_b": conv_b,
        "pool_mat": pool_mat, "pool_w_pad": pool_w_pad, "rad_w_pad": rad_w_pad,
        "feat_b": feat_b, "seg": seg, "segt": segt, "swap": swap,
        "w_self": w_self, "b_self": b_self, "w_cross": w_cross, "b_cross": b_cross,
        "fc1_w": fc1_w, "fc1_b": fc1_b, "fc2_w": fc2_w, "fc2_b": fc2_b,
    }


# --------------------------- main ---------------------------------------------

if __name__ == "__main__":
    key = jax.random.PRNGKey(0)
    keys = jax.random.split(key, 10)

    B, Cin, H, W = 2, 4, 16, 16
    RADAR_DIM = 32
    C8 = 8  # conv output channels of the Image_CNN stand-in

    # TODO(synk): preprocessor_blocks.{ImageCNNblock, radar_block, FC_final_block}
    # definitions are not available in the reference source; deterministic
    # stand-ins (conv3x3+ReLU+GAP+Linear->64, Linear->64+ReLU,
    # Linear(128,64)+ReLU->Linear(64,2)) are used, fully fused in Pallas.
    conv_w, conv_b = init_linear_params(keys[0], 9 * Cin, C8)
    pool_w, pool_b = init_linear_params(keys[1], C8, EMBED_DIM)
    rad_w, rad_b = init_linear_params(keys[2], RADAR_DIM, EMBED_DIM)

    params = {
        "image_cnn": (conv_w, conv_b, pool_w, pool_b),
        "radar": (rad_w, rad_b),
        "attn_image": init_mha_params(keys[3], EMBED_DIM),
        "attn_sound": init_mha_params(keys[4], EMBED_DIM),
        "attn_cross": init_mha_params(keys[5], EMBED_DIM),  # shared by both cross-attn calls (as in the reference)
        "fc1": init_linear_params(keys[6], 2 * EMBED_DIM, EMBED_DIM),
        "fc2": init_linear_params(keys[7], EMBED_DIM, 2),
    }
    fused_params = pack_params(params, B, H, W)

    image_input = jax.random.normal(keys[8], (B, Cin, H, W), jnp.float32)
    radar_input = jax.random.normal(keys[9], (B, RADAR_DIM), jnp.float32)

    forward = jax.jit(multi_modal_attention_forward)
    out = forward(image_input, radar_input, fused_params)
    jax.block_until_ready(out)
    assert out.shape == (B, 2)
    print("KERNEL_OK")
</pallas_src>

<mosaic_0001>
module attributes {stable_mosaic.version = 11 : i64} {
  func.func @_fused_forward_kernel(%arg0: memref<512x36xbf16, #tpu.memory_space<vmem>>, %arg1: memref<36x8xbf16, #tpu.memory_space<vmem>>, %arg2: memref<1x8xf32, #tpu.memory_space<vmem>>, %arg3: memref<2x512xf32, #tpu.memory_space<vmem>>, %arg4: memref<8x128xf32, #tpu.memory_space<vmem>>, %arg5: memref<32x128xf32, #tpu.memory_space<vmem>>, %arg6: memref<1x128xf32, #tpu.memory_space<vmem>>, %arg7: memref<2x32xf32, #tpu.memory_space<vmem>>, %arg8: memref<128x16xf32, #tpu.memory_space<vmem>>, %arg9: memref<16x128xf32, #tpu.memory_space<vmem>>, %arg10: memref<128x128xf32, #tpu.memory_space<vmem>>, %arg11: memref<4x128x128xf32, #tpu.memory_space<vmem>>, %arg12: memref<4x128xf32, #tpu.memory_space<vmem>>, %arg13: memref<4x128x128xf32, #tpu.memory_space<vmem>>, %arg14: memref<4x128xf32, #tpu.memory_space<vmem>>, %arg15: memref<128x64xf32, #tpu.memory_space<vmem>>, %arg16: memref<1x64xf32, #tpu.memory_space<vmem>>, %arg17: memref<64x2xf32, #tpu.memory_space<vmem>>, %arg18: memref<1x2xf32, #tpu.memory_space<vmem>>, %arg19: memref<2x2xf32, #tpu.memory_space<vmem>>) attributes {dimension_semantics = [], scalar_prefetch = 0 : i64, scratch_operands = 0 : i64, tpu.core_type = #tpu.core_type<tc>} {
    %c0 = arith.constant 0 : index
    %c0_0 = arith.constant 0 : index
    %0 = vector.load %arg0[%c0, %c0_0] : memref<512x36xbf16, #tpu.memory_space<vmem>>, vector<512x36xbf16>
    %c0_1 = arith.constant 0 : index
    %c0_2 = arith.constant 0 : index
    %1 = vector.load %arg1[%c0_1, %c0_2] : memref<36x8xbf16, #tpu.memory_space<vmem>>, vector<36x8xbf16>
    %cst = arith.constant dense<0.000000e+00> : vector<512x8xf32>
    %2 = tpu.matmul %0, %1, %cst {dimension_numbers = #tpu.dot_dimension_numbers<[1], [0], [0], [1], [0, 0, 1, 1], [], []>} : vector<512x36xbf16>, vector<36x8xbf16>, vector<512x8xf32> -> vector<512x8xf32>
    %c0_3 = arith.constant 0 : index
    %c0_4 = arith.constant 0 : index
    %3 = vector.load %arg2[%c0_3, %c0_4] : memref<1x8xf32, #tpu.memory_space<vmem>>, vector<1x8xf32>
    %4 = vector.broadcast %3 : vector<1x8xf32> to vector<512x8xf32>
    %5 = arith.addf %2, %4 : vector<512x8xf32>
    %cst_5 = arith.constant 0.000000e+00 : f32
    %6 = vector.broadcast %cst_5 : f32 to vector<512x8xf32>
    %7 = arith.maximumf %5, %6 : vector<512x8xf32>
    %c0_6 = arith.constant 0 : index
    %c0_7 = arith.constant 0 : index
    %8 = vector.load %arg3[%c0_6, %c0_7] : memref<2x512xf32, #tpu.memory_space<vmem>>, vector<2x512xf32>
    %cst_8 = arith.constant dense<0.000000e+00> : vector<2x8xf32>
    %9 = tpu.matmul %8, %7, %cst_8 {dimension_numbers = #tpu.dot_dimension_numbers<[1], [0], [0], [1], [0, 0, 1, 1], [], []>} : vector<2x512xf32>, vector<512x8xf32>, vector<2x8xf32> -> vector<2x8xf32>
    %c0_9 = arith.constant 0 : index
    %c0_10 = arith.constant 0 : index
    %10 = vector.load %arg4[%c0_9, %c0_10] : memref<8x128xf32, #tpu.memory_space<vmem>>, vector<8x128xf32>
    %cst_11 = arith.constant dense<0.000000e+00> : vector<2x128xf32>
    %11 = tpu.matmul %9, %10, %cst_11 {dimension_numbers = #tpu.dot_dimension_numbers<[1], [0], [0], [1], [0, 0, 1, 1], [], []>} : vector<2x8xf32>, vector<8x128xf32>, vector<2x128xf32> -> vector<2x128xf32>
    %c0_12 = arith.constant 0 : index
    %c0_13 = arith.constant 0 : index
    %12 = vector.load %arg7[%c0_12, %c0_13] : memref<2x32xf32, #tpu.memory_space<vmem>>, vector<2x32xf32>
    %c0_14 = arith.constant 0 : index
    %c0_15 = arith.constant 0 : index
    %13 = vector.load %arg5[%c0_14, %c0_15] : memref<32x128xf32, #tpu.memory_space<vmem>>, vector<32x128xf32>
    %cst_16 = arith.constant dense<0.000000e+00> : vector<2x128xf32>
    %14 = tpu.matmul %12, %13, %cst_16 {dimension_numbers = #tpu.dot_dimension_numbers<[1], [0], [0], [1], [0, 0, 1, 1], [], []>} : vector<2x32xf32>, vector<32x128xf32>, vector<2x128xf32> -> vector<2x128xf32>
    %15 = arith.addf %11, %14 : vector<2x128xf32>
    %c0_17 = arith.constant 0 : index
    %c0_18 = arith.constant 0 : index
    %16 = vector.load %arg6[%c0_17, %c0_18] : memref<1x128xf32, #tpu.memory_space<vmem>>, vector<1x128xf32>
    %17 = vector.broadcast %16 : vector<1x128xf32> to vector<2x128xf32>
    %18 = arith.addf %15, %17 : vector<2x128xf32>
    %cst_19 = arith.constant 0.000000e+00 : f32
    %19 = vector.broadcast %cst_19 : f32 to vector<2x128xf32>
    %20 = arith.maximumf %18, %19 : vector<2x128xf32>
    %c0_20 = arith.constant 0 : index
    %c0_21 = arith.constant 0 : index
    %21 = vector.load %arg8[%c0_20, %c0_21] : memref<128x16xf32, #tpu.memory_space<vmem>>, vector<128x16xf32>
    %c0_22 = arith.constant 0 : index
    %c0_23 = arith.constant 0 : index
    %22 = vector.load %arg9[%c0_22, %c0_23] : memref<16x128xf32, #tpu.memory_space<vmem>>, vector<16x128xf32>
    %c0_24 = arith.constant 0 : index
    %c0_25 = arith.constant 0 : index
    %23 = vector.load %arg12[%c0_24, %c0_25] : memref<4x128xf32, #tpu.memory_space<vmem>>, vector<4x128xf32>
    %c0_26 = arith.constant 0 : index
    %c0_27 = arith.constant 0 : index
    %c0_28 = arith.constant 0 : index
    %24 = vector.load %arg11[%c0_26, %c0_27, %c0_28] : memref<4x128x128xf32, #tpu.memory_space<vmem>>, vector<1x128x128xf32>
    %25 = vector.shape_cast %24 : vector<1x128x128xf32> to vector<128x128xf32>
    %cst_29 = arith.constant dense<0.000000e+00> : vector<2x128xf32>
    %26 = tpu.matmul %20, %25, %cst_29 {dimension_numbers = #tpu.dot_dimension_numbers<[1], [0], [0], [1], [0, 0, 1, 1], [], []>} : vector<2x128xf32>, vector<128x128xf32>, vector<2x128xf32> -> vector<2x128xf32>
    %27 = vector.extract_strided_slice %23 {offsets = [0, 0], sizes = [1, 128], strides = [1, 1]} : vector<4x128xf32> to vector<1x128xf32>
    %28 = vector.broadcast %27 : vector<1x128xf32> to vector<2x128xf32>
    %29 = arith.addf %26, %28 : vector<2x128xf32>
    %c1 = arith.constant 1 : index
    %c0_30 = arith.constant 0 : index
    %c0_31 = arith.constant 0 : index
    %30 = vector.load %arg11[%c1, %c0_30, %c0_31] : memref<4x128x128xf32, #tpu.memory_space<vmem>>, vector<1x128x128xf32>
    %31 = vector.shape_cast %30 : vector<1x128x128xf32> to vector<128x128xf32>
    %cst_32 = arith.constant dense<0.000000e+00> : vector<2x128xf32>
    %32 = tpu.matmul %20, %31, %cst_32 {dimension_numbers = #tpu.dot_dimension_numbers<[1], [0], [0], [1], [0, 0, 1, 1], [], []>} : vector<2x128xf32>, vector<128x128xf32>, vector<2x128xf32> -> vector<2x128xf32>
    %33 = vector.extract_strided_slice %23 {offsets = [1, 0], sizes = [1, 128], strides = [1, 1]} : vector<4x128xf32> to vector<1x128xf32>
    %34 = vector.broadcast %33 : vector<1x128xf32> to vector<2x128xf32>
    %35 = arith.addf %32, %34 : vector<2x128xf32>
    %c2 = arith.constant 2 : index
    %c0_33 = arith.constant 0 : index
    %c0_34 = arith.constant 0 : index
    %36 = vector.load %arg11[%c2, %c0_33, %c0_34] : memref<4x128x128xf32, #tpu.memory_space<vmem>>, vector<1x128x128xf32>
    %37 = vector.shape_cast %36 : vector<1x128x128xf32> to vector<128x128xf32>
    %cst_35 = arith.constant dense<0.000000e+00> : vector<2x128xf32>
    %38 = tpu.matmul %20, %37, %cst_35 {dimension_numbers = #tpu.dot_dimension_numbers<[1], [0], [0], [1], [0, 0, 1, 1], [], []>} : vector<2x128xf32>, vector<128x128xf32>, vector<2x128xf32> -> vector<2x128xf32>
    %39 = vector.extract_strided_slice %23 {offsets = [2, 0], sizes = [1, 128], strides = [1, 1]} : vector<4x128xf32> to vector<1x128xf32>
    %40 = vector.broadcast %39 : vector<1x128xf32> to vector<2x128xf32>
    %41 = arith.addf %38, %40 : vector<2x128xf32>
    %42 = vector.extract_strided_slice %29 {offsets = [0, 0], sizes = [1, 128], strides = [1, 1]} : vector<2x128xf32> to vector<1x128xf32>
    %43 = vector.broadcast %42 : vector<1x128xf32> to vector<2x128xf32>
    %44 = arith.mulf %43, %35 : vector<2x128xf32>
    %cst_36 = arith.constant dense<0.000000e+00> : vector<2x16xf32>
    %45 = tpu.matmul %44, %21, %cst_36 {dimension_numbers = #tpu.dot_dimension_numbers<[1], [0], [0], [1], [0, 0, 1, 1], [], []>} : vector<2x128xf32>, vector<128x16xf32>, vector<2x16xf32> -> vector<2x16xf32>
    %cst_37 = arith.constant 0.353553385 : f32
    %46 = vector.broadcast %cst_37 : f32 to vector<2x16xf32>
    %47 = arith.mulf %45, %46 : vector<2x16xf32>
    %cst_38 = arith.constant dense<0xFF800000> : vector<16xf32>
    %48 = vector.multi_reduction <maximumf>, %47, %cst_38 [0] : vector<2x16xf32> to vector<16xf32>
    %49 = vector.shape_cast %48 : vector<16xf32> to vector<1x16xf32>
    %50 = vector.broadcast %49 : vector<1x16xf32> to vector<2x16xf32>
    %51 = arith.subf %47, %50 : vector<2x16xf32>
    %52 = math.exp %51 : vector<2x16xf32>
    %cst_39 = arith.constant dense<0.000000e+00> : vector<16xf32>
    %53 = vector.multi_reduction <add>, %52, %cst_39 [0] : vector<2x16xf32> to vector<16xf32>
    %54 = vector.shape_cast %53 : vector<16xf32> to vector<1x16xf32>
    %55 = vector.broadcast %54 : vector<1x16xf32> to vector<2x16xf32>
    %56 = arith.divf %52, %55 : vector<2x16xf32>
    %cst_40 = arith.constant dense<0.000000e+00> : vector<2x128xf32>
    %57 = tpu.matmul %56, %22, %cst_40 {dimension_numbers = #tpu.dot_dimension_numbers<[1], [0], [0], [1], [0, 0, 1, 1], [], []>} : vector<2x16xf32>, vector<16x128xf32>, vector<2x128xf32> -> vector<2x128xf32>
    %58 = arith.mulf %57, %41 : vector<2x128xf32>
    %cst_41 = arith.constant dense<0.000000e+00> : vector<128xf32>
    %59 = vector.multi_reduction <add>, %58, %cst_41 [0] : vector<2x128xf32> to vector<128xf32>
    %60 = vector.shape_cast %59 : vector<128xf32> to vector<1x128xf32>
    %61 = vector.extract_strided_slice %29 {offsets = [1, 0], sizes = [1, 128], strides = [1, 1]} : vector<2x128xf32> to vector<1x128xf32>
    %62 = vector.broadcast %61 : vector<1x128xf32> to vector<2x128xf32>
    %63 = arith.mulf %62, %35 : vector<2x128xf32>
    %cst_42 = arith.constant dense<0.000000e+00> : vector<2x16xf32>
    %64 = tpu.matmul %63, %21, %cst_42 {dimension_numbers = #tpu.dot_dimension_numbers<[1], [0], [0], [1], [0, 0, 1, 1], [], []>} : vector<2x128xf32>, vector<128x16xf32>, vector<2x16xf32> -> vector<2x16xf32>
    %cst_43 = arith.constant 0.353553385 : f32
    %65 = vector.broadcast %cst_43 : f32 to vector<2x16xf32>
    %66 = arith.mulf %64, %65 : vector<2x16xf32>
    %cst_44 = arith.constant dense<0xFF800000> : vector<16xf32>
    %67 = vector.multi_reduction <maximumf>, %66, %cst_44 [0] : vector<2x16xf32> to vector<16xf32>
    %68 = vector.shape_cast %67 : vector<16xf32> to vector<1x16xf32>
    %69 = vector.broadcast %68 : vector<1x16xf32> to vector<2x16xf32>
    %70 = arith.subf %66, %69 : vector<2x16xf32>
    %71 = math.exp %70 : vector<2x16xf32>
    %cst_45 = arith.constant dense<0.000000e+00> : vector<16xf32>
    %72 = vector.multi_reduction <add>, %71, %cst_45 [0] : vector<2x16xf32> to vector<16xf32>
    %73 = vector.shape_cast %72 : vector<16xf32> to vector<1x16xf32>
    %74 = vector.broadcast %73 : vector<1x16xf32> to vector<2x16xf32>
    %75 = arith.divf %71, %74 : vector<2x16xf32>
    %cst_46 = arith.constant dense<0.000000e+00> : vector<2x128xf32>
    %76 = tpu.matmul %75, %22, %cst_46 {dimension_numbers = #tpu.dot_dimension_numbers<[1], [0], [0], [1], [0, 0, 1, 1], [], []>} : vector<2x16xf32>, vector<16x128xf32>, vector<2x128xf32> -> vector<2x128xf32>
    %77 = arith.mulf %76, %41 : vector<2x128xf32>
    %cst_47 = arith.constant dense<0.000000e+00> : vector<128xf32>
    %78 = vector.multi_reduction <add>, %77, %cst_47 [0] : vector<2x128xf32> to vector<128xf32>
    %79 = vector.shape_cast %78 : vector<128xf32> to vector<1x128xf32>
    %80 = tpu.concatenate %60, %79 in 0 : vector<1x128xf32>, vector<1x128xf32> -> vector<2x128xf32>
    %c3 = arith.constant 3 : index
    %c0_48 = arith.constant 0 : index
    %c0_49 = arith.constant 0 : index
    %81 = vector.load %arg11[%c3, %c0_48, %c0_49] : memref<4x128x128xf32, #tpu.memory_space<vmem>>, vector<1x128x128xf32>
    %82 = vector.shape_cast %81 : vector<1x128x128xf32> to vector<128x128xf32>
    %cst_50 = arith.constant dense<0.000000e+00> : vector<2x128xf32>
    %83 = tpu.matmul %80, %82, %cst_50 {dimension_numbers = #tpu.dot_dimension_numbers<[1], [0], [0], [1], [0, 0, 1, 1], [], []>} : vector<2x128xf32>, vector<128x128xf32>, vector<2x128xf32> -> vector<2x128xf32>
    %84 = vector.extract_strided_slice %23 {offsets = [3, 0], sizes = [1, 128], strides = [1, 1]} : vector<4x128xf32> to vector<1x128xf32>
    %85 = vector.broadcast %84 : vector<1x128xf32> to vector<2x128xf32>
    %86 = arith.addf %83, %85 : vector<2x128xf32>
    %c0_51 = arith.constant 0 : index
    %c0_52 = arith.constant 0 : index
    %87 = vector.load %arg10[%c0_51, %c0_52] : memref<128x128xf32, #tpu.memory_space<vmem>>, vector<128x128xf32>
    %cst_53 = arith.constant dense<0.000000e+00> : vector<2x128xf32>
    %88 = tpu.matmul %20, %87, %cst_53 {dimension_numbers = #tpu.dot_dimension_numbers<[1], [0], [0], [1], [0, 0, 1, 1], [], []>} : vector<2x128xf32>, vector<128x128xf32>, vector<2x128xf32> -> vector<2x128xf32>
    %c0_54 = arith.constant 0 : index
    %c0_55 = arith.constant 0 : index
    %89 = vector.load %arg14[%c0_54, %c0_55] : memref<4x128xf32, #tpu.memory_space<vmem>>, vector<4x128xf32>
    %c0_56 = arith.constant 0 : index
    %c0_57 = arith.constant 0 : index
    %c0_58 = arith.constant 0 : index
    %90 = vector.load %arg13[%c0_56, %c0_57, %c0_58] : memref<4x128x128xf32, #tpu.memory_space<vmem>>, vector<1x128x128xf32>
    %91 = vector.shape_cast %90 : vector<1x128x128xf32> to vector<128x128xf32>
    %cst_59 = arith.constant dense<0.000000e+00> : vector<2x128xf32>
    %92 = tpu.matmul %86, %91, %cst_59 {dimension_numbers = #tpu.dot_dimension_numbers<[1], [0], [0], [1], [0, 0, 1, 1], [], []>} : vector<2x128xf32>, vector<128x128xf32>, vector<2x128xf32> -> vector<2x128xf32>
    %93 = vector.extract_strided_slice %89 {offsets = [0, 0], sizes = [1, 128], strides = [1, 1]} : vector<4x128xf32> to vector<1x128xf32>
    %94 = vector.broadcast %93 : vector<1x128xf32> to vector<2x128xf32>
    %95 = arith.addf %92, %94 : vector<2x128xf32>
    %c1_60 = arith.constant 1 : index
    %c0_61 = arith.constant 0 : index
    %c0_62 = arith.constant 0 : index
    %96 = vector.load %arg13[%c1_60, %c0_61, %c0_62] : memref<4x128x128xf32, #tpu.memory_space<vmem>>, vector<1x128x128xf32>
    %97 = vector.shape_cast %96 : vector<1x128x128xf32> to vector<128x128xf32>
    %cst_63 = arith.constant dense<0.000000e+00> : vector<2x128xf32>
    %98 = tpu.matmul %88, %97, %cst_63 {dimension_numbers = #tpu.dot_dimension_numbers<[1], [0], [0], [1], [0, 0, 1, 1], [], []>} : vector<2x128xf32>, vector<128x128xf32>, vector<2x128xf32> -> vector<2x128xf32>
    %99 = vector.extract_strided_slice %89 {offsets = [1, 0], sizes = [1, 128], strides = [1, 1]} : vector<4x128xf32> to vector<1x128xf32>
    %100 = vector.broadcast %99 : vector<1x128xf32> to vector<2x128xf32>
    %101 = arith.addf %98, %100 : vector<2x128xf32>
    %c2_64 = arith.constant 2 : index
    %c0_65 = arith.constant 0 : index
    %c0_66 = arith.constant 0 : index
    %102 = vector.load %arg13[%c2_64, %c0_65, %c0_66] : memref<4x128x128xf32, #tpu.memory_space<vmem>>, vector<1x128x128xf32>
    %103 = vector.shape_cast %102 : vector<1x128x128xf32> to vector<128x128xf32>
    %cst_67 = arith.constant dense<0.000000e+00> : vector<2x128xf32>
    %104 = tpu.matmul %88, %103, %cst_67 {dimension_numbers = #tpu.dot_dimension_numbers<[1], [0], [0], [1], [0, 0, 1, 1], [], []>} : vector<2x128xf32>, vector<128x128xf32>, vector<2x128xf32> -> vector<2x128xf32>
    %105 = vector.extract_strided_slice %89 {offsets = [2, 0], sizes = [1, 128], strides = [1, 1]} : vector<4x128xf32> to vector<1x128xf32>
    %106 = vector.broadcast %105 : vector<1x128xf32> to vector<2x128xf32>
    %107 = arith.addf %104, %106 : vector<2x128xf32>
    %108 = vector.extract_strided_slice %95 {offsets = [0, 0], sizes = [1, 128], strides = [1, 1]} : vector<2x128xf32> to vector<1x128xf32>
    %109 = vector.broadcast %108 : vector<1x128xf32> to vector<2x128xf32>
    %110 = arith.mulf %109, %101 : vector<2x128xf32>
    %cst_68 = arith.constant dense<0.000000e+00> : vector<2x16xf32>
    %111 = tpu.matmul %110, %21, %cst_68 {dimension_numbers = #tpu.dot_dimension_numbers<[1], [0], [0], [1], [0, 0, 1, 1], [], []>} : vector<2x128xf32>, vector<128x16xf32>, vector<2x16xf32> -> vector<2x16xf32>
    %cst_69 = arith.constant 0.353553385 : f32
    %112 = vector.broadcast %cst_69 : f32 to vector<2x16xf32>
    %113 = arith.mulf %111, %112 : vector<2x16xf32>
    %cst_70 = arith.constant dense<0xFF800000> : vector<16xf32>
    %114 = vector.multi_reduction <maximumf>, %113, %cst_70 [0] : vector<2x16xf32> to vector<16xf32>
    %115 = vector.shape_cast %114 : vector<16xf32> to vector<1x16xf32>
    %116 = vector.broadcast %115 : vector<1x16xf32> to vector<2x16xf32>
    %117 = arith.subf %113, %116 : vector<2x16xf32>
    %118 = math.exp %117 : vector<2x16xf32>
    %cst_71 = arith.constant dense<0.000000e+00> : vector<16xf32>
    %119 = vector.multi_reduction <add>, %118, %cst_71 [0] : vector<2x16xf32> to vector<16xf32>
    %120 = vector.shape_cast %119 : vector<16xf32> to vector<1x16xf32>
    %121 = vector.broadcast %120 : vector<1x16xf32> to vector<2x16xf32>
    %122 = arith.divf %118, %121 : vector<2x16xf32>
    %cst_72 = arith.constant dense<0.000000e+00> : vector<2x128xf32>
    %123 = tpu.matmul %122, %22, %cst_72 {dimension_numbers = #tpu.dot_dimension_numbers<[1], [0], [0], [1], [0, 0, 1, 1], [], []>} : vector<2x16xf32>, vector<16x128xf32>, vector<2x128xf32> -> vector<2x128xf32>
    %124 = arith.mulf %123, %107 : vector<2x128xf32>
    %cst_73 = arith.constant dense<0.000000e+00> : vector<128xf32>
    %125 = vector.multi_reduction <add>, %124, %cst_73 [0] : vector<2x128xf32> to vector<128xf32>
    %126 = vector.shape_cast %125 : vector<128xf32> to vector<1x128xf32>
    %127 = vector.extract_strided_slice %95 {offsets = [1, 0], sizes = [1, 128], strides = [1, 1]} : vector<2x128xf32> to vector<1x128xf32>
    %128 = vector.broadcast %127 : vector<1x128xf32> to vector<2x128xf32>
    %129 = arith.mulf %128, %101 : vector<2x128xf32>
    %cst_74 = arith.constant dense<0.000000e+00> : vector<2x16xf32>
    %130 = tpu.matmul %129, %21, %cst_74 {dimension_numbers = #tpu.dot_dimension_numbers<[1], [0], [0], [1], [0, 0, 1, 1], [], []>} : vector<2x128xf32>, vector<128x16xf32>, vector<2x16xf32> -> vector<2x16xf32>
    %cst_75 = arith.constant 0.353553385 : f32
    %131 = vector.broadcast %cst_75 : f32 to vector<2x16xf32>
    %132 = arith.mulf %130, %131 : vector<2x16xf32>
    %cst_76 = arith.constant dense<0xFF800000> : vector<16xf32>
    %133 = vector.multi_reduction <maximumf>, %132, %cst_76 [0] : vector<2x16xf32> to vector<16xf32>
    %134 = vector.shape_cast %133 : vector<16xf32> to vector<1x16xf32>
    %135 = vector.broadcast %134 : vector<1x16xf32> to vector<2x16xf32>
    %136 = arith.subf %132, %135 : vector<2x16xf32>
    %137 = math.exp %136 : vector<2x16xf32>
    %cst_77 = arith.constant dense<0.000000e+00> : vector<16xf32>
    %138 = vector.multi_reduction <add>, %137, %cst_77 [0] : vector<2x16xf32> to vector<16xf32>
    %139 = vector.shape_cast %138 : vector<16xf32> to vector<1x16xf32>
    %140 = vector.broadcast %139 : vector<1x16xf32> to vector<2x16xf32>
    %141 = arith.divf %137, %140 : vector<2x16xf32>
    %cst_78 = arith.constant dense<0.000000e+00> : vector<2x128xf32>
    %142 = tpu.matmul %141, %22, %cst_78 {dimension_numbers = #tpu.dot_dimension_numbers<[1], [0], [0], [1], [0, 0, 1, 1], [], []>} : vector<2x16xf32>, vector<16x128xf32>, vector<2x128xf32> -> vector<2x128xf32>
    %143 = arith.mulf %142, %107 : vector<2x128xf32>
    %cst_79 = arith.constant dense<0.000000e+00> : vector<128xf32>
    %144 = vector.multi_reduction <add>, %143, %cst_79 [0] : vector<2x128xf32> to vector<128xf32>
    %145 = vector.shape_cast %144 : vector<128xf32> to vector<1x128xf32>
    %146 = tpu.concatenate %126, %145 in 0 : vector<1x128xf32>, vector<1x128xf32> -> vector<2x128xf32>
    %c3_80 = arith.constant 3 : index
    %c0_81 = arith.constant 0 : index
    %c0_82 = arith.constant 0 : index
    %147 = vector.load %arg13[%c3_80, %c0_81, %c0_82] : memref<4x128x128xf32, #tpu.memory_space<vmem>>, vector<1x128x128xf32>
    %148 = vector.shape_cast %147 : vector<1x128x128xf32> to vector<128x128xf32>
    %cst_83 = arith.constant dense<0.000000e+00> : vector<2x128xf32>
    %149 = tpu.matmul %146, %148, %cst_83 {dimension_numbers = #tpu.dot_dimension_numbers<[1], [0], [0], [1], [0, 0, 1, 1], [], []>} : vector<2x128xf32>, vector<128x128xf32>, vector<2x128xf32> -> vector<2x128xf32>
    %150 = vector.extract_strided_slice %89 {offsets = [3, 0], sizes = [1, 128], strides = [1, 1]} : vector<4x128xf32> to vector<1x128xf32>
    %151 = vector.broadcast %150 : vector<1x128xf32> to vector<2x128xf32>
    %152 = arith.addf %149, %151 : vector<2x128xf32>
    %c0_84 = arith.constant 0 : index
    %c0_85 = arith.constant 0 : index
    %153 = vector.load %arg15[%c0_84, %c0_85] : memref<128x64xf32, #tpu.memory_space<vmem>>, vector<128x64xf32>
    %cst_86 = arith.constant dense<0.000000e+00> : vector<2x64xf32>
    %154 = tpu.matmul %152, %153, %cst_86 {dimension_numbers = #tpu.dot_dimension_numbers<[1], [0], [0], [1], [0, 0, 1, 1], [], []>} : vector<2x128xf32>, vector<128x64xf32>, vector<2x64xf32> -> vector<2x64xf32>
    %c0_87 = arith.constant 0 : index
    %c0_88 = arith.constant 0 : index
    %155 = vector.load %arg16[%c0_87, %c0_88] : memref<1x64xf32, #tpu.memory_space<vmem>>, vector<1x64xf32>
    %156 = vector.broadcast %155 : vector<1x64xf32> to vector<2x64xf32>
    %157 = arith.addf %154, %156 : vector<2x64xf32>
    %cst_89 = arith.constant 0.000000e+00 : f32
    %158 = vector.broadcast %cst_89 : f32 to vector<2x64xf32>
    %159 = arith.maximumf %157, %158 : vector<2x64xf32>
    %c0_90 = arith.constant 0 : index
    %c0_91 = arith.constant 0 : index
    %160 = vector.load %arg17[%c0_90, %c0_91] : memref<64x2xf32, #tpu.memory_space<vmem>>, vector<64x2xf32>
    %cst_92 = arith.constant dense<0.000000e+00> : vector<2x2xf32>
    %161 = tpu.matmul %159, %160, %cst_92 {dimension_numbers = #tpu.dot_dimension_numbers<[1], [0], [0], [1], [0, 0, 1, 1], [], []>} : vector<2x64xf32>, vector<64x2xf32>, vector<2x2xf32> -> vector<2x2xf32>
    %c0_93 = arith.constant 0 : index
    %c0_94 = arith.constant 0 : index
    %162 = vector.load %arg18[%c0_93, %c0_94] : memref<1x2xf32, #tpu.memory_space<vmem>>, vector<1x2xf32>
    %163 = vector.broadcast %162 : vector<1x2xf32> to vector<2x2xf32>
    %164 = arith.addf %161, %163 : vector<2x2xf32>
    %c0_95 = arith.constant 0 : index
    %c0_96 = arith.constant 0 : index
    %165 = vector.load %arg19[%c0_95, %c0_96] : memref<2x2xf32, #tpu.memory_space<vmem>>, vector<2x2xf32>
    tpu.vector_store %arg19[%c0_95, %c0_96], %164 {strides = array<i32>} : memref<2x2xf32, #tpu.memory_space<vmem>>, vector<2x2xf32>,
    return
  }
}

</mosaic_0001>

<llo_original>
// kernel: multi_modal_attention_forward.1
$region0: #{multi_modal_attention_forward.1}
  #allocation0 [shape = 'u32[]', space=smem, size = 0x4, offset = 0x4, fixed_abs, tag = 'smem constant byte address 0x4 - core index']
  #allocation1 [shape = 'u32[144,128]{1,0:T(1,128)}', space=vmem, size = 0x12000, scoped, tag = 'internal scratch']
  %s0 = inlined_call_operand.vmem [shape: bf16[512,36], index: 0, kind: input, shape index: {}]
  %s1 = inlined_call_operand.vmem [shape: bf16[36,8], index: 1, kind: input, shape index: {}]
  %s2 = inlined_call_operand.vmem [shape: f32[1,8], index: 2, kind: input, shape index: {}]
  %s3 = inlined_call_operand.vmem [shape: f32[2,512], index: 3, kind: input, shape index: {}]
  %s4 = inlined_call_operand.vmem [shape: f32[8,128], index: 4, kind: input, shape index: {}]
  %s5 = inlined_call_operand.vmem [shape: f32[32,128], index: 5, kind: input, shape index: {}]
  %s6 = inlined_call_operand.vmem [shape: f32[1,128], index: 6, kind: input, shape index: {}]
  %s7 = inlined_call_operand.vmem [shape: f32[2,32], index: 7, kind: input, shape index: {}]
  %s8 = inlined_call_operand.vmem [shape: f32[128,16], index: 8, kind: input, shape index: {}]
  %s9 = inlined_call_operand.vmem [shape: f32[16,128], index: 9, kind: input, shape index: {}]
  %s10 = inlined_call_operand.vmem [shape: f32[128,128], index: 10, kind: input, shape index: {}]
  %s11 = inlined_call_operand.vmem [shape: f32[4,128,128], index: 11, kind: input, shape index: {}]
  %s12 = inlined_call_operand.vmem [shape: f32[4,128], index: 12, kind: input, shape index: {}]
  %s13 = inlined_call_operand.vmem [shape: f32[4,128,128], index: 13, kind: input, shape index: {}]
  %s14 = inlined_call_operand.vmem [shape: f32[4,128], index: 14, kind: input, shape index: {}]
  %s15 = inlined_call_operand.vmem [shape: f32[128,64], index: 15, kind: input, shape index: {}]
  %s16 = inlined_call_operand.vmem [shape: f32[1,64], index: 16, kind: input, shape index: {}]
  %s17 = inlined_call_operand.vmem [shape: f32[64,2], index: 17, kind: input, shape index: {}]
  %s18 = inlined_call_operand.vmem [shape: f32[1,2], index: 18, kind: input, shape index: {}]
  %s19 = inlined_call_operand.hbm [shape: f32[2,2], index: 19, kind: output, shape index: {}]
  %s20 = sld [smem:[#allocation0]]
  $region86: #{multi_modal_attention_forward.1} parent=0
    _
  %s22 = ssub.s32 1, %s20
  %s23 = scalar_select 0, %s22, %s20
  $region1: #{multi_modal_attention_forward.1} parent=0
    #allocation2 [shape = 'u8[1024]{0}', space=vmem, size = 0x400, scoped, tag = 'output window, operand 0, single buffered']
    #allocation3 [shape = 's32[1]{0}', space=sflag, size = 0x4, scoped, tag = 'scoped memory for multi_modal_attention_forward.1']
    %24 = vsyncpa [#allocation3], 0
    // Predicated region
    $region2: #{multi_modal_attention_forward.1} parent=1 // pred_check
      _
    $region3: #{multi_modal_attention_forward.1} parent=1 // pred_check_branch
      %26 = sbr.rel (0) target = $region5
    $region4: #{multi_modal_attention_forward.1} parent=1 // pred_region
      _
    $region5: #{multi_modal_attention_forward.1} parent=1 // pred_fallthru
      _
    // Predicated region
    $region6: #{multi_modal_attention_forward.1} parent=1 // pred_check
      _
    $region7: #{multi_modal_attention_forward.1} parent=1 // pred_check_branch
      %28 = sbr.rel (0) target = $region9
    $region8: #{multi_modal_attention_forward.1} parent=1 // pred_region
      _
    $region9: #{multi_modal_attention_forward.1} parent=1 // pred_fallthru
      _
    // Predicated region
    $region10: #{multi_modal_attention_forward.1} parent=1 // pred_check
      _
    $region11: #{multi_modal_attention_forward.1} parent=1 // pred_check_branch
      %30 = sbr.rel (0) target = $region13
    $region12: #{multi_modal_attention_forward.1} parent=1 // pred_region
      _
    $region13: #{multi_modal_attention_forward.1} parent=1 // pred_fallthru
      _
    // Predicated region
    $region14: #{multi_modal_attention_forward.1} parent=1 // pred_check
      _
    $region15: #{multi_modal_attention_forward.1} parent=1 // pred_check_branch
      %32 = sbr.rel (0) target = $region17
    $region16: #{multi_modal_attention_forward.1} parent=1 // pred_region
      _
    $region17: #{multi_modal_attention_forward.1} parent=1 // pred_fallthru
      _
    // Predicated region
    $region18: #{multi_modal_attention_forward.1} parent=1 // pred_check
      _
    $region19: #{multi_modal_attention_forward.1} parent=1 // pred_check_branch
      %34 = sbr.rel (0) target = $region21
    $region20: #{multi_modal_attention_forward.1} parent=1 // pred_region
      _
    $region21: #{multi_modal_attention_forward.1} parent=1 // pred_fallthru
      _
    // Predicated region
    $region22: #{multi_modal_attention_forward.1} parent=1 // pred_check
      _
    $region23: #{multi_modal_attention_forward.1} parent=1 // pred_check_branch
      %36 = sbr.rel (0) target = $region25
    $region24: #{multi_modal_attention_forward.1} parent=1 // pred_region
      _
    $region25: #{multi_modal_attention_forward.1} parent=1 // pred_fallthru
      _
    // Predicated region
    $region26: #{multi_modal_attention_forward.1} parent=1 // pred_check
      _
    $region27: #{multi_modal_attention_forward.1} parent=1 // pred_check_branch
      %38 = sbr.rel (0) target = $region29
    $region28: #{multi_modal_attention_forward.1} parent=1 // pred_region
      _
    $region29: #{multi_modal_attention_forward.1} parent=1 // pred_fallthru
      _
    // Predicated region
    $region30: #{multi_modal_attention_forward.1} parent=1 // pred_check
      _
    $region31: #{multi_modal_attention_forward.1} parent=1 // pred_check_branch
      %40 = sbr.rel (0) target = $region33
    $region32: #{multi_modal_attention_forward.1} parent=1 // pred_region
      _
    $region33: #{multi_modal_attention_forward.1} parent=1 // pred_fallthru
      _
    // Predicated region
    $region34: #{multi_modal_attention_forward.1} parent=1 // pred_check
      _
    $region35: #{multi_modal_attention_forward.1} parent=1 // pred_check_branch
      %42 = sbr.rel (0) target = $region37
    $region36: #{multi_modal_attention_forward.1} parent=1 // pred_region
      _
    $region37: #{multi_modal_attention_forward.1} parent=1 // pred_fallthru
      _
    // Predicated region
    $region38: #{multi_modal_attention_forward.1} parent=1 // pred_check
      _
    $region39: #{multi_modal_attention_forward.1} parent=1 // pred_check_branch
      %44 = sbr.rel (0) target = $region41
    $region40: #{multi_modal_attention_forward.1} parent=1 // pred_region
      _
    $region41: #{multi_modal_attention_forward.1} parent=1 // pred_fallthru
      _
    // Predicated region
    $region42: #{multi_modal_attention_forward.1} parent=1 // pred_check
      _
    $region43: #{multi_modal_attention_forward.1} parent=1 // pred_check_branch
      %46 = sbr.rel (0) target = $region45
    $region44: #{multi_modal_attention_forward.1} parent=1 // pred_region
      _
    $region45: #{multi_modal_attention_forward.1} parent=1 // pred_fallthru
      _
    // Predicated region
    $region46: #{multi_modal_attention_forward.1} parent=1 // pred_check
      _
    $region47: #{multi_modal_attention_forward.1} parent=1 // pred_check_branch
      %48 = sbr.rel (0) target = $region49
    $region48: #{multi_modal_attention_forward.1} parent=1 // pred_region
      _
    $region49: #{multi_modal_attention_forward.1} parent=1 // pred_fallthru
      _
    // Predicated region
    $region50: #{multi_modal_attention_forward.1} parent=1 // pred_check
      _
    $region51: #{multi_modal_attention_forward.1} parent=1 // pred_check_branch
      %50 = sbr.rel (0) target = $region53
    $region52: #{multi_modal_attention_forward.1} parent=1 // pred_region
      _
    $region53: #{multi_modal_attention_forward.1} parent=1 // pred_fallthru
      _
    // Predicated region
    $region54: #{multi_modal_attention_forward.1} parent=1 // pred_check
      _
    $region55: #{multi_modal_attention_forward.1} parent=1 // pred_check_branch
      %52 = sbr.rel (0) target = $region57
    $region56: #{multi_modal_attention_forward.1} parent=1 // pred_region
      _
    $region57: #{multi_modal_attention_forward.1} parent=1 // pred_fallthru
      _
    // Predicated region
    $region58: #{multi_modal_attention_forward.1} parent=1 // pred_check
      _
    $region59: #{multi_modal_attention_forward.1} parent=1 // pred_check_branch
      %54 = sbr.rel (0) target = $region61
    $region60: #{multi_modal_attention_forward.1} parent=1 // pred_region
      _
    $region61: #{multi_modal_attention_forward.1} parent=1 // pred_fallthru
      _
    // Predicated region
    $region62: #{multi_modal_attention_forward.1} parent=1 // pred_check
      _
    $region63: #{multi_modal_attention_forward.1} parent=1 // pred_check_branch
      %56 = sbr.rel (0) target = $region65
    $region64: #{multi_modal_attention_forward.1} parent=1 // pred_region
      _
    $region65: #{multi_modal_attention_forward.1} parent=1 // pred_fallthru
      _
    // Predicated region
    $region66: #{multi_modal_attention_forward.1} parent=1 // pred_check
      _
    $region67: #{multi_modal_attention_forward.1} parent=1 // pred_check_branch
      %58 = sbr.rel (0) target = $region69
    $region68: #{multi_modal_attention_forward.1} parent=1 // pred_region
      _
    $region69: #{multi_modal_attention_forward.1} parent=1 // pred_fallthru
      _
    // Predicated region
    $region70: #{multi_modal_attention_forward.1} parent=1 // pred_check
      _
    $region71: #{multi_modal_attention_forward.1} parent=1 // pred_check_branch
      %60 = sbr.rel (0) target = $region73
    $region72: #{multi_modal_attention_forward.1} parent=1 // pred_region
      _
    $region73: #{multi_modal_attention_forward.1} parent=1 // pred_fallthru
      _
    // Predicated region
    $region74: #{multi_modal_attention_forward.1} parent=1 // pred_check
      _
    $region75: #{multi_modal_attention_forward.1} parent=1 // pred_check_branch
      %62 = sbr.rel (0) target = $region77
    $region76: #{multi_modal_attention_forward.1} parent=1 // pred_region
      _
    $region77: #{multi_modal_attention_forward.1} parent=1 // pred_fallthru
      _
    %v64 = vld [vmem:[%s0] sm:$0xf]
    %v65 = vld [vmem:[%s0 + $0x4] sm:$0xf]
    %v66 = vld [vmem:[%s0 + $0x8] sm:$0xf]
    %v67 = vld [vmem:[%s0 + $0xc] sm:$0xf]
    %v68 = vld [vmem:[%s0 + $0x10] sm:$0xf]
    %v69 = vld [vmem:[%s0 + $0x14] sm:$0xf]
    %v70 = vld [vmem:[%s0 + $0x18] sm:$0xf]
    %v71 = vld [vmem:[%s0 + $0x1c] sm:$0xf]
    %v72 = vld [vmem:[%s0 + $0x20] sm:$0xf]
    %v73 = vld [vmem:[%s0 + $0x24] sm:$0xf]
    %v74 = vld [vmem:[%s0 + $0x28] sm:$0xf]
    %v75 = vld [vmem:[%s0 + $0x2c] sm:$0xf]
    %v76 = vld [vmem:[%s0 + $0x30] sm:$0xf]
    %v77 = vld [vmem:[%s0 + $0x34] sm:$0xf]
    %v78 = vld [vmem:[%s0 + $0x38] sm:$0xf]
    %v79 = vld [vmem:[%s0 + $0x3c] sm:$0xf]
    %v80 = vld [vmem:[%s0 + $0x40] sm:$0xf]
    %v81 = vld [vmem:[%s0 + $0x44] sm:$0xf]
    %v82 = vld [vmem:[%s0 + $0x48] sm:$0xf]
    %v83 = vld [vmem:[%s0 + $0x4c] sm:$0xf]
    %v84 = vld [vmem:[%s0 + $0x50] sm:$0xf]
    %v85 = vld [vmem:[%s0 + $0x54] sm:$0xf]
    %v86 = vld [vmem:[%s0 + $0x58] sm:$0xf]
    %v87 = vld [vmem:[%s0 + $0x5c] sm:$0xf]
    %v88 = vld [vmem:[%s0 + $0x60] sm:$0xf]
    %v89 = vld [vmem:[%s0 + $0x64] sm:$0xf]
    %v90 = vld [vmem:[%s0 + $0x68] sm:$0xf]
    %v91 = vld [vmem:[%s0 + $0x6c] sm:$0xf]
    %v92 = vld [vmem:[%s0 + $0x70] sm:$0xf]
    %v93 = vld [vmem:[%s0 + $0x74] sm:$0xf]
    %v94 = vld [vmem:[%s0 + $0x78] sm:$0xf]
    %v95 = vld [vmem:[%s0 + $0x7c] sm:$0xf]
    %v96 = vld [vmem:[%s0 + $0x80] sm:$0xf]
    %v97 = vld [vmem:[%s0 + $0x84] sm:$0xf]
    %v98 = vld [vmem:[%s0 + $0x88] sm:$0xf]
    %v99 = vld [vmem:[%s0 + $0x8c] sm:$0xf]
    %v100 = vld [vmem:[%s0 + $0x90] sm:$0xf]
    %v101 = vld [vmem:[%s0 + $0x94] sm:$0xf]
    %v102 = vld [vmem:[%s0 + $0x98] sm:$0xf]
    %v103 = vld [vmem:[%s0 + $0x9c] sm:$0xf]
    %v104 = vld [vmem:[%s0 + $0xa0] sm:$0xf]
    %v105 = vld [vmem:[%s0 + $0xa4] sm:$0xf]
    %v106 = vld [vmem:[%s0 + $0xa8] sm:$0xf]
    %v107 = vld [vmem:[%s0 + $0xac] sm:$0xf]
    %v108 = vld [vmem:[%s0 + $0xb0] sm:$0xf]
    %v109 = vld [vmem:[%s0 + $0xb4] sm:$0xf]
    %v110 = vld [vmem:[%s0 + $0xb8] sm:$0xf]
    %v111 = vld [vmem:[%s0 + $0xbc] sm:$0xf]
    %v112 = vld [vmem:[%s0 + $0xc0] sm:$0xf]
    %v113 = vld [vmem:[%s0 + $0xc4] sm:$0xf]
    %v114 = vld [vmem:[%s0 + $0xc8] sm:$0xf]
    %v115 = vld [vmem:[%s0 + $0xcc] sm:$0xf]
    %v116 = vld [vmem:[%s0 + $0xd0] sm:$0xf]
    %v117 = vld [vmem:[%s0 + $0xd4] sm:$0xf]
    %v118 = vld [vmem:[%s0 + $0xd8] sm:$0xf]
    %v119 = vld [vmem:[%s0 + $0xdc] sm:$0xf]
    %v120 = vld [vmem:[%s0 + $0xe0] sm:$0xf]
    %v121 = vld [vmem:[%s0 + $0xe4] sm:$0xf]
    %v122 = vld [vmem:[%s0 + $0xe8] sm:$0xf]
    %v123 = vld [vmem:[%s0 + $0xec] sm:$0xf]
    %v124 = vld [vmem:[%s0 + $0xf0] sm:$0xf]
    %v125 = vld [vmem:[%s0 + $0xf4] sm:$0xf]
    %v126 = vld [vmem:[%s0 + $0xf8] sm:$0xf]
    %v127 = vld [vmem:[%s0 + $0xfc] sm:$0xf]
    %v128 = vld [vmem:[%s1] sm:$0xf]
    %v129 = vld [vmem:[%s1 + $0x4] sm:$0xf]
    %v130 = vld [vmem:[%s1 + $0x8] sm:$0xf]
    %v131 = vld [vmem:[%s1 + $0xc] sm:$0xf]
    %v132 = vld [vmem:[%s1 + $0x10] sm:$0x3]
    %v133 = vld [vmem:[%s2] sm:$0x1]
    %v135 = vlaneseq
    %v136 = vshrl.u32 %v135, 7
    %v137 = vsub.s32 0, %v136
    %v138 = vrot.slane %v133, %v137
    %v204 = vunpack.c.l.b16 %v64
    %v205 = vunpack.c.l.b16 %v65
    %v206 = vunpack.c.l.b16 %v66
    %v207 = vunpack.c.l.b16 %v67
    %v208 = vunpack.c.l.b16 %v68
    %v209 = vunpack.c.l.b16 %v69
    %v210 = vunpack.c.l.b16 %v70
    %v211 = vunpack.c.l.b16 %v71
    %v212 = vunpack.c.l.b16 %v72
    %v213 = vunpack.c.l.b16 %v73
    %v214 = vunpack.c.l.b16 %v74
    %v215 = vunpack.c.l.b16 %v75
    %v216 = vunpack.c.l.b16 %v76
    %v217 = vunpack.c.l.b16 %v77
    %v218 = vunpack.c.l.b16 %v78
    %v219 = vunpack.c.l.b16 %v79
    %v220 = vunpack.c.l.b16 %v80
    %v221 = vunpack.c.l.b16 %v81
    %v222 = vunpack.c.l.b16 %v82
    %v223 = vunpack.c.l.b16 %v83
    %v224 = vunpack.c.l.b16 %v84
    %v225 = vunpack.c.l.b16 %v85
    %v226 = vunpack.c.l.b16 %v86
    %v227 = vunpack.c.l.b16 %v87
    %v228 = vunpack.c.l.b16 %v88
    %v229 = vunpack.c.l.b16 %v89
    %v230 = vunpack.c.l.b16 %v90
    %v231 = vunpack.c.l.b16 %v91
    %v232 = vunpack.c.l.b16 %v92
    %v233 = vunpack.c.l.b16 %v93
    %v234 = vunpack.c.l.b16 %v94
    %v235 = vunpack.c.l.b16 %v95
    %v236 = vunpack.c.l.b16 %v96
    %v237 = vunpack.c.l.b16 %v97
    %v238 = vunpack.c.l.b16 %v98
    %v239 = vunpack.c.l.b16 %v99
    %v240 = vunpack.c.l.b16 %v100
    %v241 = vunpack.c.l.b16 %v101
    %v242 = vunpack.c.l.b16 %v102
    %v243 = vunpack.c.l.b16 %v103
    %v244 = vunpack.c.l.b16 %v104
    %v245 = vunpack.c.l.b16 %v105
    %v246 = vunpack.c.l.b16 %v106
    %v247 = vunpack.c.l.b16 %v107
    %v248 = vunpack.c.l.b16 %v108
    %v249 = vunpack.c.l.b16 %v109
    %v250 = vunpack.c.l.b16 %v110
    %v251 = vunpack.c.l.b16 %v111
    %v252 = vunpack.c.l.b16 %v112
    %v253 = vunpack.c.l.b16 %v113
    %v254 = vunpack.c.l.b16 %v114
    %v255 = vunpack.c.l.b16 %v115
    %v256 = vunpack.c.l.b16 %v116
    %v257 = vunpack.c.l.b16 %v117
    %v258 = vunpack.c.l.b16 %v118
    %v259 = vunpack.c.l.b16 %v119
    %v260 = vunpack.c.l.b16 %v120
    %v261 = vunpack.c.l.b16 %v121
    %v262 = vunpack.c.l.b16 %v122
    %v263 = vunpack.c.l.b16 %v123
    %v264 = vunpack.c.l.b16 %v124
    %v265 = vunpack.c.l.b16 %v125
    %v266 = vunpack.c.l.b16 %v126
    %v267 = vunpack.c.l.b16 %v127
    %v268 = vpack.c.b16 %v205, %v204
    %v269 = vpack.c.b16 %v207, %v206
    %v270 = vpack.c.b16 %v209, %v208
    %v271 = vpack.c.b16 %v211, %v210
    %v272 = vpack.c.b16 %v213, %v212
    %v273 = vpack.c.b16 %v215, %v214
    %v274 = vpack.c.b16 %v217, %v216
    %v275 = vpack.c.b16 %v219, %v218
    %v276 = vpack.c.b16 %v221, %v220
    %v277 = vpack.c.b16 %v223, %v222
    %v278 = vpack.c.b16 %v225, %v224
    %v279 = vpack.c.b16 %v227, %v226
    %v280 = vpack.c.b16 %v229, %v228
    %v281 = vpack.c.b16 %v231, %v230
    %v282 = vpack.c.b16 %v233, %v232
    %v283 = vpack.c.b16 %v235, %v234
    %v284 = vpack.c.b16 %v237, %v236
    %v285 = vpack.c.b16 %v239, %v238
    %v286 = vpack.c.b16 %v241, %v240
    %v287 = vpack.c.b16 %v243, %v242
    %v288 = vpack.c.b16 %v245, %v244
    %v289 = vpack.c.b16 %v247, %v246
    %v290 = vpack.c.b16 %v249, %v248
    %v291 = vpack.c.b16 %v251, %v250
    %v292 = vpack.c.b16 %v253, %v252
    %v293 = vpack.c.b16 %v255, %v254
    %v294 = vpack.c.b16 %v257, %v256
    %v295 = vpack.c.b16 %v259, %v258
    %v296 = vpack.c.b16 %v261, %v260
    %v297 = vpack.c.b16 %v263, %v262
    %v298 = vpack.c.b16 %v265, %v264
    %v299 = vpack.c.b16 %v267, %v266
    %v305 = vunpack.c.l.b16 %v128
    %v306 = vunpack.c.l.b16 %v129
    %v307 = vunpack.c.l.b16 %v130
    %v308 = vunpack.c.l.b16 %v131
    %v309 = vunpack.c.l.b16 %v132
    %v310 = vpack.c.b16 %v306, %v305
    %v311 = vpack.c.b16 %v308, %v307
    %v312 = vpack.c.b16 %v309, %v309
    %vm315 = vcmask 293888
    %v317 = vsel %vm315, %v268, 0
    %v320 = vsel %vm315, %v269, 0
    %v323 = vsel %vm315, %v270, 0
    %v326 = vsel %vm315, %v271, 0
    %v329 = vsel %vm315, %v272, 0
    %v332 = vsel %vm315, %v273, 0
    %v335 = vsel %vm315, %v274, 0
    %v338 = vsel %vm315, %v275, 0
    %v341 = vsel %vm315, %v276, 0
    %v344 = vsel %vm315, %v277, 0
    %v347 = vsel %vm315, %v278, 0
    %v350 = vsel %vm315, %v279, 0
    %v353 = vsel %vm315, %v280, 0
    %v356 = vsel %vm315, %v281, 0
    %v359 = vsel %vm315, %v282, 0
    %v362 = vsel %vm315, %v283, 0
    %v365 = vsel %vm315, %v284, 0
    %v368 = vsel %vm315, %v285, 0
    %v371 = vsel %vm315, %v286, 0
    %v374 = vsel %vm315, %v287, 0
    %v377 = vsel %vm315, %v288, 0
    %v380 = vsel %vm315, %v289, 0
    %v383 = vsel %vm315, %v290, 0
    %v386 = vsel %vm315, %v291, 0
    %v389 = vsel %vm315, %v292, 0
    %v392 = vsel %vm315, %v293, 0
    %v395 = vsel %vm315, %v294, 0
    %v398 = vsel %vm315, %v295, 0
    %v401 = vsel %vm315, %v296, 0
    %v404 = vsel %vm315, %v297, 0
    %v407 = vsel %vm315, %v298, 0
    %v410 = vsel %vm315, %v299, 0
    %vm412 = vcmask 1041408
    %v414 = vsel %vm412, %v312, 0
    %416 = vmatprep.subr.bf16.mxu0 0
    %417 = vmatpush1.bf16.msra.mxu0 %v310
    %418 = vmatprep.subr.bf16.mxu0 0
    %419 = vmatpush1.bf16.msra.mxu0 %v311
    %420 = vmatprep.subr.bf16.mxu0 0
    %421 = vmatpush1.bf16.msra.mxu0 %v414
    %422 = vmatprep.subr.bf16.mxu0 0
    %423 = vmatpush1.bf16.msra.mxu0 0
    %424 = vmatprep.subr.bf16.mxu0 0
    %425 = vmatpush1.bf16.msra.mxu0 0
    %426 = vmatprep.subr.bf16.mxu0 0
    %427 = vmatpush1.bf16.msra.mxu0 0
    %428 = vmatprep.subr.bf16.mxu0 0
    %429 = vmatpush1.bf16.msra.mxu0 0
    %430 = vmatprep.subr.bf16.mxu0 0
    %431 = vmatpush1.bf16.msra.mxu0 0
    %432 = vmatprep.subr.bf16.mxu0 0
    %433 = vmatpush1.bf16.msra.mxu0 0
    %434 = vmatprep.subr.bf16.mxu0 0
    %435 = vmatpush1.bf16.msra.mxu0 0
    %436 = vmatprep.subr.bf16.mxu0 0
    %437 = vmatpush1.bf16.msra.mxu0 0
    %438 = vmatprep.subr.bf16.mxu0 0
    %439 = vmatpush1.bf16.msra.mxu0 0
    %440 = vmatprep.subr.bf16.mxu0 0
    %441 = vmatpush1.bf16.msra.mxu0 0
    %442 = vmatprep.subr.bf16.mxu0 0
    %443 = vmatpush1.bf16.msra.mxu0 0
    %444 = vmatprep.subr.bf16.mxu0 0
    %445 = vmatpush1.bf16.msra.mxu0 0
    %446 = vmatprep.subr.bf16.mxu0 0
    %447 = vmatpush1.bf16.msra.mxu0 0
    %448 = vmatprep.mubr.bf16.mxu0 0
    %449 = vmatmul.mubr.bf16.gmra.mrb[0].mxu0 %v317
    %v450 = vpop.f32.mrb[0].mxu0
    %v451 = vadd.f32 %v138, %v450
    %v452 = vpop.f32.mrb[0].mxu0
    %v453 = vpop.f32.mrb[0].mxu0
    %v454 = vadd.f32 %v138, %v453
    %v455 = vpop.f32.mrb[0].mxu0
    %456 = vmatprep.mubr.bf16.mxu0 0
    %457 = vmatmul.mubr.bf16.gmra.mrb[0].mxu0 %v320
    %v458 = vpop.f32.mrb[0].mxu0
    %v459 = vadd.f32 %v138, %v458
    %v460 = vpop.f32.mrb[0].mxu0
    %v461 = vpop.f32.mrb[0].mxu0
    %v462 = vadd.f32 %v138, %v461
    %v463 = vpop.f32.mrb[0].mxu0
    %464 = vmatprep.mubr.bf16.mxu0 0
    %465 = vmatmul.mubr.bf16.gmra.mrb[0].mxu0 %v323
    %v466 = vpop.f32.mrb[0].mxu0
    %v467 = vadd.f32 %v138, %v466
    %v468 = vpop.f32.mrb[0].mxu0
    %v469 = vpop.f32.mrb[0].mxu0
    %v470 = vadd.f32 %v138, %v469
    %v471 = vpop.f32.mrb[0].mxu0
    %472 = vmatprep.mubr.bf16.mxu0 0
    %473 = vmatmul.mubr.bf16.gmra.mrb[0].mxu0 %v326
    %v474 = vpop.f32.mrb[0].mxu0
    %v475 = vadd.f32 %v138, %v474
    %v476 = vpop.f32.mrb[0].mxu0
    %v477 = vpop.f32.mrb[0].mxu0
    %v478 = vadd.f32 %v138, %v477
    %v479 = vpop.f32.mrb[0].mxu0
    %480 = vmatprep.mubr.bf16.mxu0 0
    %481 = vmatmul.mubr.bf16.gmra.mrb[0].mxu0 %v329
    %v482 = vpop.f32.mrb[0].mxu0
    %v483 = vadd.f32 %v138, %v482
    %v484 = vpop.f32.mrb[0].mxu0
    %v485 = vpop.f32.mrb[0].mxu0
    %v486 = vadd.f32 %v138, %v485
    %v487 = vpop.f32.mrb[0].mxu0
    %488 = vmatprep.mubr.bf16.mxu0 0
    %489 = vmatmul.mubr.bf16.gmra.mrb[0].mxu0 %v332
    %v490 = vpop.f32.mrb[0].mxu0
    %v491 = vadd.f32 %v138, %v490
    %v492 = vpop.f32.mrb[0].mxu0
    %v493 = vpop.f32.mrb[0].mxu0
    %v494 = vadd.f32 %v138, %v493
    %v495 = vpop.f32.mrb[0].mxu0
    %496 = vmatprep.mubr.bf16.mxu0 0
    %497 = vmatmul.mubr.bf16.gmra.mrb[0].mxu0 %v335
    %v498 = vpop.f32.mrb[0].mxu0
    %v499 = vadd.f32 %v138, %v498
    %v500 = vpop.f32.mrb[0].mxu0
    %v501 = vpop.f32.mrb[0].mxu0
    %v502 = vadd.f32 %v138, %v501
    %v503 = vpop.f32.mrb[0].mxu0
    %504 = vmatprep.mubr.bf16.mxu0 0
    %505 = vmatmul.mubr.bf16.gmra.mrb[0].mxu0 %v338
    %v506 = vpop.f32.mrb[0].mxu0
    %v507 = vadd.f32 %v138, %v506
    %v508 = vpop.f32.mrb[0].mxu0
    %v509 = vpop.f32.mrb[0].mxu0
    %v510 = vadd.f32 %v138, %v509
    %v511 = vpop.f32.mrb[0].mxu0
    %512 = vmatprep.mubr.bf16.mxu0 0
    %513 = vmatmul.mubr.bf16.gmra.mrb[0].mxu0 %v341
    %v514 = vpop.f32.mrb[0].mxu0
    %v515 = vadd.f32 %v138, %v514
    %v516 = vpop.f32.mrb[0].mxu0
    %v517 = vpop.f32.mrb[0].mxu0
    %v518 = vadd.f32 %v138, %v517
    %v519 = vpop.f32.mrb[0].mxu0
    %520 = vmatprep.mubr.bf16.mxu0 0
    %521 = vmatmul.mubr.bf16.gmra.mrb[0].mxu0 %v344
    %v522 = vpop.f32.mrb[0].mxu0
    %v523 = vadd.f32 %v138, %v522
    %v524 = vpop.f32.mrb[0].mxu0
    %v525 = vpop.f32.mrb[0].mxu0
    %v526 = vadd.f32 %v138, %v525
    %v527 = vpop.f32.mrb[0].mxu0
    %528 = vmatprep.mubr.bf16.mxu0 0
    %529 = vmatmul.mubr.bf16.gmra.mrb[0].mxu0 %v347
    %v530 = vpop.f32.mrb[0].mxu0
    %v531 = vadd.f32 %v138, %v530
    %v532 = vpop.f32.mrb[0].mxu0
    %v533 = vpop.f32.mrb[0].mxu0
    %v534 = vadd.f32 %v138, %v533
    %v535 = vpop.f32.mrb[0].mxu0
    %536 = vmatprep.mubr.bf16.mxu0 0
    %537 = vmatmul.mubr.bf16.gmra.mrb[0].mxu0 %v350
    %v538 = vpop.f32.mrb[0].mxu0
    %v539 = vadd.f32 %v138, %v538
    %v540 = vpop.f32.mrb[0].mxu0
    %v541 = vpop.f32.mrb[0].mxu0
    %v542 = vadd.f32 %v138, %v541
    %v543 = vpop.f32.mrb[0].mxu0
    %544 = vmatprep.mubr.bf16.mxu0 0
    %545 = vmatmul.mubr.bf16.gmra.mrb[0].mxu0 %v353
    %v546 = vpop.f32.mrb[0].mxu0
    %v547 = vadd.f32 %v138, %v546
    %v548 = vpop.f32.mrb[0].mxu0
    %v549 = vpop.f32.mrb[0].mxu0
    %v550 = vadd.f32 %v138, %v549
    %v551 = vpop.f32.mrb[0].mxu0
    %552 = vmatprep.mubr.bf16.mxu0 0
    %553 = vmatmul.mubr.bf16.gmra.mrb[0].mxu0 %v356
    %v554 = vpop.f32.mrb[0].mxu0
    %v555 = vadd.f32 %v138, %v554
    %v556 = vpop.f32.mrb[0].mxu0
    %v557 = vpop.f32.mrb[0].mxu0
    %v558 = vadd.f32 %v138, %v557
    %v559 = vpop.f32.mrb[0].mxu0
    %560 = vmatprep.mubr.bf16.mxu0 0
    %561 = vmatmul.mubr.bf16.gmra.mrb[0].mxu0 %v359
    %v562 = vpop.f32.mrb[0].mxu0
    %v563 = vadd.f32 %v138, %v562
    %v564 = vpop.f32.mrb[0].mxu0
    %v565 = vpop.f32.mrb[0].mxu0
    %v566 = vadd.f32 %v138, %v565
    %v567 = vpop.f32.mrb[0].mxu0
    %568 = vmatprep.mubr.bf16.mxu0 0
    %569 = vmatmul.mubr.bf16.gmra.mrb[0].mxu0 %v362
    %v570 = vpop.f32.mrb[0].mxu0
    %v571 = vadd.f32 %v138, %v570
    %v572 = vpop.f32.mrb[0].mxu0
    %v573 = vpop.f32.mrb[0].mxu0
    %v574 = vadd.f32 %v138, %v573
    %v575 = vpop.f32.mrb[0].mxu0
    %576 = vmatprep.mubr.bf16.mxu0 0
    %577 = vmatmul.mubr.bf16.gmra.mrb[0].mxu0 %v365
    %v578 = vpop.f32.mrb[0].mxu0
    %v579 = vadd.f32 %v138, %v578
    %v580 = vpop.f32.mrb[0].mxu0
    %v581 = vpop.f32.mrb[0].mxu0
    %v582 = vadd.f32 %v138, %v581
    %v583 = vpop.f32.mrb[0].mxu0
    %584 = vmatprep.mubr.bf16.mxu0 0
    %585 = vmatmul.mubr.bf16.gmra.mrb[0].mxu0 %v368
    %v586 = vpop.f32.mrb[0].mxu0
    %v587 = vadd.f32 %v138, %v586
    %v588 = vpop.f32.mrb[0].mxu0
    %v589 = vpop.f32.mrb[0].mxu0
    %v590 = vadd.f32 %v138, %v589
    %v591 = vpop.f32.mrb[0].mxu0
    %592 = vmatprep.mubr.bf16.mxu0 0
    %593 = vmatmul.mubr.bf16.gmra.mrb[0].mxu0 %v371
    %v594 = vpop.f32.mrb[0].mxu0
    %v595 = vadd.f32 %v138, %v594
    %v596 = vpop.f32.mrb[0].mxu0
    %v597 = vpop.f32.mrb[0].mxu0
    %v598 = vadd.f32 %v138, %v597
    %v599 = vpop.f32.mrb[0].mxu0
    %600 = vmatprep.mubr.bf16.mxu0 0
    %601 = vmatmul.mubr.bf16.gmra.mrb[0].mxu0 %v374
    %v602 = vpop.f32.mrb[0].mxu0
    %v603 = vadd.f32 %v138, %v602
    %v604 = vpop.f32.mrb[0].mxu0
    %v605 = vpop.f32.mrb[0].mxu0
    %v606 = vadd.f32 %v138, %v605
    %v607 = vpop.f32.mrb[0].mxu0
    %608 = vmatprep.mubr.bf16.mxu0 0
    %609 = vmatmul.mubr.bf16.gmra.mrb[0].mxu0 %v377
    %v610 = vpop.f32.mrb[0].mxu0
    %v611 = vadd.f32 %v138, %v610
    %v612 = vpop.f32.mrb[0].mxu0
    %v613 = vpop.f32.mrb[0].mxu0
    %v614 = vadd.f32 %v138, %v613
    %v615 = vpop.f32.mrb[0].mxu0
    %616 = vmatprep.mubr.bf16.mxu0 0
    %617 = vmatmul.mubr.bf16.gmra.mrb[0].mxu0 %v380
    %v618 = vpop.f32.mrb[0].mxu0
    %v619 = vadd.f32 %v138, %v618
    %v620 = vpop.f32.mrb[0].mxu0
    %v621 = vpop.f32.mrb[0].mxu0
    %v622 = vadd.f32 %v138, %v621
    %v623 = vpop.f32.mrb[0].mxu0
    %624 = vmatprep.mubr.bf16.mxu0 0
    %625 = vmatmul.mubr.bf16.gmra.mrb[0].mxu0 %v383
    %v626 = vpop.f32.mrb[0].mxu0
    %v627 = vadd.f32 %v138, %v626
    %v628 = vpop.f32.mrb[0].mxu0
    %v629 = vpop.f32.mrb[0].mxu0
    %v630 = vadd.f32 %v138, %v629
    %v631 = vpop.f32.mrb[0].mxu0
    %632 = vmatprep.mubr.bf16.mxu0 0
    %633 = vmatmul.mubr.bf16.gmra.mrb[0].mxu0 %v386
    %v634 = vpop.f32.mrb[0].mxu0
    %v635 = vadd.f32 %v138, %v634
    %v636 = vpop.f32.mrb[0].mxu0
    %v637 = vpop.f32.mrb[0].mxu0
    %v638 = vadd.f32 %v138, %v637
    %v639 = vpop.f32.mrb[0].mxu0
    %640 = vmatprep.mubr.bf16.mxu0 0
    %641 = vmatmul.mubr.bf16.gmra.mrb[0].mxu0 %v389
    %v642 = vpop.f32.mrb[0].mxu0
    %v643 = vadd.f32 %v138, %v642
    %v644 = vpop.f32.mrb[0].mxu0
    %v645 = vpop.f32.mrb[0].mxu0
    %v646 = vadd.f32 %v138, %v645
    %v647 = vpop.f32.mrb[0].mxu0
    %648 = vmatprep.mubr.bf16.mxu0 0
    %649 = vmatmul.mubr.bf16.gmra.mrb[0].mxu0 %v392
    %v650 = vpop.f32.mrb[0].mxu0
    %v651 = vadd.f32 %v138, %v650
    %v652 = vpop.f32.mrb[0].mxu0
    %v653 = vpop.f32.mrb[0].mxu0
    %v654 = vadd.f32 %v138, %v653
    %v655 = vpop.f32.mrb[0].mxu0
    %656 = vmatprep.mubr.bf16.mxu0 0
    %657 = vmatmul.mubr.bf16.gmra.mrb[0].mxu0 %v395
    %v658 = vpop.f32.mrb[0].mxu0
    %v659 = vadd.f32 %v138, %v658
    %v660 = vpop.f32.mrb[0].mxu0
    %v661 = vpop.f32.mrb[0].mxu0
    %v662 = vadd.f32 %v138, %v661
    %v663 = vpop.f32.mrb[0].mxu0
    %664 = vmatprep.mubr.bf16.mxu0 0
    %665 = vmatmul.mubr.bf16.gmra.mrb[0].mxu0 %v398
    %v666 = vpop.f32.mrb[0].mxu0
    %v667 = vadd.f32 %v138, %v666
    %v668 = vpop.f32.mrb[0].mxu0
    %v669 = vpop.f32.mrb[0].mxu0
    %v670 = vadd.f32 %v138, %v669
    %v671 = vpop.f32.mrb[0].mxu0
    %672 = vmatprep.mubr.bf16.mxu0 0
    %673 = vmatmul.mubr.bf16.gmra.mrb[0].mxu0 %v401
    %v674 = vpop.f32.mrb[0].mxu0
    %v675 = vadd.f32 %v138, %v674
    %v676 = vpop.f32.mrb[0].mxu0
    %v677 = vpop.f32.mrb[0].mxu0
    %v678 = vadd.f32 %v138, %v677
    %v679 = vpop.f32.mrb[0].mxu0
    %680 = vmatprep.mubr.bf16.mxu0 0
    %681 = vmatmul.mubr.bf16.gmra.mrb[0].mxu0 %v404
    %v682 = vpop.f32.mrb[0].mxu0
    %v683 = vadd.f32 %v138, %v682
    %v684 = vpop.f32.mrb[0].mxu0
    %v685 = vpop.f32.mrb[0].mxu0
    %v686 = vadd.f32 %v138, %v685
    %v687 = vpop.f32.mrb[0].mxu0
    %688 = vmatprep.mubr.bf16.mxu0 0
    %689 = vmatmul.mubr.bf16.gmra.mrb[0].mxu0 %v407
    %v690 = vpop.f32.mrb[0].mxu0
    %v691 = vadd.f32 %v138, %v690
    %v692 = vpop.f32.mrb[0].mxu0
    %v693 = vpop.f32.mrb[0].mxu0
    %v694 = vadd.f32 %v138, %v693
    %v695 = vpop.f32.mrb[0].mxu0
    %696 = vmatprep.mubr.bf16.mxu0 0
    %697 = vmatmul.mubr.bf16.gmra.mrb[0].mxu0 %v410
    %v698 = vpop.f32.mrb[0].mxu0
    %v699 = vadd.f32 %v138, %v698
    %v700 = vpop.f32.mrb[0].mxu0
    %v701 = vpop.f32.mrb[0].mxu0
    %v702 = vadd.f32 %v138, %v701
    %v703 = vpop.f32.mrb[0].mxu0
    %704 = vdwg.mxu0
    %v705 = vmax.f32 %v451, 0.0
    %v706 = vmax.f32 %v454, 0.0
    %v707 = vmax.f32 %v459, 0.0
    %v708 = vmax.f32 %v462, 0.0
    %v709 = vmax.f32 %v467, 0.0
    %v710 = vmax.f32 %v470, 0.0
    %v711 = vmax.f32 %v475, 0.0
    %v712 = vmax.f32 %v478, 0.0
    %v713 = vmax.f32 %v483, 0.0
    %v714 = vmax.f32 %v486, 0.0
    %v715 = vmax.f32 %v491, 0.0
    %v716 = vmax.f32 %v494, 0.0
    %v717 = vmax.f32 %v499, 0.0
    %v718 = vmax.f32 %v502, 0.0
    %v719 = vmax.f32 %v507, 0.0
    %v720 = vmax.f32 %v510, 0.0
    %v721 = vmax.f32 %v515, 0.0
    %v722 = vmax.f32 %v518, 0.0
    %v723 = vmax.f32 %v523, 0.0
    %v724 = vmax.f32 %v526, 0.0
    %v725 = vmax.f32 %v531, 0.0
    %v726 = vmax.f32 %v534, 0.0
    %v727 = vmax.f32 %v539, 0.0
    %v728 = vmax.f32 %v542, 0.0
    %v729 = vmax.f32 %v547, 0.0
    %v730 = vmax.f32 %v550, 0.0
    %v731 = vmax.f32 %v555, 0.0
    %v732 = vmax.f32 %v558, 0.0
    %v733 = vmax.f32 %v563, 0.0
    %v734 = vmax.f32 %v566, 0.0
    %v735 = vmax.f32 %v571, 0.0
    %v736 = vmax.f32 %v574, 0.0
    %v737 = vmax.f32 %v579, 0.0
    %v738 = vmax.f32 %v582, 0.0
    %v739 = vmax.f32 %v587, 0.0
    %v740 = vmax.f32 %v590, 0.0
    %v741 = vmax.f32 %v595, 0.0
    %v742 = vmax.f32 %v598, 0.0
    %v743 = vmax.f32 %v603, 0.0
    %v744 = vmax.f32 %v606, 0.0
    %v745 = vmax.f32 %v611, 0.0
    %v746 = vmax.f32 %v614, 0.0
    %v747 = vmax.f32 %v619, 0.0
    %v748 = vmax.f32 %v622, 0.0
    %v749 = vmax.f32 %v627, 0.0
    %v750 = vmax.f32 %v630, 0.0
    %v751 = vmax.f32 %v635, 0.0
    %v752 = vmax.f32 %v638, 0.0
    %v753 = vmax.f32 %v643, 0.0
    %v754 = vmax.f32 %v646, 0.0
    %v755 = vmax.f32 %v651, 0.0
    %v756 = vmax.f32 %v654, 0.0
    %v757 = vmax.f32 %v659, 0.0
    %v758 = vmax.f32 %v662, 0.0
    %v759 = vmax.f32 %v667, 0.0
    %v760 = vmax.f32 %v670, 0.0
    %v761 = vmax.f32 %v675, 0.0
    %v762 = vmax.f32 %v678, 0.0
    %v763 = vmax.f32 %v683, 0.0
    %v764 = vmax.f32 %v686, 0.0
    %v765 = vmax.f32 %v691, 0.0
    %v766 = vmax.f32 %v694, 0.0
    %v767 = vmax.f32 %v699, 0.0
    %v768 = vmax.f32 %v702, 0.0
    %v769 = vld [vmem:[%s3] sm:$0xff]
    %v771 = vcombine.high %v769, %v769
    %v773 = vunpack.c.l.s4 1983009808
    %v774 = vunpack.c.0.s8 %v773
    %v775 = vlaneseq
    %v776 = vshrl.u32 %v775, 7
    %v777 = vsub.s32 %v774, %v776
    %v778 = vrot.slane %v769, %v777
    %v780 = vunpack.c.l.s4 1983009808
    %v781 = vunpack.c.0.s8 %v780
    %v782 = vlaneseq
    %v783 = vshrl.u32 %v782, 7
    %v784 = vsub.s32 %v781, %v783
    %v785 = vrot.slane %v771, %v784
    %v786 = vcombine.high %v778, %v778
    %v787 = vcombine.high %v785, %v785
    %792 = vmatprep.subr.mxu0 0.0
    %793 = vmatpush1.msra.mxu0 %v705
    %794 = vmatprep.subr.mxu0 0.0
    %795 = vmatpush1.msra.mxu0 %v706
    %796 = vmatprep.subr.mxu0 0.0
    %797 = vmatpush1.msra.mxu0 %v707
    %798 = vmatprep.subr.mxu0 0.0
    %799 = vmatpush1.msra.mxu0 %v708
    %800 = vmatprep.subr.mxu0 0.0
    %801 = vmatpush1.msra.mxu0 %v709
    %802 = vmatprep.subr.mxu0 0.0
    %803 = vmatpush1.msra.mxu0 %v710
    %804 = vmatprep.subr.mxu0 0.0
    %805 = vmatpush1.msra.mxu0 %v711
    %806 = vmatprep.subr.mxu0 0.0
    %807 = vmatpush1.msra.mxu0 %v712
    %808 = vmatprep.subr.mxu0 0.0
    %809 = vmatpush1.msra.mxu0 %v713
    %810 = vmatprep.subr.mxu0 0.0
    %811 = vmatpush1.msra.mxu0 %v714
    %812 = vmatprep.subr.mxu0 0.0
    %813 = vmatpush1.msra.mxu0 %v715
    %814 = vmatprep.subr.mxu0 0.0
    %815 = vmatpush1.msra.mxu0 %v716
    %816 = vmatprep.subr.mxu0 0.0
    %817 = vmatpush1.msra.mxu0 %v717
    %818 = vmatprep.subr.mxu0 0.0
    %819 = vmatpush1.msra.mxu0 %v718
    %820 = vmatprep.subr.mxu0 0.0
    %821 = vmatpush1.msra.mxu0 %v719
    %822 = vmatprep.subr.mxu0 0.0
    %823 = vmatpush1.msra.mxu0 %v720
    %824 = vmatprep.subr.mxu0 0.0
    %825 = vmatpush1.msra.mxu0 %v721
    %826 = vmatprep.subr.mxu0 0.0
    %827 = vmatpush1.msra.mxu0 %v722
    %828 = vmatprep.subr.mxu0 0.0
    %829 = vmatpush1.msra.mxu0 %v723
    %830 = vmatprep.subr.mxu0 0.0
    %831 = vmatpush1.msra.mxu0 %v724
    %832 = vmatprep.subr.mxu0 0.0
    %833 = vmatpush1.msra.mxu0 %v725
    %834 = vmatprep.subr.mxu0 0.0
    %835 = vmatpush1.msra.mxu0 %v726
    %836 = vmatprep.subr.mxu0 0.0
    %837 = vmatpush1.msra.mxu0 %v727
    %838 = vmatprep.subr.mxu0 0.0
    %839 = vmatpush1.msra.mxu0 %v728
    %840 = vmatprep.subr.mxu0 0.0
    %841 = vmatpush1.msra.mxu0 %v729
    %842 = vmatprep.subr.mxu0 0.0
    %843 = vmatpush1.msra.mxu0 %v730
    %844 = vmatprep.subr.mxu0 0.0
    %845 = vmatpush1.msra.mxu0 %v731
    %846 = vmatprep.subr.mxu0 0.0
    %847 = vmatpush1.msra.mxu0 %v732
    %848 = vmatprep.subr.mxu0 0.0
    %849 = vmatpush1.msra.mxu0 %v733
    %850 = vmatprep.subr.mxu0 0.0
    %851 = vmatpush1.msra.mxu0 %v734
    %852 = vmatprep.subr.mxu0 0.0
    %853 = vmatpush1.msra.mxu0 %v735
    %854 = vmatprep.subr.mxu0 0.0
    %855 = vmatpush1.msra.mxu0 %v736
    %856 = vmatprep.mubr.f32.mxu0 %v786
    %857 = vmatmul.mubr.f32.gmra.mrb[0].mxu0 %v778
    %v858 = vpop.f32.mrb[0].mxu0
    %v859 = vadd.f32 0.0, %v858
    %v860 = vpop.f32.mrb[0].mxu0
    %861 = vdwg.mxu0
    %862 = vmatprep.subr.mxu0 0.0
    %863 = vmatpush1.msra.mxu0 %v737
    %864 = vmatprep.subr.mxu0 0.0
    %865 = vmatpush1.msra.mxu0 %v738
    %866 = vmatprep.subr.mxu0 0.0
    %867 = vmatpush1.msra.mxu0 %v739
    %868 = vmatprep.subr.mxu0 0.0
    %869 = vmatpush1.msra.mxu0 %v740
    %870 = vmatprep.subr.mxu0 0.0
    %871 = vmatpush1.msra.mxu0 %v741
    %872 = vmatprep.subr.mxu0 0.0
    %873 = vmatpush1.msra.mxu0 %v742
    %874 = vmatprep.subr.mxu0 0.0
    %875 = vmatpush1.msra.mxu0 %v743
    %876 = vmatprep.subr.mxu0 0.0
    %877 = vmatpush1.msra.mxu0 %v744
    %878 = vmatprep.subr.mxu0 0.0
    %879 = vmatpush1.msra.mxu0 %v745
    %880 = vmatprep.subr.mxu0 0.0
    %881 = vmatpush1.msra.mxu0 %v746
    %882 = vmatprep.subr.mxu0 0.0
    %883 = vmatpush1.msra.mxu0 %v747
    %884 = vmatprep.subr.mxu0 0.0
    %885 = vmatpush1.msra.mxu0 %v748
    %886 = vmatprep.subr.mxu0 0.0
    %887 = vmatpush1.msra.mxu0 %v749
    %888 = vmatprep.subr.mxu0 0.0
    %889 = vmatpush1.msra.mxu0 %v750
    %890 = vmatprep.subr.mxu0 0.0
    %891 = vmatpush1.msra.mxu0 %v751
    %892 = vmatprep.subr.mxu0 0.0
    %893 = vmatpush1.msra.mxu0 %v752
    %894 = vmatprep.subr.mxu0 0.0
    %895 = vmatpush1.msra.mxu0 %v753
    %896 = vmatprep.subr.mxu0 0.0
    %897 = vmatpush1.msra.mxu0 %v754
    %898 = vmatprep.subr.mxu0 0.0
    %899 = vmatpush1.msra.mxu0 %v755
    %900 = vmatprep.subr.mxu0 0.0
    %901 = vmatpush1.msra.mxu0 %v756
    %902 = vmatprep.subr.mxu0 0.0
    %903 = vmatpush1.msra.mxu0 %v757
    %904 = vmatprep.subr.mxu0 0.0
    %905 = vmatpush1.msra.mxu0 %v758
    %906 = vmatprep.subr.mxu0 0.0
    %907 = vmatpush1.msra.mxu0 %v759
    %908 = vmatprep.subr.mxu0 0.0
    %909 = vmatpush1.msra.mxu0 %v760
    %910 = vmatprep.subr.mxu0 0.0
    %911 = vmatpush1.msra.mxu0 %v761
    %912 = vmatprep.subr.mxu0 0.0
    %913 = vmatpush1.msra.mxu0 %v762
    %914 = vmatprep.subr.mxu0 0.0
    %915 = vmatpush1.msra.mxu0 %v763
    %916 = vmatprep.subr.mxu0 0.0
    %917 = vmatpush1.msra.mxu0 %v764
    %918 = vmatprep.subr.mxu0 0.0
    %919 = vmatpush1.msra.mxu0 %v765
    %920 = vmatprep.subr.mxu0 0.0
    %921 = vmatpush1.msra.mxu0 %v766
    %922 = vmatprep.subr.mxu0 0.0
    %923 = vmatpush1.msra.mxu0 %v767
    %924 = vmatprep.subr.mxu0 0.0
    %925 = vmatpush1.msra.mxu0 %v768
    %926 = vmatprep.mubr.f32.mxu0 %v787
    %927 = vmatmul.mubr.f32.gmra.mrb[0].mxu0 %v785
    %v928 = vpop.f32.mrb[0].mxu0
    %v929 = vadd.f32 %v859, %v928
    %v930 = vpop.f32.mrb[0].mxu0
    %931 = vdwg.mxu0
    %v932 = vld [vmem:[%s4] sm:$0xff]
    %v933 = vld [vmem:[%s7] sm:$0x3]
    %v934 = vld [vmem:[%s5] sm:$0xff]
    %v935 = vld [vmem:[%s5 + $0x8] sm:$0xff]
    %v936 = vld [vmem:[%s5 + $0x10] sm:$0xff]
    %v937 = vld [vmem:[%s5 + $0x18] sm:$0xff]
    %vm938 = vcmask 261120
    %v940 = vsel %vm938, %v933, 0
    %942 = vmatprep.subr.mxu0 0.0
    %943 = vmatpush1.msra.mxu0 %v934
    %944 = vmatprep.subr.mxu0 0.0
    %945 = vmatpush1.msra.mxu0 %v935
    %946 = vmatprep.subr.mxu0 0.0
    %947 = vmatpush1.msra.mxu0 %v936
    %948 = vmatprep.subr.mxu0 0.0
    %949 = vmatpush1.msra.mxu0 %v937
    %950 = vmatprep.subr.mxu0 0.0
    %951 = vmatpush1.msra.mxu0 0.0
    %952 = vmatprep.subr.mxu0 0.0
    %953 = vmatpush1.msra.mxu0 0.0
    %954 = vmatprep.subr.mxu0 0.0
    %955 = vmatpush1.msra.mxu0 0.0
    %956 = vmatprep.subr.mxu0 0.0
    %957 = vmatpush1.msra.mxu0 0.0
    %958 = vmatprep.subr.mxu0 0.0
    %959 = vmatpush1.msra.mxu0 0.0
    %960 = vmatprep.subr.mxu0 0.0
    %961 = vmatpush1.msra.mxu0 0.0
    %962 = vmatprep.subr.mxu0 0.0
    %963 = vmatpush1.msra.mxu0 0.0
    %964 = vmatprep.subr.mxu0 0.0
    %965 = vmatpush1.msra.mxu0 0.0
    %966 = vmatprep.subr.mxu0 0.0
    %967 = vmatpush1.msra.mxu0 0.0
    %968 = vmatprep.subr.mxu0 0.0
    %969 = vmatpush1.msra.mxu0 0.0
    %970 = vmatprep.subr.mxu0 0.0
    %971 = vmatpush1.msra.mxu0 0.0
    %972 = vmatprep.subr.mxu0 0.0
    %973 = vmatpush1.msra.mxu0 0.0
    %974 = vmatprep.subr.mxu0 0.0
    %975 = vmatpush1.msra.mxu0 0.0
    %976 = vmatprep.subr.mxu0 0.0
    %977 = vmatpush1.msra.mxu0 0.0
    %978 = vmatprep.subr.mxu0 0.0
    %979 = vmatpush1.msra.mxu0 0.0
    %980 = vmatprep.subr.mxu0 0.0
    %981 = vmatpush1.msra.mxu0 0.0
    %982 = vmatprep.subr.mxu0 0.0
    %983 = vmatpush1.msra.mxu0 0.0
    %984 = vmatprep.subr.mxu0 0.0
    %985 = vmatpush1.msra.mxu0 0.0
    %986 = vmatprep.subr.mxu0 0.0
    %987 = vmatpush1.msra.mxu0 0.0
    %988 = vmatprep.subr.mxu0 0.0
    %989 = vmatpush1.msra.mxu0 0.0
    %990 = vmatprep.subr.mxu0 0.0
    %991 = vmatpush1.msra.mxu0 0.0
    %992 = vmatprep.subr.mxu0 0.0
    %993 = vmatpush1.msra.mxu0 0.0
    %994 = vmatprep.subr.mxu0 0.0
    %995 = vmatpush1.msra.mxu0 0.0
    %996 = vmatprep.subr.mxu0 0.0
    %997 = vmatpush1.msra.mxu0 0.0
    %998 = vmatprep.subr.mxu0 0.0
    %999 = vmatpush1.msra.mxu0 0.0
    %1000 = vmatprep.subr.mxu0 0.0
    %1001 = vmatpush1.msra.mxu0 0.0
    %1002 = vmatprep.subr.mxu0 0.0
    %1003 = vmatpush1.msra.mxu0 0.0
    %1004 = vmatprep.subr.mxu0 0.0
    %1005 = vmatpush1.msra.mxu0 0.0
    %1006 = vmatprep.mubr.f32.mxu0 0.0
    %1007 = vmatmul.mubr.f32.gmra.mrb[0].mxu0 %v940
    %v1008 = vpop.f32.mrb[0].mxu0
    %v1009 = vadd.f32 0.0, %v1008
    %v1010 = vpop.f32.mrb[0].mxu0
    %1011 = vdwg.mxu0
    %vm1012 = vcmask 64512
    %v1014 = vsel %vm1012, %v929, 0
    %1016 = vmatprep.subr.mxu0 0.0
    %1017 = vmatpush1.msra.mxu0 %v932
    %1018 = vmatprep.subr.mxu0 0.0
    %1019 = vmatpush1.msra.mxu0 0.0
    %1020 = vmatprep.subr.mxu0 0.0
    %1021 = vmatpush1.msra.mxu0 0.0
    %1022 = vmatprep.subr.mxu0 0.0
    %1023 = vmatpush1.msra.mxu0 0.0
    %1024 = vmatprep.subr.mxu0 0.0
    %1025 = vmatpush1.msra.mxu0 0.0
    %1026 = vmatprep.subr.mxu0 0.0
    %1027 = vmatpush1.msra.mxu0 0.0
    %1028 = vmatprep.subr.mxu0 0.0
    %1029 = vmatpush1.msra.mxu0 0.0
    %1030 = vmatprep.subr.mxu0 0.0
    %1031 = vmatpush1.msra.mxu0 0.0
    %1032 = vmatprep.subr.mxu0 0.0
    %1033 = vmatpush1.msra.mxu0 0.0
    %1034 = vmatprep.subr.mxu0 0.0
    %1035 = vmatpush1.msra.mxu0 0.0
    %1036 = vmatprep.subr.mxu0 0.0
    %1037 = vmatpush1.msra.mxu0 0.0
    %1038 = vmatprep.subr.mxu0 0.0
    %1039 = vmatpush1.msra.mxu0 0.0
    %1040 = vmatprep.subr.mxu0 0.0
    %1041 = vmatpush1.msra.mxu0 0.0
    %1042 = vmatprep.subr.mxu0 0.0
    %1043 = vmatpush1.msra.mxu0 0.0
    %1044 = vmatprep.subr.mxu0 0.0
    %1045 = vmatpush1.msra.mxu0 0.0
    %1046 = vmatprep.subr.mxu0 0.0
    %1047 = vmatpush1.msra.mxu0 0.0
    %1048 = vmatprep.subr.mxu0 0.0
    %1049 = vmatpush1.msra.mxu0 0.0
    %1050 = vmatprep.subr.mxu0 0.0
    %1051 = vmatpush1.msra.mxu0 0.0
    %1052 = vmatprep.subr.mxu0 0.0
    %1053 = vmatpush1.msra.mxu0 0.0
    %1054 = vmatprep.subr.mxu0 0.0
    %1055 = vmatpush1.msra.mxu0 0.0
    %1056 = vmatprep.subr.mxu0 0.0
    %1057 = vmatpush1.msra.mxu0 0.0
    %1058 = vmatprep.subr.mxu0 0.0
    %1059 = vmatpush1.msra.mxu0 0.0
    %1060 = vmatprep.subr.mxu0 0.0
    %1061 = vmatpush1.msra.mxu0 0.0
    %1062 = vmatprep.subr.mxu0 0.0
    %1063 = vmatpush1.msra.mxu0 0.0
    %1064 = vmatprep.subr.mxu0 0.0
    %1065 = vmatpush1.msra.mxu0 0.0
    %1066 = vmatprep.subr.mxu0 0.0
    %1067 = vmatpush1.msra.mxu0 0.0
    %1068 = vmatprep.subr.mxu0 0.0
    %1069 = vmatpush1.msra.mxu0 0.0
    %1070 = vmatprep.subr.mxu0 0.0
    %1071 = vmatpush1.msra.mxu0 0.0
    %1072 = vmatprep.subr.mxu0 0.0
    %1073 = vmatpush1.msra.mxu0 0.0
    %1074 = vmatprep.subr.mxu0 0.0
    %1075 = vmatpush1.msra.mxu0 0.0
    %1076 = vmatprep.subr.mxu0 0.0
    %1077 = vmatpush1.msra.mxu0 0.0
    %1078 = vmatprep.subr.mxu0 0.0
    %1079 = vmatpush1.msra.mxu0 0.0
    %1080 = vmatprep.mubr.f32.mxu0 0.0
    %1081 = vmatmul.mubr.f32.gmra.mrb[0].mxu0 %v1014
    %v1082 = vpop.f32.mrb[0].mxu0
    %v1083 = vadd.f32 %v1009, %v1082
    %v1084 = vpop.f32.mrb[0].mxu0
    %1085 = vdwg.mxu0
    %v1086 = vld [vmem:[%s6] sm:$0x1]
    %v1088 = vlaneseq
    %v1089 = vshrl.u32 %v1088, 7
    %v1090 = vsub.s32 0, %v1089
    %v1091 = vrot.slane %v1086, %v1090
    %v1093 = vadd.f32 %v1083, %v1091
    %v1094 = vmax.f32 %v1093, 0.0
    %v1095 = vld [vmem:[%s8] sm:$0xff]
    %v1096 = vld [vmem:[%s8 + $0x8] sm:$0xff]
    %v1097 = vld [vmem:[%s8 + $0x10] sm:$0xff]
    %v1098 = vld [vmem:[%s8 + $0x18] sm:$0xff]
    %v1099 = vld [vmem:[%s8 + $0x20] sm:$0xff]
    %v1100 = vld [vmem:[%s8 + $0x28] sm:$0xff]
    %v1101 = vld [vmem:[%s8 + $0x30] sm:$0xff]
    %v1102 = vld [vmem:[%s8 + $0x38] sm:$0xff]
    %v1103 = vld [vmem:[%s8 + $0x40] sm:$0xff]
    %v1104 = vld [vmem:[%s8 + $0x48] sm:$0xff]
    %v1105 = vld [vmem:[%s8 + $0x50] sm:$0xff]
    %v1106 = vld [vmem:[%s8 + $0x58] sm:$0xff]
    %v1107 = vld [vmem:[%s8 + $0x60] sm:$0xff]
    %v1108 = vld [vmem:[%s8 + $0x68] sm:$0xff]
    %v1109 = vld [vmem:[%s8 + $0x70] sm:$0xff]
    %v1110 = vld [vmem:[%s8 + $0x78] sm:$0xff]
    %v1111 = vld [vmem:[%s9] sm:$0xff]
    %v1112 = vld [vmem:[%s9 + $0x8] sm:$0xff]
    %v1113 = vld [vmem:[%s12] sm:$0xf]
    %v1114 = vld [vmem:[%s11] sm:$0xff]
    %v1115 = vld [vmem:[%s11 + $0x8] sm:$0xff]
    %v1116 = vld [vmem:[%s11 + $0x10] sm:$0xff]
    %v1117 = vld [vmem:[%s11 + $0x18] sm:$0xff]
    %v1118 = vld [vmem:[%s11 + $0x20] sm:$0xff]
    %v1119 = vld [vmem:[%s11 + $0x28] sm:$0xff]
    %v1120 = vld [vmem:[%s11 + $0x30] sm:$0xff]
    %v1121 = vld [vmem:[%s11 + $0x38] sm:$0xff]
    %v1122 = vld [vmem:[%s11 + $0x40] sm:$0xff]
    %v1123 = vld [vmem:[%s11 + $0x48] sm:$0xff]
    %v1124 = vld [vmem:[%s11 + $0x50] sm:$0xff]
    %v1125 = vld [vmem:[%s11 + $0x58] sm:$0xff]
    %v1126 = vld [vmem:[%s11 + $0x60] sm:$0xff]
    %v1127 = vld [vmem:[%s11 + $0x68] sm:$0xff]
    %v1128 = vld [vmem:[%s11 + $0x70] sm:$0xff]
    %v1129 = vld [vmem:[%s11 + $0x78] sm:$0xff]
    %v1130 = vlaneseq
    %v1131 = vshrl.u32 %v1130, 7
    %v1132 = vsub.s32 0, %v1131
    %v1133 = vrot.slane %v1113, %v1132
    %1134 = vmatprep.subr.mxu0 0.0
    %1135 = vmatpush1.msra.mxu0 %v1114
    %1136 = vmatprep.subr.mxu0 0.0
    %1137 = vmatpush1.msra.mxu0 %v1115
    %1138 = vmatprep.subr.mxu0 0.0
    %1139 = vmatpush1.msra.mxu0 %v1116
    %1140 = vmatprep.subr.mxu0 0.0
    %1141 = vmatpush1.msra.mxu0 %v1117
    %1142 = vmatprep.subr.mxu0 0.0
    %1143 = vmatpush1.msra.mxu0 %v1118
    %1144 = vmatprep.subr.mxu0 0.0
    %1145 = vmatpush1.msra.mxu0 %v1119
    %1146 = vmatprep.subr.mxu0 0.0
    %1147 = vmatpush1.msra.mxu0 %v1120
    %1148 = vmatprep.subr.mxu0 0.0
    %1149 = vmatpush1.msra.mxu0 %v1121
    %1150 = vmatprep.subr.mxu0 0.0
    %1151 = vmatpush1.msra.mxu0 %v1122
    %1152 = vmatprep.subr.mxu0 0.0
    %1153 = vmatpush1.msra.mxu0 %v1123
    %1154 = vmatprep.subr.mxu0 0.0
    %1155 = vmatpush1.msra.mxu0 %v1124
    %1156 = vmatprep.subr.mxu0 0.0
    %1157 = vmatpush1.msra.mxu0 %v1125
    %1158 = vmatprep.subr.mxu0 0.0
    %1159 = vmatpush1.msra.mxu0 %v1126
    %1160 = vmatprep.subr.mxu0 0.0
    %1161 = vmatpush1.msra.mxu0 %v1127
    %1162 = vmatprep.subr.mxu0 0.0
    %1163 = vmatpush1.msra.mxu0 %v1128
    %1164 = vmatprep.subr.mxu0 0.0
    %1165 = vmatpush1.msra.mxu0 %v1129
    %1166 = vmatprep.subr.mxu0 0.0
    %1167 = vmatpush1.msra.mxu0 0.0
    %1168 = vmatprep.subr.mxu0 0.0
    %1169 = vmatpush1.msra.mxu0 0.0
    %1170 = vmatprep.subr.mxu0 0.0
    %1171 = vmatpush1.msra.mxu0 0.0
    %1172 = vmatprep.subr.mxu0 0.0
    %1173 = vmatpush1.msra.mxu0 0.0
    %1174 = vmatprep.subr.mxu0 0.0
    %1175 = vmatpush1.msra.mxu0 0.0
    %1176 = vmatprep.subr.mxu0 0.0
    %1177 = vmatpush1.msra.mxu0 0.0
    %1178 = vmatprep.subr.mxu0 0.0
    %1179 = vmatpush1.msra.mxu0 0.0
    %1180 = vmatprep.subr.mxu0 0.0
    %1181 = vmatpush1.msra.mxu0 0.0
    %1182 = vmatprep.subr.mxu0 0.0
    %1183 = vmatpush1.msra.mxu0 0.0
    %1184 = vmatprep.subr.mxu0 0.0
    %1185 = vmatpush1.msra.mxu0 0.0
    %1186 = vmatprep.subr.mxu0 0.0
    %1187 = vmatpush1.msra.mxu0 0.0
    %1188 = vmatprep.subr.mxu0 0.0
    %1189 = vmatpush1.msra.mxu0 0.0
    %1190 = vmatprep.subr.mxu0 0.0
    %1191 = vmatpush1.msra.mxu0 0.0
    %1192 = vmatprep.subr.mxu0 0.0
    %1193 = vmatpush1.msra.mxu0 0.0
    %1194 = vmatprep.subr.mxu0 0.0
    %1195 = vmatpush1.msra.mxu0 0.0
    %1196 = vmatprep.subr.mxu0 0.0
    %1197 = vmatpush1.msra.mxu0 0.0
    %1198 = vmatprep.mubr.f32.mxu0 0.0
    %1199 = vmatmul.mubr.f32.gmra.mrb[0].mxu0 %v1094
    %v1200 = vpop.f32.mrb[0].mxu0
    %v1201 = vadd.f32 %v1133, %v1200
    %v1202 = vpop.f32.mrb[0].mxu0
    %1203 = vdwg.mxu0
    %s1204 = scalar_lea.vmem %s11, 128
    %v1205 = vld [vmem:[%s1204] sm:$0xff]
    %v1206 = vld [vmem:[%s1204 + $0x8] sm:$0xff]
    %v1207 = vld [vmem:[%s1204 + $0x10] sm:$0xff]
    %v1208 = vld [vmem:[%s1204 + $0x18] sm:$0xff]
    %v1209 = vld [vmem:[%s1204 + $0x20] sm:$0xff]
    %v1210 = vld [vmem:[%s1204 + $0x28] sm:$0xff]
    %v1211 = vld [vmem:[%s1204 + $0x30] sm:$0xff]
    %v1212 = vld [vmem:[%s1204 + $0x38] sm:$0xff]
    %v1213 = vld [vmem:[%s1204 + $0x40] sm:$0xff]
    %v1214 = vld [vmem:[%s1204 + $0x48] sm:$0xff]
    %v1215 = vld [vmem:[%s1204 + $0x50] sm:$0xff]
    %v1216 = vld [vmem:[%s1204 + $0x58] sm:$0xff]
    %v1217 = vld [vmem:[%s1204 + $0x60] sm:$0xff]
    %v1218 = vld [vmem:[%s1204 + $0x68] sm:$0xff]
    %v1219 = vld [vmem:[%s1204 + $0x70] sm:$0xff]
    %v1220 = vld [vmem:[%s1204 + $0x78] sm:$0xff]
    %v1221 = vlaneseq
    %v1222 = vshrl.u32 %v1221, 7
    %v1223 = vsub.s32 1, %v1222
    %v1224 = vrot.slane %v1113, %v1223
    %1225 = vmatprep.subr.mxu0 0.0
    %1226 = vmatpush1.msra.mxu0 %v1205
    %1227 = vmatprep.subr.mxu0 0.0
    %1228 = vmatpush1.msra.mxu0 %v1206
    %1229 = vmatprep.subr.mxu0 0.0
    %1230 = vmatpush1.msra.mxu0 %v1207
    %1231 = vmatprep.subr.mxu0 0.0
    %1232 = vmatpush1.msra.mxu0 %v1208
    %1233 = vmatprep.subr.mxu0 0.0
    %1234 = vmatpush1.msra.mxu0 %v1209
    %1235 = vmatprep.subr.mxu0 0.0
    %1236 = vmatpush1.msra.mxu0 %v1210
    %1237 = vmatprep.subr.mxu0 0.0
    %1238 = vmatpush1.msra.mxu0 %v1211
    %1239 = vmatprep.subr.mxu0 0.0
    %1240 = vmatpush1.msra.mxu0 %v1212
    %1241 = vmatprep.subr.mxu0 0.0
    %1242 = vmatpush1.msra.mxu0 %v1213
    %1243 = vmatprep.subr.mxu0 0.0
    %1244 = vmatpush1.msra.mxu0 %v1214
    %1245 = vmatprep.subr.mxu0 0.0
    %1246 = vmatpush1.msra.mxu0 %v1215
    %1247 = vmatprep.subr.mxu0 0.0
    %1248 = vmatpush1.msra.mxu0 %v1216
    %1249 = vmatprep.subr.mxu0 0.0
    %1250 = vmatpush1.msra.mxu0 %v1217
    %1251 = vmatprep.subr.mxu0 0.0
    %1252 = vmatpush1.msra.mxu0 %v1218
    %1253 = vmatprep.subr.mxu0 0.0
    %1254 = vmatpush1.msra.mxu0 %v1219
    %1255 = vmatprep.subr.mxu0 0.0
    %1256 = vmatpush1.msra.mxu0 %v1220
    %1257 = vmatprep.subr.mxu0 0.0
    %1258 = vmatpush1.msra.mxu0 0.0
    %1259 = vmatprep.subr.mxu0 0.0
    %1260 = vmatpush1.msra.mxu0 0.0
    %1261 = vmatprep.subr.mxu0 0.0
    %1262 = vmatpush1.msra.mxu0 0.0
    %1263 = vmatprep.subr.mxu0 0.0
    %1264 = vmatpush1.msra.mxu0 0.0
    %1265 = vmatprep.subr.mxu0 0.0
    %1266 = vmatpush1.msra.mxu0 0.0
    %1267 = vmatprep.subr.mxu0 0.0
    %1268 = vmatpush1.msra.mxu0 0.0
    %1269 = vmatprep.subr.mxu0 0.0
    %1270 = vmatpush1.msra.mxu0 0.0
    %1271 = vmatprep.subr.mxu0 0.0
    %1272 = vmatpush1.msra.mxu0 0.0
    %1273 = vmatprep.subr.mxu0 0.0
    %1274 = vmatpush1.msra.mxu0 0.0
    %1275 = vmatprep.subr.mxu0 0.0
    %1276 = vmatpush1.msra.mxu0 0.0
    %1277 = vmatprep.subr.mxu0 0.0
    %1278 = vmatpush1.msra.mxu0 0.0
    %1279 = vmatprep.subr.mxu0 0.0
    %1280 = vmatpush1.msra.mxu0 0.0
    %1281 = vmatprep.subr.mxu0 0.0
    %1282 = vmatpush1.msra.mxu0 0.0
    %1283 = vmatprep.subr.mxu0 0.0
    %1284 = vmatpush1.msra.mxu0 0.0
    %1285 = vmatprep.subr.mxu0 0.0
    %1286 = vmatpush1.msra.mxu0 0.0
    %1287 = vmatprep.subr.mxu0 0.0
    %1288 = vmatpush1.msra.mxu0 0.0
    %1289 = vmatprep.mubr.f32.mxu0 0.0
    %1290 = vmatmul.mubr.f32.gmra.mrb[0].mxu0 %v1094
    %v1291 = vpop.f32.mrb[0].mxu0
    %v1292 = vadd.f32 %v1224, %v1291
    %v1293 = vpop.f32.mrb[0].mxu0
    %1294 = vdwg.mxu0
    %s1295 = scalar_lea.vmem %s11, 256
    %v1296 = vld [vmem:[%s1295] sm:$0xff]
    %v1297 = vld [vmem:[%s1295 + $0x8] sm:$0xff]
    %v1298 = vld [vmem:[%s1295 + $0x10] sm:$0xff]
    %v1299 = vld [vmem:[%s1295 + $0x18] sm:$0xff]
    %v1300 = vld [vmem:[%s1295 + $0x20] sm:$0xff]
    %v1301 = vld [vmem:[%s1295 + $0x28] sm:$0xff]
    %v1302 = vld [vmem:[%s1295 + $0x30] sm:$0xff]
    %v1303 = vld [vmem:[%s1295 + $0x38] sm:$0xff]
    %v1304 = vld [vmem:[%s1295 + $0x40] sm:$0xff]
    %v1305 = vld [vmem:[%s1295 + $0x48] sm:$0xff]
    %v1306 = vld [vmem:[%s1295 + $0x50] sm:$0xff]
    %v1307 = vld [vmem:[%s1295 + $0x58] sm:$0xff]
    %v1308 = vld [vmem:[%s1295 + $0x60] sm:$0xff]
    %v1309 = vld [vmem:[%s1295 + $0x68] sm:$0xff]
    %v1310 = vld [vmem:[%s1295 + $0x70] sm:$0xff]
    %v1311 = vld [vmem:[%s1295 + $0x78] sm:$0xff]
    %v1312 = vlaneseq
    %v1313 = vshrl.u32 %v1312, 7
    %v1314 = vsub.s32 2, %v1313
    %v1315 = vrot.slane %v1113, %v1314
    %1316 = vmatprep.subr.mxu0 0.0
    %1317 = vmatpush1.msra.mxu0 %v1296
    %1318 = vmatprep.subr.mxu0 0.0
    %1319 = vmatpush1.msra.mxu0 %v1297
    %1320 = vmatprep.subr.mxu0 0.0
    %1321 = vmatpush1.msra.mxu0 %v1298
    %1322 = vmatprep.subr.mxu0 0.0
    %1323 = vmatpush1.msra.mxu0 %v1299
    %1324 = vmatprep.subr.mxu0 0.0
    %1325 = vmatpush1.msra.mxu0 %v1300
    %1326 = vmatprep.subr.mxu0 0.0
    %1327 = vmatpush1.msra.mxu0 %v1301
    %1328 = vmatprep.subr.mxu0 0.0
    %1329 = vmatpush1.msra.mxu0 %v1302
    %1330 = vmatprep.subr.mxu0 0.0
    %1331 = vmatpush1.msra.mxu0 %v1303
    %1332 = vmatprep.subr.mxu0 0.0
    %1333 = vmatpush1.msra.mxu0 %v1304
    %1334 = vmatprep.subr.mxu0 0.0
    %1335 = vmatpush1.msra.mxu0 %v1305
    %1336 = vmatprep.subr.mxu0 0.0
    %1337 = vmatpush1.msra.mxu0 %v1306
    %1338 = vmatprep.subr.mxu0 0.0
    %1339 = vmatpush1.msra.mxu0 %v1307
    %1340 = vmatprep.subr.mxu0 0.0
    %1341 = vmatpush1.msra.mxu0 %v1308
    %1342 = vmatprep.subr.mxu0 0.0
    %1343 = vmatpush1.msra.mxu0 %v1309
    %1344 = vmatprep.subr.mxu0 0.0
    %1345 = vmatpush1.msra.mxu0 %v1310
    %1346 = vmatprep.subr.mxu0 0.0
    %1347 = vmatpush1.msra.mxu0 %v1311
    %1348 = vmatprep.subr.mxu0 0.0
    %1349 = vmatpush1.msra.mxu0 0.0
    %1350 = vmatprep.subr.mxu0 0.0
    %1351 = vmatpush1.msra.mxu0 0.0
    %1352 = vmatprep.subr.mxu0 0.0
    %1353 = vmatpush1.msra.mxu0 0.0
    %1354 = vmatprep.subr.mxu0 0.0
    %1355 = vmatpush1.msra.mxu0 0.0
    %1356 = vmatprep.subr.mxu0 0.0
    %1357 = vmatpush1.msra.mxu0 0.0
    %1358 = vmatprep.subr.mxu0 0.0
    %1359 = vmatpush1.msra.mxu0 0.0
    %1360 = vmatprep.subr.mxu0 0.0
    %1361 = vmatpush1.msra.mxu0 0.0
    %1362 = vmatprep.subr.mxu0 0.0
    %1363 = vmatpush1.msra.mxu0 0.0
    %1364 = vmatprep.subr.mxu0 0.0
    %1365 = vmatpush1.msra.mxu0 0.0
    %1366 = vmatprep.subr.mxu0 0.0
    %1367 = vmatpush1.msra.mxu0 0.0
    %1368 = vmatprep.subr.mxu0 0.0
    %1369 = vmatpush1.msra.mxu0 0.0
    %1370 = vmatprep.subr.mxu0 0.0
    %1371 = vmatpush1.msra.mxu0 0.0
    %1372 = vmatprep.subr.mxu0 0.0
    %1373 = vmatpush1.msra.mxu0 0.0
    %1374 = vmatprep.subr.mxu0 0.0
    %1375 = vmatpush1.msra.mxu0 0.0
    %1376 = vmatprep.subr.mxu0 0.0
    %1377 = vmatpush1.msra.mxu0 0.0
    %1378 = vmatprep.subr.mxu0 0.0
    %1379 = vmatpush1.msra.mxu0 0.0
    %1380 = vmatprep.mubr.f32.mxu0 0.0
    %1381 = vmatmul.mubr.f32.gmra.mrb[0].mxu0 %v1094
    %v1382 = vpop.f32.mrb[0].mxu0
    %v1383 = vadd.f32 %v1315, %v1382
    %v1384 = vpop.f32.mrb[0].mxu0
    %1385 = vdwg.mxu0
    %v1386 = vlaneseq
    %v1387 = vshrl.u32 %v1386, 7
    %v1388 = vsub.s32 0, %v1387
    %v1389 = vrot.slane %v1201, %v1388
    %v1390 = vmul.f32 %v1389, %v1292
    %1391 = vmatprep.subr.mxu0 0.0
    %1392 = vmatpush1.msra.mxu0 %v1095
    %1393 = vmatprep.subr.mxu0 0.0
    %1394 = vmatpush1.msra.mxu0 %v1096
    %1395 = vmatprep.subr.mxu0 0.0
    %1396 = vmatpush1.msra.mxu0 %v1097
    %1397 = vmatprep.subr.mxu0 0.0
    %1398 = vmatpush1.msra.mxu0 %v1098
    %1399 = vmatprep.subr.mxu0 0.0
    %1400 = vmatpush1.msra.mxu0 %v1099
    %1401 = vmatprep.subr.mxu0 0.0
    %1402 = vmatpush1.msra.mxu0 %v1100
    %1403 = vmatprep.subr.mxu0 0.0
    %1404 = vmatpush1.msra.mxu0 %v1101
    %1405 = vmatprep.subr.mxu0 0.0
    %1406 = vmatpush1.msra.mxu0 %v1102
    %1407 = vmatprep.subr.mxu0 0.0
    %1408 = vmatpush1.msra.mxu0 %v1103
    %1409 = vmatprep.subr.mxu0 0.0
    %1410 = vmatpush1.msra.mxu0 %v1104
    %1411 = vmatprep.subr.mxu0 0.0
    %1412 = vmatpush1.msra.mxu0 %v1105
    %1413 = vmatprep.subr.mxu0 0.0
    %1414 = vmatpush1.msra.mxu0 %v1106
    %1415 = vmatprep.subr.mxu0 0.0
    %1416 = vmatpush1.msra.mxu0 %v1107
    %1417 = vmatprep.subr.mxu0 0.0
    %1418 = vmatpush1.msra.mxu0 %v1108
    %1419 = vmatprep.subr.mxu0 0.0
    %1420 = vmatpush1.msra.mxu0 %v1109
    %1421 = vmatprep.subr.mxu0 0.0
    %1422 = vmatpush1.msra.mxu0 %v1110
    %1423 = vmatprep.subr.mxu0 0.0
    %1424 = vmatpush1.msra.mxu0 0.0
    %1425 = vmatprep.subr.mxu0 0.0
    %1426 = vmatpush1.msra.mxu0 0.0
    %1427 = vmatprep.subr.mxu0 0.0
    %1428 = vmatpush1.msra.mxu0 0.0
    %1429 = vmatprep.subr.mxu0 0.0
    %1430 = vmatpush1.msra.mxu0 0.0
    %1431 = vmatprep.subr.mxu0 0.0
    %1432 = vmatpush1.msra.mxu0 0.0
    %1433 = vmatprep.subr.mxu0 0.0
    %1434 = vmatpush1.msra.mxu0 0.0
    %1435 = vmatprep.subr.mxu0 0.0
    %1436 = vmatpush1.msra.mxu0 0.0
    %1437 = vmatprep.subr.mxu0 0.0
    %1438 = vmatpush1.msra.mxu0 0.0
    %1439 = vmatprep.subr.mxu0 0.0
    %1440 = vmatpush1.msra.mxu0 0.0
    %1441 = vmatprep.subr.mxu0 0.0
    %1442 = vmatpush1.msra.mxu0 0.0
    %1443 = vmatprep.subr.mxu0 0.0
    %1444 = vmatpush1.msra.mxu0 0.0
    %1445 = vmatprep.subr.mxu0 0.0
    %1446 = vmatpush1.msra.mxu0 0.0
    %1447 = vmatprep.subr.mxu0 0.0
    %1448 = vmatpush1.msra.mxu0 0.0
    %1449 = vmatprep.subr.mxu0 0.0
    %1450 = vmatpush1.msra.mxu0 0.0
    %1451 = vmatprep.subr.mxu0 0.0
    %1452 = vmatpush1.msra.mxu0 0.0
    %1453 = vmatprep.subr.mxu0 0.0
    %1454 = vmatpush1.msra.mxu0 0.0
    %1455 = vmatprep.mubr.f32.mxu0 0.0
    %1456 = vmatmul.mubr.f32.gmra.mrb[0].mxu0 %v1390
    %v1457 = vpop.f32.mrb[0].mxu0
    %v1458 = vadd.f32 0.0, %v1457
    %v1459 = vpop.f32.mrb[0].mxu0
    %1460 = vdwg.mxu0
    %v1461 = vmul.f32 %v1458, 0.35355338
    %vm1462 = vcmask 123904
    %v1463 = vsel %vm1462, %v1461, -inf
    %v1464 = vrot.slane %v1463, 4
    %v1465 = vmax.f32 %v1463, %v1464
    %v1466 = vrot.slane %v1465, 2
    %v1467 = vmax.f32 %v1465, %v1466
    %v1468 = vrot.slane %v1467, 1
    %v1469 = vmax.f32 %v1467, %v1468
    %v1470 = vsub.f32 %v1461, %v1469
    %v1471 = vmul.f32 %v1470, 1.442695
    %v1472 = vpow.pop %v1471
    %v1473 = vsel %vm1462, %v1472, 0.0
    %v1474 = vrot.slane %v1473, 4
    %v1475 = vadd.f32 %v1473, %v1474
    %v1476 = vrot.slane %v1475, 2
    %v1477 = vadd.f32 %v1475, %v1476
    %v1478 = vrot.slane %v1477, 1
    %v1479 = vadd.f32 %v1477, %v1478
    %v1480 = vrcp.pop %v1479
    %v1481 = vmul.f32 %v1472, %v1480
    %vm1482 = vcmask 130048
    %v1484 = vsel %vm1482, %v1481, 0
    %1486 = vmatprep.subr.mxu0 0.0
    %1487 = vmatpush1.msra.mxu0 %v1111
    %1488 = vmatprep.subr.mxu0 0.0
    %1489 = vmatpush1.msra.mxu0 %v1112
    %1490 = vmatprep.subr.mxu0 0.0
    %1491 = vmatpush1.msra.mxu0 0.0
    %1492 = vmatprep.subr.mxu0 0.0
    %1493 = vmatpush1.msra.mxu0 0.0
    %1494 = vmatprep.subr.mxu0 0.0
    %1495 = vmatpush1.msra.mxu0 0.0
    %1496 = vmatprep.subr.mxu0 0.0
    %1497 = vmatpush1.msra.mxu0 0.0
    %1498 = vmatprep.subr.mxu0 0.0
    %1499 = vmatpush1.msra.mxu0 0.0
    %1500 = vmatprep.subr.mxu0 0.0
    %1501 = vmatpush1.msra.mxu0 0.0
    %1502 = vmatprep.subr.mxu0 0.0
    %1503 = vmatpush1.msra.mxu0 0.0
    %1504 = vmatprep.subr.mxu0 0.0
    %1505 = vmatpush1.msra.mxu0 0.0
    %1506 = vmatprep.subr.mxu0 0.0
    %1507 = vmatpush1.msra.mxu0 0.0
    %1508 = vmatprep.subr.mxu0 0.0
    %1509 = vmatpush1.msra.mxu0 0.0
    %1510 = vmatprep.subr.mxu0 0.0
    %1511 = vmatpush1.msra.mxu0 0.0
    %1512 = vmatprep.subr.mxu0 0.0
    %1513 = vmatpush1.msra.mxu0 0.0
    %1514 = vmatprep.subr.mxu0 0.0
    %1515 = vmatpush1.msra.mxu0 0.0
    %1516 = vmatprep.subr.mxu0 0.0
    %1517 = vmatpush1.msra.mxu0 0.0
    %1518 = vmatprep.subr.mxu0 0.0
    %1519 = vmatpush1.msra.mxu0 0.0
    %1520 = vmatprep.subr.mxu0 0.0
    %1521 = vmatpush1.msra.mxu0 0.0
    %1522 = vmatprep.subr.mxu0 0.0
    %1523 = vmatpush1.msra.mxu0 0.0
    %1524 = vmatprep.subr.mxu0 0.0
    %1525 = vmatpush1.msra.mxu0 0.0
    %1526 = vmatprep.subr.mxu0 0.0
    %1527 = vmatpush1.msra.mxu0 0.0
    %1528 = vmatprep.subr.mxu0 0.0
    %1529 = vmatpush1.msra.mxu0 0.0
    %1530 = vmatprep.subr.mxu0 0.0
    %1531 = vmatpush1.msra.mxu0 0.0
    %1532 = vmatprep.subr.mxu0 0.0
    %1533 = vmatpush1.msra.mxu0 0.0
    %1534 = vmatprep.subr.mxu0 0.0
    %1535 = vmatpush1.msra.mxu0 0.0
    %1536 = vmatprep.subr.mxu0 0.0
    %1537 = vmatpush1.msra.mxu0 0.0
    %1538 = vmatprep.subr.mxu0 0.0
    %1539 = vmatpush1.msra.mxu0 0.0
    %1540 = vmatprep.subr.mxu0 0.0
    %1541 = vmatpush1.msra.mxu0 0.0
    %1542 = vmatprep.subr.mxu0 0.0
    %1543 = vmatpush1.msra.mxu0 0.0
    %1544 = vmatprep.subr.mxu0 0.0
    %1545 = vmatpush1.msra.mxu0 0.0
    %1546 = vmatprep.subr.mxu0 0.0
    %1547 = vmatpush1.msra.mxu0 0.0
    %1548 = vmatprep.subr.mxu0 0.0
    %1549 = vmatpush1.msra.mxu0 0.0
    %1550 = vmatprep.mubr.f32.mxu0 0.0
    %1551 = vmatmul.mubr.f32.gmra.mrb[0].mxu0 %v1484
    %v1552 = vpop.f32.mrb[0].mxu0
    %v1553 = vadd.f32 0.0, %v1552
    %v1554 = vpop.f32.mrb[0].mxu0
    %1555 = vdwg.mxu0
    %v1556 = vmul.f32 %v1553, %v1383
    %v1557 = vsel %vm412, %v1556, 0.0
    %v1558 = vrot.slane %v1557, 4
    %v1559 = vadd.f32 %v1557, %v1558
    %v1560 = vrot.slane %v1559, 2
    %v1561 = vadd.f32 %v1559, %v1560
    %v1562 = vrot.slane %v1561, 1
    %v1563 = vadd.f32 %v1561, %v1562
    %v1564 = vlaneseq
    %v1565 = vshrl.u32 %v1564, 7
    %v1566 = vsub.s32 1, %v1565
    %v1567 = vrot.slane %v1201, %v1566
    %v1568 = vmul.f32 %v1567, %v1292
    %1569 = vmatprep.subr.mxu0 0.0
    %1570 = vmatpush1.msra.mxu0 %v1095
    %1571 = vmatprep.subr.mxu0 0.0
    %1572 = vmatpush1.msra.mxu0 %v1096
    %1573 = vmatprep.subr.mxu0 0.0
    %1574 = vmatpush1.msra.mxu0 %v1097
    %1575 = vmatprep.subr.mxu0 0.0
    %1576 = vmatpush1.msra.mxu0 %v1098
    %1577 = vmatprep.subr.mxu0 0.0
    %1578 = vmatpush1.msra.mxu0 %v1099
    %1579 = vmatprep.subr.mxu0 0.0
    %1580 = vmatpush1.msra.mxu0 %v1100
    %1581 = vmatprep.subr.mxu0 0.0
    %1582 = vmatpush1.msra.mxu0 %v1101
    %1583 = vmatprep.subr.mxu0 0.0
    %1584 = vmatpush1.msra.mxu0 %v1102
    %1585 = vmatprep.subr.mxu0 0.0
    %1586 = vmatpush1.msra.mxu0 %v1103
    %1587 = vmatprep.subr.mxu0 0.0
    %1588 = vmatpush1.msra.mxu0 %v1104
    %1589 = vmatprep.subr.mxu0 0.0
    %1590 = vmatpush1.msra.mxu0 %v1105
    %1591 = vmatprep.subr.mxu0 0.0
    %1592 = vmatpush1.msra.mxu0 %v1106
    %1593 = vmatprep.subr.mxu0 0.0
    %1594 = vmatpush1.msra.mxu0 %v1107
    %1595 = vmatprep.subr.mxu0 0.0
    %1596 = vmatpush1.msra.mxu0 %v1108
    %1597 = vmatprep.subr.mxu0 0.0
    %1598 = vmatpush1.msra.mxu0 %v1109
    %1599 = vmatprep.subr.mxu0 0.0
    %1600 = vmatpush1.msra.mxu0 %v1110
    %1601 = vmatprep.subr.mxu0 0.0
    %1602 = vmatpush1.msra.mxu0 0.0
    %1603 = vmatprep.subr.mxu0 0.0
    %1604 = vmatpush1.msra.mxu0 0.0
    %1605 = vmatprep.subr.mxu0 0.0
    %1606 = vmatpush1.msra.mxu0 0.0
    %1607 = vmatprep.subr.mxu0 0.0
    %1608 = vmatpush1.msra.mxu0 0.0
    %1609 = vmatprep.subr.mxu0 0.0
    %1610 = vmatpush1.msra.mxu0 0.0
    %1611 = vmatprep.subr.mxu0 0.0
    %1612 = vmatpush1.msra.mxu0 0.0
    %1613 = vmatprep.subr.mxu0 0.0
    %1614 = vmatpush1.msra.mxu0 0.0
    %1615 = vmatprep.subr.mxu0 0.0
    %1616 = vmatpush1.msra.mxu0 0.0
    %1617 = vmatprep.subr.mxu0 0.0
    %1618 = vmatpush1.msra.mxu0 0.0
    %1619 = vmatprep.subr.mxu0 0.0
    %1620 = vmatpush1.msra.mxu0 0.0
    %1621 = vmatprep.subr.mxu0 0.0
    %1622 = vmatpush1.msra.mxu0 0.0
    %1623 = vmatprep.subr.mxu0 0.0
    %1624 = vmatpush1.msra.mxu0 0.0
    %1625 = vmatprep.subr.mxu0 0.0
    %1626 = vmatpush1.msra.mxu0 0.0
    %1627 = vmatprep.subr.mxu0 0.0
    %1628 = vmatpush1.msra.mxu0 0.0
    %1629 = vmatprep.subr.mxu0 0.0
    %1630 = vmatpush1.msra.mxu0 0.0
    %1631 = vmatprep.subr.mxu0 0.0
    %1632 = vmatpush1.msra.mxu0 0.0
    %1633 = vmatprep.mubr.f32.mxu0 0.0
    %1634 = vmatmul.mubr.f32.gmra.mrb[0].mxu0 %v1568
    %v1635 = vpop.f32.mrb[0].mxu0
    %v1636 = vadd.f32 0.0, %v1635
    %v1637 = vpop.f32.mrb[0].mxu0
    %1638 = vdwg.mxu0
    %v1639 = vmul.f32 %v1636, 0.35355338
    %v1640 = vsel %vm1462, %v1639, -inf
    %v1641 = vrot.slane %v1640, 4
    %v1642 = vmax.f32 %v1640, %v1641
    %v1643 = vrot.slane %v1642, 2
    %v1644 = vmax.f32 %v1642, %v1643
    %v1645 = vrot.slane %v1644, 1
    %v1646 = vmax.f32 %v1644, %v1645
    %v1647 = vsub.f32 %v1639, %v1646
    %v1648 = vmul.f32 %v1647, 1.442695
    %v1649 = vpow.pop %v1648
    %v1650 = vsel %vm1462, %v1649, 0.0
    %v1651 = vrot.slane %v1650, 4
    %v1652 = vadd.f32 %v1650, %v1651
    %v1653 = vrot.slane %v1652, 2
    %v1654 = vadd.f32 %v1652, %v1653
    %v1655 = vrot.slane %v1654, 1
    %v1656 = vadd.f32 %v1654, %v1655
    %v1657 = vrcp.pop %v1656
    %v1658 = vmul.f32 %v1649, %v1657
    %v1660 = vsel %vm1482, %v1658, 0
    %1662 = vmatprep.subr.mxu0 0.0
    %1663 = vmatpush1.msra.mxu0 %v1111
    %1664 = vmatprep.subr.mxu0 0.0
    %1665 = vmatpush1.msra.mxu0 %v1112
    %1666 = vmatprep.subr.mxu0 0.0
    %1667 = vmatpush1.msra.mxu0 0.0
    %1668 = vmatprep.subr.mxu0 0.0
    %1669 = vmatpush1.msra.mxu0 0.0
    %1670 = vmatprep.subr.mxu0 0.0
    %1671 = vmatpush1.msra.mxu0 0.0
    %1672 = vmatprep.subr.mxu0 0.0
    %1673 = vmatpush1.msra.mxu0 0.0
    %1674 = vmatprep.subr.mxu0 0.0
    %1675 = vmatpush1.msra.mxu0 0.0
    %1676 = vmatprep.subr.mxu0 0.0
    %1677 = vmatpush1.msra.mxu0 0.0
    %1678 = vmatprep.subr.mxu0 0.0
    %1679 = vmatpush1.msra.mxu0 0.0
    %1680 = vmatprep.subr.mxu0 0.0
    %1681 = vmatpush1.msra.mxu0 0.0
    %1682 = vmatprep.subr.mxu0 0.0
    %1683 = vmatpush1.msra.mxu0 0.0
    %1684 = vmatprep.subr.mxu0 0.0
    %1685 = vmatpush1.msra.mxu0 0.0
    %1686 = vmatprep.subr.mxu0 0.0
    %1687 = vmatpush1.msra.mxu0 0.0
    %1688 = vmatprep.subr.mxu0 0.0
    %1689 = vmatpush1.msra.mxu0 0.0
    %1690 = vmatprep.subr.mxu0 0.0
    %1691 = vmatpush1.msra.mxu0 0.0
    %1692 = vmatprep.subr.mxu0 0.0
    %1693 = vmatpush1.msra.mxu0 0.0
    %1694 = vmatprep.subr.mxu0 0.0
    %1695 = vmatpush1.msra.mxu0 0.0
    %1696 = vmatprep.subr.mxu0 0.0
    %1697 = vmatpush1.msra.mxu0 0.0
    %1698 = vmatprep.subr.mxu0 0.0
    %1699 = vmatpush1.msra.mxu0 0.0
    %1700 = vmatprep.subr.mxu0 0.0
    %1701 = vmatpush1.msra.mxu0 0.0
    %1702 = vmatprep.subr.mxu0 0.0
    %1703 = vmatpush1.msra.mxu0 0.0
    %1704 = vmatprep.subr.mxu0 0.0
    %1705 = vmatpush1.msra.mxu0 0.0
    %1706 = vmatprep.subr.mxu0 0.0
    %1707 = vmatpush1.msra.mxu0 0.0
    %1708 = vmatprep.subr.mxu0 0.0
    %1709 = vmatpush1.msra.mxu0 0.0
    %1710 = vmatprep.subr.mxu0 0.0
    %1711 = vmatpush1.msra.mxu0 0.0
    %1712 = vmatprep.subr.mxu0 0.0
    %1713 = vmatpush1.msra.mxu0 0.0
    %1714 = vmatprep.subr.mxu0 0.0
    %1715 = vmatpush1.msra.mxu0 0.0
    %1716 = vmatprep.subr.mxu0 0.0
    %1717 = vmatpush1.msra.mxu0 0.0
    %1718 = vmatprep.subr.mxu0 0.0
    %1719 = vmatpush1.msra.mxu0 0.0
    %1720 = vmatprep.subr.mxu0 0.0
    %1721 = vmatpush1.msra.mxu0 0.0
    %1722 = vmatprep.subr.mxu0 0.0
    %1723 = vmatpush1.msra.mxu0 0.0
    %1724 = vmatprep.subr.mxu0 0.0
    %1725 = vmatpush1.msra.mxu0 0.0
    %1726 = vmatprep.mubr.f32.mxu0 0.0
    %1727 = vmatmul.mubr.f32.gmra.mrb[0].mxu0 %v1660
    %v1728 = vpop.f32.mrb[0].mxu0
    %v1729 = vadd.f32 0.0, %v1728
    %v1730 = vpop.f32.mrb[0].mxu0
    %1731 = vdwg.mxu0
    %v1732 = vmul.f32 %v1729, %v1383
    %v1733 = vsel %vm412, %v1732, 0.0
    %v1734 = vrot.slane %v1733, 4
    %v1735 = vadd.f32 %v1733, %v1734
    %v1736 = vrot.slane %v1735, 2
    %v1737 = vadd.f32 %v1735, %v1736
    %v1738 = vrot.slane %v1737, 1
    %v1739 = vadd.f32 %v1737, %v1738
    %vm1740 = vcmask 1040384
    %v1741 = vsel %vm1740, %v1563, %v1739
    %s1742 = scalar_lea.vmem %s11, 384
    %v1743 = vld [vmem:[%s1742] sm:$0xff]
    %v1744 = vld [vmem:[%s1742 + $0x8] sm:$0xff]
    %v1745 = vld [vmem:[%s1742 + $0x10] sm:$0xff]
    %v1746 = vld [vmem:[%s1742 + $0x18] sm:$0xff]
    %v1747 = vld [vmem:[%s1742 + $0x20] sm:$0xff]
    %v1748 = vld [vmem:[%s1742 + $0x28] sm:$0xff]
    %v1749 = vld [vmem:[%s1742 + $0x30] sm:$0xff]
    %v1750 = vld [vmem:[%s1742 + $0x38] sm:$0xff]
    %v1751 = vld [vmem:[%s1742 + $0x40] sm:$0xff]
    %v1752 = vld [vmem:[%s1742 + $0x48] sm:$0xff]
    %v1753 = vld [vmem:[%s1742 + $0x50] sm:$0xff]
    %v1754 = vld [vmem:[%s1742 + $0x58] sm:$0xff]
    %v1755 = vld [vmem:[%s1742 + $0x60] sm:$0xff]
    %v1756 = vld [vmem:[%s1742 + $0x68] sm:$0xff]
    %v1757 = vld [vmem:[%s1742 + $0x70] sm:$0xff]
    %v1758 = vld [vmem:[%s1742 + $0x78] sm:$0xff]
    %v1759 = vlaneseq
    %v1760 = vshrl.u32 %v1759, 7
    %v1761 = vsub.s32 3, %v1760
    %v1762 = vrot.slane %v1113, %v1761
    %1763 = vmatprep.subr.mxu0 0.0
    %1764 = vmatpush1.msra.mxu0 %v1743
    %1765 = vmatprep.subr.mxu0 0.0
    %1766 = vmatpush1.msra.mxu0 %v1744
    %1767 = vmatprep.subr.mxu0 0.0
    %1768 = vmatpush1.msra.mxu0 %v1745
    %1769 = vmatprep.subr.mxu0 0.0
    %1770 = vmatpush1.msra.mxu0 %v1746
    %1771 = vmatprep.subr.mxu0 0.0
    %1772 = vmatpush1.msra.mxu0 %v1747
    %1773 = vmatprep.subr.mxu0 0.0
    %1774 = vmatpush1.msra.mxu0 %v1748
    %1775 = vmatprep.subr.mxu0 0.0
    %1776 = vmatpush1.msra.mxu0 %v1749
    %1777 = vmatprep.subr.mxu0 0.0
    %1778 = vmatpush1.msra.mxu0 %v1750
    %1779 = vmatprep.subr.mxu0 0.0
    %1780 = vmatpush1.msra.mxu0 %v1751
    %1781 = vmatprep.subr.mxu0 0.0
    %1782 = vmatpush1.msra.mxu0 %v1752
    %1783 = vmatprep.subr.mxu0 0.0
    %1784 = vmatpush1.msra.mxu0 %v1753
    %1785 = vmatprep.subr.mxu0 0.0
    %1786 = vmatpush1.msra.mxu0 %v1754
    %1787 = vmatprep.subr.mxu0 0.0
    %1788 = vmatpush1.msra.mxu0 %v1755
    %1789 = vmatprep.subr.mxu0 0.0
    %1790 = vmatpush1.msra.mxu0 %v1756
    %1791 = vmatprep.subr.mxu0 0.0
    %1792 = vmatpush1.msra.mxu0 %v1757
    %1793 = vmatprep.subr.mxu0 0.0
    %1794 = vmatpush1.msra.mxu0 %v1758
    %1795 = vmatprep.subr.mxu0 0.0
    %1796 = vmatpush1.msra.mxu0 0.0
    %1797 = vmatprep.subr.mxu0 0.0
    %1798 = vmatpush1.msra.mxu0 0.0
    %1799 = vmatprep.subr.mxu0 0.0
    %1800 = vmatpush1.msra.mxu0 0.0
    %1801 = vmatprep.subr.mxu0 0.0
    %1802 = vmatpush1.msra.mxu0 0.0
    %1803 = vmatprep.subr.mxu0 0.0
    %1804 = vmatpush1.msra.mxu0 0.0
    %1805 = vmatprep.subr.mxu0 0.0
    %1806 = vmatpush1.msra.mxu0 0.0
    %1807 = vmatprep.subr.mxu0 0.0
    %1808 = vmatpush1.msra.mxu0 0.0
    %1809 = vmatprep.subr.mxu0 0.0
    %1810 = vmatpush1.msra.mxu0 0.0
    %1811 = vmatprep.subr.mxu0 0.0
    %1812 = vmatpush1.msra.mxu0 0.0
    %1813 = vmatprep.subr.mxu0 0.0
    %1814 = vmatpush1.msra.mxu0 0.0
    %1815 = vmatprep.subr.mxu0 0.0
    %1816 = vmatpush1.msra.mxu0 0.0
    %1817 = vmatprep.subr.mxu0 0.0
    %1818 = vmatpush1.msra.mxu0 0.0
    %1819 = vmatprep.subr.mxu0 0.0
    %1820 = vmatpush1.msra.mxu0 0.0
    %1821 = vmatprep.subr.mxu0 0.0
    %1822 = vmatpush1.msra.mxu0 0.0
    %1823 = vmatprep.subr.mxu0 0.0
    %1824 = vmatpush1.msra.mxu0 0.0
    %1825 = vmatprep.subr.mxu0 0.0
    %1826 = vmatpush1.msra.mxu0 0.0
    %1827 = vmatprep.mubr.f32.mxu0 0.0
    %1828 = vmatmul.mubr.f32.gmra.mrb[0].mxu0 %v1741
    %v1829 = vpop.f32.mrb[0].mxu0
    %v1830 = vadd.f32 %v1762, %v1829
    %v1831 = vpop.f32.mrb[0].mxu0
    %1832 = vdwg.mxu0
    %v1833 = vld [vmem:[%s10] sm:$0xff]
    %v1834 = vld [vmem:[%s10 + $0x8] sm:$0xff]
    %v1835 = vld [vmem:[%s10 + $0x10] sm:$0xff]
    %v1836 = vld [vmem:[%s10 + $0x18] sm:$0xff]
    %v1837 = vld [vmem:[%s10 + $0x20] sm:$0xff]
    %v1838 = vld [vmem:[%s10 + $0x28] sm:$0xff]
    %v1839 = vld [vmem:[%s10 + $0x30] sm:$0xff]
    %v1840 = vld [vmem:[%s10 + $0x38] sm:$0xff]
    %v1841 = vld [vmem:[%s10 + $0x40] sm:$0xff]
    %v1842 = vld [vmem:[%s10 + $0x48] sm:$0xff]
    %v1843 = vld [vmem:[%s10 + $0x50] sm:$0xff]
    %v1844 = vld [vmem:[%s10 + $0x58] sm:$0xff]
    %v1845 = vld [vmem:[%s10 + $0x60] sm:$0xff]
    %v1846 = vld [vmem:[%s10 + $0x68] sm:$0xff]
    %v1847 = vld [vmem:[%s10 + $0x70] sm:$0xff]
    %v1848 = vld [vmem:[%s10 + $0x78] sm:$0xff]
    %1849 = vmatprep.subr.mxu0 0.0
    %1850 = vmatpush1.msra.mxu0 %v1833
    %1851 = vmatprep.subr.mxu0 0.0
    %1852 = vmatpush1.msra.mxu0 %v1834
    %1853 = vmatprep.subr.mxu0 0.0
    %1854 = vmatpush1.msra.mxu0 %v1835
    %1855 = vmatprep.subr.mxu0 0.0
    %1856 = vmatpush1.msra.mxu0 %v1836
    %1857 = vmatprep.subr.mxu0 0.0
    %1858 = vmatpush1.msra.mxu0 %v1837
    %1859 = vmatprep.subr.mxu0 0.0
    %1860 = vmatpush1.msra.mxu0 %v1838
    %1861 = vmatprep.subr.mxu0 0.0
    %1862 = vmatpush1.msra.mxu0 %v1839
    %1863 = vmatprep.subr.mxu0 0.0
    %1864 = vmatpush1.msra.mxu0 %v1840
    %1865 = vmatprep.subr.mxu0 0.0
    %1866 = vmatpush1.msra.mxu0 %v1841
    %1867 = vmatprep.subr.mxu0 0.0
    %1868 = vmatpush1.msra.mxu0 %v1842
    %1869 = vmatprep.subr.mxu0 0.0
    %1870 = vmatpush1.msra.mxu0 %v1843
    %1871 = vmatprep.subr.mxu0 0.0
    %1872 = vmatpush1.msra.mxu0 %v1844
    %1873 = vmatprep.subr.mxu0 0.0
    %1874 = vmatpush1.msra.mxu0 %v1845
    %1875 = vmatprep.subr.mxu0 0.0
    %1876 = vmatpush1.msra.mxu0 %v1846
    %1877 = vmatprep.subr.mxu0 0.0
    %1878 = vmatpush1.msra.mxu0 %v1847
    %1879 = vmatprep.subr.mxu0 0.0
    %1880 = vmatpush1.msra.mxu0 %v1848
    %1881 = vmatprep.subr.mxu0 0.0
    %1882 = vmatpush1.msra.mxu0 0.0
    %1883 = vmatprep.subr.mxu0 0.0
    %1884 = vmatpush1.msra.mxu0 0.0
    %1885 = vmatprep.subr.mxu0 0.0
    %1886 = vmatpush1.msra.mxu0 0.0
    %1887 = vmatprep.subr.mxu0 0.0
    %1888 = vmatpush1.msra.mxu0 0.0
    %1889 = vmatprep.subr.mxu0 0.0
    %1890 = vmatpush1.msra.mxu0 0.0
    %1891 = vmatprep.subr.mxu0 0.0
    %1892 = vmatpush1.msra.mxu0 0.0
    %1893 = vmatprep.subr.mxu0 0.0
    %1894 = vmatpush1.msra.mxu0 0.0
    %1895 = vmatprep.subr.mxu0 0.0
    %1896 = vmatpush1.msra.mxu0 0.0
    %1897 = vmatprep.subr.mxu0 0.0
    %1898 = vmatpush1.msra.mxu0 0.0
    %1899 = vmatprep.subr.mxu0 0.0
    %1900 = vmatpush1.msra.mxu0 0.0
    %1901 = vmatprep.subr.mxu0 0.0
    %1902 = vmatpush1.msra.mxu0 0.0
    %1903 = vmatprep.subr.mxu0 0.0
    %1904 = vmatpush1.msra.mxu0 0.0
    %1905 = vmatprep.subr.mxu0 0.0
    %1906 = vmatpush1.msra.mxu0 0.0
    %1907 = vmatprep.subr.mxu0 0.0
    %1908 = vmatpush1.msra.mxu0 0.0
    %1909 = vmatprep.subr.mxu0 0.0
    %1910 = vmatpush1.msra.mxu0 0.0
    %1911 = vmatprep.subr.mxu0 0.0
    %1912 = vmatpush1.msra.mxu0 0.0
    %1913 = vmatprep.mubr.f32.mxu0 0.0
    %1914 = vmatmul.mubr.f32.gmra.mrb[0].mxu0 %v1094
    %v1915 = vpop.f32.mrb[0].mxu0
    %v1916 = vadd.f32 0.0, %v1915
    %v1917 = vpop.f32.mrb[0].mxu0
    %1918 = vdwg.mxu0
    %v1919 = vld [vmem:[%s14] sm:$0xf]
    %v1920 = vld [vmem:[%s13] sm:$0xff]
    %v1921 = vld [vmem:[%s13 + $0x8] sm:$0xff]
    %v1922 = vld [vmem:[%s13 + $0x10] sm:$0xff]
    %v1923 = vld [vmem:[%s13 + $0x18] sm:$0xff]
    %v1924 = vld [vmem:[%s13 + $0x20] sm:$0xff]
    %v1925 = vld [vmem:[%s13 + $0x28] sm:$0xff]
    %v1926 = vld [vmem:[%s13 + $0x30] sm:$0xff]
    %v1927 = vld [vmem:[%s13 + $0x38] sm:$0xff]
    %v1928 = vld [vmem:[%s13 + $0x40] sm:$0xff]
    %v1929 = vld [vmem:[%s13 + $0x48] sm:$0xff]
    %v1930 = vld [vmem:[%s13 + $0x50] sm:$0xff]
    %v1931 = vld [vmem:[%s13 + $0x58] sm:$0xff]
    %v1932 = vld [vmem:[%s13 + $0x60] sm:$0xff]
    %v1933 = vld [vmem:[%s13 + $0x68] sm:$0xff]
    %v1934 = vld [vmem:[%s13 + $0x70] sm:$0xff]
    %v1935 = vld [vmem:[%s13 + $0x78] sm:$0xff]
    %v1936 = vlaneseq
    %v1937 = vshrl.u32 %v1936, 7
    %v1938 = vsub.s32 0, %v1937
    %v1939 = vrot.slane %v1919, %v1938
    %1940 = vmatprep.subr.mxu0 0.0
    %1941 = vmatpush1.msra.mxu0 %v1920
    %1942 = vmatprep.subr.mxu0 0.0
    %1943 = vmatpush1.msra.mxu0 %v1921
    %1944 = vmatprep.subr.mxu0 0.0
    %1945 = vmatpush1.msra.mxu0 %v1922
    %1946 = vmatprep.subr.mxu0 0.0
    %1947 = vmatpush1.msra.mxu0 %v1923
    %1948 = vmatprep.subr.mxu0 0.0
    %1949 = vmatpush1.msra.mxu0 %v1924
    %1950 = vmatprep.subr.mxu0 0.0
    %1951 = vmatpush1.msra.mxu0 %v1925
    %1952 = vmatprep.subr.mxu0 0.0
    %1953 = vmatpush1.msra.mxu0 %v1926
    %1954 = vmatprep.subr.mxu0 0.0
    %1955 = vmatpush1.msra.mxu0 %v1927
    %1956 = vmatprep.subr.mxu0 0.0
    %1957 = vmatpush1.msra.mxu0 %v1928
    %1958 = vmatprep.subr.mxu0 0.0
    %1959 = vmatpush1.msra.mxu0 %v1929
    %1960 = vmatprep.subr.mxu0 0.0
    %1961 = vmatpush1.msra.mxu0 %v1930
    %1962 = vmatprep.subr.mxu0 0.0
    %1963 = vmatpush1.msra.mxu0 %v1931
    %1964 = vmatprep.subr.mxu0 0.0
    %1965 = vmatpush1.msra.mxu0 %v1932
    %1966 = vmatprep.subr.mxu0 0.0
    %1967 = vmatpush1.msra.mxu0 %v1933
    %1968 = vmatprep.subr.mxu0 0.0
    %1969 = vmatpush1.msra.mxu0 %v1934
    %1970 = vmatprep.subr.mxu0 0.0
    %1971 = vmatpush1.msra.mxu0 %v1935
    %1972 = vmatprep.subr.mxu0 0.0
    %1973 = vmatpush1.msra.mxu0 0.0
    %1974 = vmatprep.subr.mxu0 0.0
    %1975 = vmatpush1.msra.mxu0 0.0
    %1976 = vmatprep.subr.mxu0 0.0
    %1977 = vmatpush1.msra.mxu0 0.0
    %1978 = vmatprep.subr.mxu0 0.0
    %1979 = vmatpush1.msra.mxu0 0.0
    %1980 = vmatprep.subr.mxu0 0.0
    %1981 = vmatpush1.msra.mxu0 0.0
    %1982 = vmatprep.subr.mxu0 0.0
    %1983 = vmatpush1.msra.mxu0 0.0
    %1984 = vmatprep.subr.mxu0 0.0
    %1985 = vmatpush1.msra.mxu0 0.0
    %1986 = vmatprep.subr.mxu0 0.0
    %1987 = vmatpush1.msra.mxu0 0.0
    %1988 = vmatprep.subr.mxu0 0.0
    %1989 = vmatpush1.msra.mxu0 0.0
    %1990 = vmatprep.subr.mxu0 0.0
    %1991 = vmatpush1.msra.mxu0 0.0
    %1992 = vmatprep.subr.mxu0 0.0
    %1993 = vmatpush1.msra.mxu0 0.0
    %1994 = vmatprep.subr.mxu0 0.0
    %1995 = vmatpush1.msra.mxu0 0.0
    %1996 = vmatprep.subr.mxu0 0.0
    %1997 = vmatpush1.msra.mxu0 0.0
    %1998 = vmatprep.subr.mxu0 0.0
    %1999 = vmatpush1.msra.mxu0 0.0
    %2000 = vmatprep.subr.mxu0 0.0
    %2001 = vmatpush1.msra.mxu0 0.0
    %2002 = vmatprep.subr.mxu0 0.0
    %2003 = vmatpush1.msra.mxu0 0.0
    %2004 = vmatprep.mubr.f32.mxu0 0.0
    %2005 = vmatmul.mubr.f32.gmra.mrb[0].mxu0 %v1830
    %v2006 = vpop.f32.mrb[0].mxu0
    %v2007 = vadd.f32 %v1939, %v2006
    %v2008 = vpop.f32.mrb[0].mxu0
    %2009 = vdwg.mxu0
    %s2010 = scalar_lea.vmem %s13, 128
    %v2011 = vld [vmem:[%s2010] sm:$0xff]
    %v2012 = vld [vmem:[%s2010 + $0x8] sm:$0xff]
    %v2013 = vld [vmem:[%s2010 + $0x10] sm:$0xff]
    %v2014 = vld [vmem:[%s2010 + $0x18] sm:$0xff]
    %v2015 = vld [vmem:[%s2010 + $0x20] sm:$0xff]
    %v2016 = vld [vmem:[%s2010 + $0x28] sm:$0xff]
    %v2017 = vld [vmem:[%s2010 + $0x30] sm:$0xff]
    %v2018 = vld [vmem:[%s2010 + $0x38] sm:$0xff]
    %v2019 = vld [vmem:[%s2010 + $0x40] sm:$0xff]
    %v2020 = vld [vmem:[%s2010 + $0x48] sm:$0xff]
    %v2021 = vld [vmem:[%s2010 + $0x50] sm:$0xff]
    %v2022 = vld [vmem:[%s2010 + $0x58] sm:$0xff]
    %v2023 = vld [vmem:[%s2010 + $0x60] sm:$0xff]
    %v2024 = vld [vmem:[%s2010 + $0x68] sm:$0xff]
    %v2025 = vld [vmem:[%s2010 + $0x70] sm:$0xff]
    %v2026 = vld [vmem:[%s2010 + $0x78] sm:$0xff]
    %v2027 = vlaneseq
    %v2028 = vshrl.u32 %v2027, 7
    %v2029 = vsub.s32 1, %v2028
    %v2030 = vrot.slane %v1919, %v2029
    %2031 = vmatprep.subr.mxu0 0.0
    %2032 = vmatpush1.msra.mxu0 %v2011
    %2033 = vmatprep.subr.mxu0 0.0
    %2034 = vmatpush1.msra.mxu0 %v2012
    %2035 = vmatprep.subr.mxu0 0.0
    %2036 = vmatpush1.msra.mxu0 %v2013
    %2037 = vmatprep.subr.mxu0 0.0
    %2038 = vmatpush1.msra.mxu0 %v2014
    %2039 = vmatprep.subr.mxu0 0.0
    %2040 = vmatpush1.msra.mxu0 %v2015
    %2041 = vmatprep.subr.mxu0 0.0
    %2042 = vmatpush1.msra.mxu0 %v2016
    %2043 = vmatprep.subr.mxu0 0.0
    %2044 = vmatpush1.msra.mxu0 %v2017
    %2045 = vmatprep.subr.mxu0 0.0
    %2046 = vmatpush1.msra.mxu0 %v2018
    %2047 = vmatprep.subr.mxu0 0.0
    %2048 = vmatpush1.msra.mxu0 %v2019
    %2049 = vmatprep.subr.mxu0 0.0
    %2050 = vmatpush1.msra.mxu0 %v2020
    %2051 = vmatprep.subr.mxu0 0.0
    %2052 = vmatpush1.msra.mxu0 %v2021
    %2053 = vmatprep.subr.mxu0 0.0
    %2054 = vmatpush1.msra.mxu0 %v2022
    %2055 = vmatprep.subr.mxu0 0.0
    %2056 = vmatpush1.msra.mxu0 %v2023
    %2057 = vmatprep.subr.mxu0 0.0
    %2058 = vmatpush1.msra.mxu0 %v2024
    %2059 = vmatprep.subr.mxu0 0.0
    %2060 = vmatpush1.msra.mxu0 %v2025
    %2061 = vmatprep.subr.mxu0 0.0
    %2062 = vmatpush1.msra.mxu0 %v2026
    %2063 = vmatprep.subr.mxu0 0.0
    %2064 = vmatpush1.msra.mxu0 0.0
    %2065 = vmatprep.subr.mxu0 0.0
    %2066 = vmatpush1.msra.mxu0 0.0
    %2067 = vmatprep.subr.mxu0 0.0
    %2068 = vmatpush1.msra.mxu0 0.0
    %2069 = vmatprep.subr.mxu0 0.0
    %2070 = vmatpush1.msra.mxu0 0.0
    %2071 = vmatprep.subr.mxu0 0.0
    %2072 = vmatpush1.msra.mxu0 0.0
    %2073 = vmatprep.subr.mxu0 0.0
    %2074 = vmatpush1.msra.mxu0 0.0
    %2075 = vmatprep.subr.mxu0 0.0
    %2076 = vmatpush1.msra.mxu0 0.0
    %2077 = vmatprep.subr.mxu0 0.0
    %2078 = vmatpush1.msra.mxu0 0.0
    %2079 = vmatprep.subr.mxu0 0.0
    %2080 = vmatpush1.msra.mxu0 0.0
    %2081 = vmatprep.subr.mxu0 0.0
    %2082 = vmatpush1.msra.mxu0 0.0
    %2083 = vmatprep.subr.mxu0 0.0
    %2084 = vmatpush1.msra.mxu0 0.0
    %2085 = vmatprep.subr.mxu0 0.0
    %2086 = vmatpush1.msra.mxu0 0.0
    %2087 = vmatprep.subr.mxu0 0.0
    %2088 = vmatpush1.msra.mxu0 0.0
    %2089 = vmatprep.subr.mxu0 0.0
    %2090 = vmatpush1.msra.mxu0 0.0
    %2091 = vmatprep.subr.mxu0 0.0
    %2092 = vmatpush1.msra.mxu0 0.0
    %2093 = vmatprep.subr.mxu0 0.0
    %2094 = vmatpush1.msra.mxu0 0.0
    %2095 = vmatprep.mubr.f32.mxu0 0.0
    %2096 = vmatmul.mubr.f32.gmra.mrb[0].mxu0 %v1916
    %v2097 = vpop.f32.mrb[0].mxu0
    %v2098 = vadd.f32 %v2030, %v2097
    %v2099 = vpop.f32.mrb[0].mxu0
    %2100 = vdwg.mxu0
    %s2101 = scalar_lea.vmem %s13, 256
    %v2102 = vld [vmem:[%s2101] sm:$0xff]
    %v2103 = vld [vmem:[%s2101 + $0x8] sm:$0xff]
    %v2104 = vld [vmem:[%s2101 + $0x10] sm:$0xff]
    %v2105 = vld [vmem:[%s2101 + $0x18] sm:$0xff]
    %v2106 = vld [vmem:[%s2101 + $0x20] sm:$0xff]
    %v2107 = vld [vmem:[%s2101 + $0x28] sm:$0xff]
    %v2108 = vld [vmem:[%s2101 + $0x30] sm:$0xff]
    %v2109 = vld [vmem:[%s2101 + $0x38] sm:$0xff]
    %v2110 = vld [vmem:[%s2101 + $0x40] sm:$0xff]
    %v2111 = vld [vmem:[%s2101 + $0x48] sm:$0xff]
    %v2112 = vld [vmem:[%s2101 + $0x50] sm:$0xff]
    %v2113 = vld [vmem:[%s2101 + $0x58] sm:$0xff]
    %v2114 = vld [vmem:[%s2101 + $0x60] sm:$0xff]
    %v2115 = vld [vmem:[%s2101 + $0x68] sm:$0xff]
    %v2116 = vld [vmem:[%s2101 + $0x70] sm:$0xff]
    %v2117 = vld [vmem:[%s2101 + $0x78] sm:$0xff]
    %v2118 = vlaneseq
    %v2119 = vshrl.u32 %v2118, 7
    %v2120 = vsub.s32 2, %v2119
    %v2121 = vrot.slane %v1919, %v2120
    %2122 = vmatprep.subr.mxu0 0.0
    %2123 = vmatpush1.msra.mxu0 %v2102
    %2124 = vmatprep.subr.mxu0 0.0
    %2125 = vmatpush1.msra.mxu0 %v2103
    %2126 = vmatprep.subr.mxu0 0.0
    %2127 = vmatpush1.msra.mxu0 %v2104
    %2128 = vmatprep.subr.mxu0 0.0
    %2129 = vmatpush1.msra.mxu0 %v2105
    %2130 = vmatprep.subr.mxu0 0.0
    %2131 = vmatpush1.msra.mxu0 %v2106
    %2132 = vmatprep.subr.mxu0 0.0
    %2133 = vmatpush1.msra.mxu0 %v2107
    %2134 = vmatprep.subr.mxu0 0.0
    %2135 = vmatpush1.msra.mxu0 %v2108
    %2136 = vmatprep.subr.mxu0 0.0
    %2137 = vmatpush1.msra.mxu0 %v2109
    %2138 = vmatprep.subr.mxu0 0.0
    %2139 = vmatpush1.msra.mxu0 %v2110
    %2140 = vmatprep.subr.mxu0 0.0
    %2141 = vmatpush1.msra.mxu0 %v2111
    %2142 = vmatprep.subr.mxu0 0.0
    %2143 = vmatpush1.msra.mxu0 %v2112
    %2144 = vmatprep.subr.mxu0 0.0
    %2145 = vmatpush1.msra.mxu0 %v2113
    %2146 = vmatprep.subr.mxu0 0.0
    %2147 = vmatpush1.msra.mxu0 %v2114
    %2148 = vmatprep.subr.mxu0 0.0
    %2149 = vmatpush1.msra.mxu0 %v2115
    %2150 = vmatprep.subr.mxu0 0.0
    %2151 = vmatpush1.msra.mxu0 %v2116
    %2152 = vmatprep.subr.mxu0 0.0
    %2153 = vmatpush1.msra.mxu0 %v2117
    %2154 = vmatprep.subr.mxu0 0.0
    %2155 = vmatpush1.msra.mxu0 0.0
    %2156 = vmatprep.subr.mxu0 0.0
    %2157 = vmatpush1.msra.mxu0 0.0
    %2158 = vmatprep.subr.mxu0 0.0
    %2159 = vmatpush1.msra.mxu0 0.0
    %2160 = vmatprep.subr.mxu0 0.0
    %2161 = vmatpush1.msra.mxu0 0.0
    %2162 = vmatprep.subr.mxu0 0.0
    %2163 = vmatpush1.msra.mxu0 0.0
    %2164 = vmatprep.subr.mxu0 0.0
    %2165 = vmatpush1.msra.mxu0 0.0
    %2166 = vmatprep.subr.mxu0 0.0
    %2167 = vmatpush1.msra.mxu0 0.0
    %2168 = vmatprep.subr.mxu0 0.0
    %2169 = vmatpush1.msra.mxu0 0.0
    %2170 = vmatprep.subr.mxu0 0.0
    %2171 = vmatpush1.msra.mxu0 0.0
    %2172 = vmatprep.subr.mxu0 0.0
    %2173 = vmatpush1.msra.mxu0 0.0
    %2174 = vmatprep.subr.mxu0 0.0
    %2175 = vmatpush1.msra.mxu0 0.0
    %2176 = vmatprep.subr.mxu0 0.0
    %2177 = vmatpush1.msra.mxu0 0.0
    %2178 = vmatprep.subr.mxu0 0.0
    %2179 = vmatpush1.msra.mxu0 0.0
    %2180 = vmatprep.subr.mxu0 0.0
    %2181 = vmatpush1.msra.mxu0 0.0
    %2182 = vmatprep.subr.mxu0 0.0
    %2183 = vmatpush1.msra.mxu0 0.0
    %2184 = vmatprep.subr.mxu0 0.0
    %2185 = vmatpush1.msra.mxu0 0.0
    %2186 = vmatprep.mubr.f32.mxu0 0.0
    %2187 = vmatmul.mubr.f32.gmra.mrb[0].mxu0 %v1916
    %v2188 = vpop.f32.mrb[0].mxu0
    %v2189 = vadd.f32 %v2121, %v2188
    %v2190 = vpop.f32.mrb[0].mxu0
    %2191 = vdwg.mxu0
    %v2192 = vlaneseq
    %v2193 = vshrl.u32 %v2192, 7
    %v2194 = vsub.s32 0, %v2193
    %v2195 = vrot.slane %v2007, %v2194
    %v2196 = vmul.f32 %v2195, %v2098
    %2197 = vmatprep.subr.mxu0 0.0
    %2198 = vmatpush1.msra.mxu0 %v1095
    %2199 = vmatprep.subr.mxu0 0.0
    %2200 = vmatpush1.msra.mxu0 %v1096
    %2201 = vmatprep.subr.mxu0 0.0
    %2202 = vmatpush1.msra.mxu0 %v1097
    %2203 = vmatprep.subr.mxu0 0.0
    %2204 = vmatpush1.msra.mxu0 %v1098
    %2205 = vmatprep.subr.mxu0 0.0
    %2206 = vmatpush1.msra.mxu0 %v1099
    %2207 = vmatprep.subr.mxu0 0.0
    %2208 = vmatpush1.msra.mxu0 %v1100
    %2209 = vmatprep.subr.mxu0 0.0
    %2210 = vmatpush1.msra.mxu0 %v1101
    %2211 = vmatprep.subr.mxu0 0.0
    %2212 = vmatpush1.msra.mxu0 %v1102
    %2213 = vmatprep.subr.mxu0 0.0
    %2214 = vmatpush1.msra.mxu0 %v1103
    %2215 = vmatprep.subr.mxu0 0.0
    %2216 = vmatpush1.msra.mxu0 %v1104
    %2217 = vmatprep.subr.mxu0 0.0
    %2218 = vmatpush1.msra.mxu0 %v1105
    %2219 = vmatprep.subr.mxu0 0.0
    %2220 = vmatpush1.msra.mxu0 %v1106
    %2221 = vmatprep.subr.mxu0 0.0
    %2222 = vmatpush1.msra.mxu0 %v1107
    %2223 = vmatprep.subr.mxu0 0.0
    %2224 = vmatpush1.msra.mxu0 %v1108
    %2225 = vmatprep.subr.mxu0 0.0
    %2226 = vmatpush1.msra.mxu0 %v1109
    %2227 = vmatprep.subr.mxu0 0.0
    %2228 = vmatpush1.msra.mxu0 %v1110
    %2229 = vmatprep.subr.mxu0 0.0
    %2230 = vmatpush1.msra.mxu0 0.0
    %2231 = vmatprep.subr.mxu0 0.0
    %2232 = vmatpush1.msra.mxu0 0.0
    %2233 = vmatprep.subr.mxu0 0.0
    %2234 = vmatpush1.msra.mxu0 0.0
    %2235 = vmatprep.subr.mxu0 0.0
    %2236 = vmatpush1.msra.mxu0 0.0
    %2237 = vmatprep.subr.mxu0 0.0
    %2238 = vmatpush1.msra.mxu0 0.0
    %2239 = vmatprep.subr.mxu0 0.0
    %2240 = vmatpush1.msra.mxu0 0.0
    %2241 = vmatprep.subr.mxu0 0.0
    %2242 = vmatpush1.msra.mxu0 0.0
    %2243 = vmatprep.subr.mxu0 0.0
    %2244 = vmatpush1.msra.mxu0 0.0
    %2245 = vmatprep.subr.mxu0 0.0
    %2246 = vmatpush1.msra.mxu0 0.0
    %2247 = vmatprep.subr.mxu0 0.0
    %2248 = vmatpush1.msra.mxu0 0.0
    %2249 = vmatprep.subr.mxu0 0.0
    %2250 = vmatpush1.msra.mxu0 0.0
    %2251 = vmatprep.subr.mxu0 0.0
    %2252 = vmatpush1.msra.mxu0 0.0
    %2253 = vmatprep.subr.mxu0 0.0
    %2254 = vmatpush1.msra.mxu0 0.0
    %2255 = vmatprep.subr.mxu0 0.0
    %2256 = vmatpush1.msra.mxu0 0.0
    %2257 = vmatprep.subr.mxu0 0.0
    %2258 = vmatpush1.msra.mxu0 0.0
    %2259 = vmatprep.subr.mxu0 0.0
    %2260 = vmatpush1.msra.mxu0 0.0
    %2261 = vmatprep.mubr.f32.mxu0 0.0
    %2262 = vmatmul.mubr.f32.gmra.mrb[0].mxu0 %v2196
    %v2263 = vpop.f32.mrb[0].mxu0
    %v2264 = vadd.f32 0.0, %v2263
    %v2265 = vpop.f32.mrb[0].mxu0
    %2266 = vdwg.mxu0
    %v2267 = vmul.f32 %v2264, 0.35355338
    %v2268 = vsel %vm1462, %v2267, -inf
    %v2269 = vrot.slane %v2268, 4
    %v2270 = vmax.f32 %v2268, %v2269
    %v2271 = vrot.slane %v2270, 2
    %v2272 = vmax.f32 %v2270, %v2271
    %v2273 = vrot.slane %v2272, 1
    %v2274 = vmax.f32 %v2272, %v2273
    %v2275 = vsub.f32 %v2267, %v2274
    %v2276 = vmul.f32 %v2275, 1.442695
    %v2277 = vpow.pop %v2276
    %v2278 = vsel %vm1462, %v2277, 0.0
    %v2279 = vrot.slane %v2278, 4
    %v2280 = vadd.f32 %v2278, %v2279
    %v2281 = vrot.slane %v2280, 2
    %v2282 = vadd.f32 %v2280, %v2281
    %v2283 = vrot.slane %v2282, 1
    %v2284 = vadd.f32 %v2282, %v2283
    %v2285 = vrcp.pop %v2284
    %v2286 = vmul.f32 %v2277, %v2285
    %v2288 = vsel %vm1482, %v2286, 0
    %2290 = vmatprep.subr.mxu0 0.0
    %2291 = vmatpush1.msra.mxu0 %v1111
    %2292 = vmatprep.subr.mxu0 0.0
    %2293 = vmatpush1.msra.mxu0 %v1112
    %2294 = vmatprep.subr.mxu0 0.0
    %2295 = vmatpush1.msra.mxu0 0.0
    %2296 = vmatprep.subr.mxu0 0.0
    %2297 = vmatpush1.msra.mxu0 0.0
    %2298 = vmatprep.subr.mxu0 0.0
    %2299 = vmatpush1.msra.mxu0 0.0
    %2300 = vmatprep.subr.mxu0 0.0
    %2301 = vmatpush1.msra.mxu0 0.0
    %2302 = vmatprep.subr.mxu0 0.0
    %2303 = vmatpush1.msra.mxu0 0.0
    %2304 = vmatprep.subr.mxu0 0.0
    %2305 = vmatpush1.msra.mxu0 0.0
    %2306 = vmatprep.subr.mxu0 0.0
    %2307 = vmatpush1.msra.mxu0 0.0
    %2308 = vmatprep.subr.mxu0 0.0
    %2309 = vmatpush1.msra.mxu0 0.0
    %2310 = vmatprep.subr.mxu0 0.0
    %2311 = vmatpush1.msra.mxu0 0.0
    %2312 = vmatprep.subr.mxu0 0.0
    %2313 = vmatpush1.msra.mxu0 0.0
    %2314 = vmatprep.subr.mxu0 0.0
    %2315 = vmatpush1.msra.mxu0 0.0
    %2316 = vmatprep.subr.mxu0 0.0
    %2317 = vmatpush1.msra.mxu0 0.0
    %2318 = vmatprep.subr.mxu0 0.0
    %2319 = vmatpush1.msra.mxu0 0.0
    %2320 = vmatprep.subr.mxu0 0.0
    %2321 = vmatpush1.msra.mxu0 0.0
    %2322 = vmatprep.subr.mxu0 0.0
    %2323 = vmatpush1.msra.mxu0 0.0
    %2324 = vmatprep.subr.mxu0 0.0
    %2325 = vmatpush1.msra.mxu0 0.0
    %2326 = vmatprep.subr.mxu0 0.0
    %2327 = vmatpush1.msra.mxu0 0.0
    %2328 = vmatprep.subr.mxu0 0.0
    %2329 = vmatpush1.msra.mxu0 0.0
    %2330 = vmatprep.subr.mxu0 0.0
    %2331 = vmatpush1.msra.mxu0 0.0
    %2332 = vmatprep.subr.mxu0 0.0
    %2333 = vmatpush1.msra.mxu0 0.0
    %2334 = vmatprep.subr.mxu0 0.0
    %2335 = vmatpush1.msra.mxu0 0.0
    %2336 = vmatprep.subr.mxu0 0.0
    %2337 = vmatpush1.msra.mxu0 0.0
    %2338 = vmatprep.subr.mxu0 0.0
    %2339 = vmatpush1.msra.mxu0 0.0
    %2340 = vmatprep.subr.mxu0 0.0
    %2341 = vmatpush1.msra.mxu0 0.0
    %2342 = vmatprep.subr.mxu0 0.0
    %2343 = vmatpush1.msra.mxu0 0.0
    %2344 = vmatprep.subr.mxu0 0.0
    %2345 = vmatpush1.msra.mxu0 0.0
    %2346 = vmatprep.subr.mxu0 0.0
    %2347 = vmatpush1.msra.mxu0 0.0
    %2348 = vmatprep.subr.mxu0 0.0
    %2349 = vmatpush1.msra.mxu0 0.0
    %2350 = vmatprep.subr.mxu0 0.0
    %2351 = vmatpush1.msra.mxu0 0.0
    %2352 = vmatprep.subr.mxu0 0.0
    %2353 = vmatpush1.msra.mxu0 0.0
    %2354 = vmatprep.mubr.f32.mxu0 0.0
    %2355 = vmatmul.mubr.f32.gmra.mrb[0].mxu0 %v2288
    %v2356 = vpop.f32.mrb[0].mxu0
    %v2357 = vadd.f32 0.0, %v2356
    %v2358 = vpop.f32.mrb[0].mxu0
    %2359 = vdwg.mxu0
    %v2360 = vmul.f32 %v2357, %v2189
    %v2361 = vsel %vm412, %v2360, 0.0
    %v2362 = vrot.slane %v2361, 4
    %v2363 = vadd.f32 %v2361, %v2362
    %v2364 = vrot.slane %v2363, 2
    %v2365 = vadd.f32 %v2363, %v2364
    %v2366 = vrot.slane %v2365, 1
    %v2367 = vadd.f32 %v2365, %v2366
    %v2368 = vlaneseq
    %v2369 = vshrl.u32 %v2368, 7
    %v2370 = vsub.s32 1, %v2369
    %v2371 = vrot.slane %v2007, %v2370
    %v2372 = vmul.f32 %v2371, %v2098
    %2373 = vmatprep.subr.mxu0 0.0
    %2374 = vmatpush1.msra.mxu0 %v1095
    %2375 = vmatprep.subr.mxu0 0.0
    %2376 = vmatpush1.msra.mxu0 %v1096
    %2377 = vmatprep.subr.mxu0 0.0
    %2378 = vmatpush1.msra.mxu0 %v1097
    %2379 = vmatprep.subr.mxu0 0.0
    %2380 = vmatpush1.msra.mxu0 %v1098
    %2381 = vmatprep.subr.mxu0 0.0
    %2382 = vmatpush1.msra.mxu0 %v1099
    %2383 = vmatprep.subr.mxu0 0.0
    %2384 = vmatpush1.msra.mxu0 %v1100
    %2385 = vmatprep.subr.mxu0 0.0
    %2386 = vmatpush1.msra.mxu0 %v1101
    %2387 = vmatprep.subr.mxu0 0.0
    %2388 = vmatpush1.msra.mxu0 %v1102
    %2389 = vmatprep.subr.mxu0 0.0
    %2390 = vmatpush1.msra.mxu0 %v1103
    %2391 = vmatprep.subr.mxu0 0.0
    %2392 = vmatpush1.msra.mxu0 %v1104
    %2393 = vmatprep.subr.mxu0 0.0
    %2394 = vmatpush1.msra.mxu0 %v1105
    %2395 = vmatprep.subr.mxu0 0.0
    %2396 = vmatpush1.msra.mxu0 %v1106
    %2397 = vmatprep.subr.mxu0 0.0
    %2398 = vmatpush1.msra.mxu0 %v1107
    %2399 = vmatprep.subr.mxu0 0.0
    %2400 = vmatpush1.msra.mxu0 %v1108
    %2401 = vmatprep.subr.mxu0 0.0
    %2402 = vmatpush1.msra.mxu0 %v1109
    %2403 = vmatprep.subr.mxu0 0.0
    %2404 = vmatpush1.msra.mxu0 %v1110
    %2405 = vmatprep.subr.mxu0 0.0
    %2406 = vmatpush1.msra.mxu0 0.0
    %2407 = vmatprep.subr.mxu0 0.0
    %2408 = vmatpush1.msra.mxu0 0.0
    %2409 = vmatprep.subr.mxu0 0.0
    %2410 = vmatpush1.msra.mxu0 0.0
    %2411 = vmatprep.subr.mxu0 0.0
    %2412 = vmatpush1.msra.mxu0 0.0
    %2413 = vmatprep.subr.mxu0 0.0
    %2414 = vmatpush1.msra.mxu0 0.0
    %2415 = vmatprep.subr.mxu0 0.0
    %2416 = vmatpush1.msra.mxu0 0.0
    %2417 = vmatprep.subr.mxu0 0.0
    %2418 = vmatpush1.msra.mxu0 0.0
    %2419 = vmatprep.subr.mxu0 0.0
    %2420 = vmatpush1.msra.mxu0 0.0
    %2421 = vmatprep.subr.mxu0 0.0
    %2422 = vmatpush1.msra.mxu0 0.0
    %2423 = vmatprep.subr.mxu0 0.0
    %2424 = vmatpush1.msra.mxu0 0.0
    %2425 = vmatprep.subr.mxu0 0.0
    %2426 = vmatpush1.msra.mxu0 0.0
    %2427 = vmatprep.subr.mxu0 0.0
    %2428 = vmatpush1.msra.mxu0 0.0
    %2429 = vmatprep.subr.mxu0 0.0
    %2430 = vmatpush1.msra.mxu0 0.0
    %2431 = vmatprep.subr.mxu0 0.0
    %2432 = vmatpush1.msra.mxu0 0.0
    %2433 = vmatprep.subr.mxu0 0.0
    %2434 = vmatpush1.msra.mxu0 0.0
    %2435 = vmatprep.subr.mxu0 0.0
    %2436 = vmatpush1.msra.mxu0 0.0
    %2437 = vmatprep.mubr.f32.mxu0 0.0
    %2438 = vmatmul.mubr.f32.gmra.mrb[0].mxu0 %v2372
    %v2439 = vpop.f32.mrb[0].mxu0
    %v2440 = vadd.f32 0.0, %v2439
    %v2441 = vpop.f32.mrb[0].mxu0
    %2442 = vdwg.mxu0
    %v2443 = vmul.f32 %v2440, 0.35355338
    %v2444 = vsel %vm1462, %v2443, -inf
    %v2445 = vrot.slane %v2444, 4
    %v2446 = vmax.f32 %v2444, %v2445
    %v2447 = vrot.slane %v2446, 2
    %v2448 = vmax.f32 %v2446, %v2447
    %v2449 = vrot.slane %v2448, 1
    %v2450 = vmax.f32 %v2448, %v2449
    %v2451 = vsub.f32 %v2443, %v2450
    %v2452 = vmul.f32 %v2451, 1.442695
    %v2453 = vpow.pop %v2452
    %v2454 = vsel %vm1462, %v2453, 0.0
    %v2455 = vrot.slane %v2454, 4
    %v2456 = vadd.f32 %v2454, %v2455
    %v2457 = vrot.slane %v2456, 2
    %v2458 = vadd.f32 %v2456, %v2457
    %v2459 = vrot.slane %v2458, 1
    %v2460 = vadd.f32 %v2458, %v2459
    %v2461 = vrcp.pop %v2460
    %v2462 = vmul.f32 %v2453, %v2461
    %v2464 = vsel %vm1482, %v2462, 0
    %2466 = vmatprep.subr.mxu0 0.0
    %2467 = vmatpush1.msra.mxu0 %v1111
    %2468 = vmatprep.subr.mxu0 0.0
    %2469 = vmatpush1.msra.mxu0 %v1112
    %2470 = vmatprep.subr.mxu0 0.0
    %2471 = vmatpush1.msra.mxu0 0.0
    %2472 = vmatprep.subr.mxu0 0.0
    %2473 = vmatpush1.msra.mxu0 0.0
    %2474 = vmatprep.subr.mxu0 0.0
    %2475 = vmatpush1.msra.mxu0 0.0
    %2476 = vmatprep.subr.mxu0 0.0
    %2477 = vmatpush1.msra.mxu0 0.0
    %2478 = vmatprep.subr.mxu0 0.0
    %2479 = vmatpush1.msra.mxu0 0.0
    %2480 = vmatprep.subr.mxu0 0.0
    %2481 = vmatpush1.msra.mxu0 0.0
    %2482 = vmatprep.subr.mxu0 0.0
    %2483 = vmatpush1.msra.mxu0 0.0
    %2484 = vmatprep.subr.mxu0 0.0
    %2485 = vmatpush1.msra.mxu0 0.0
    %2486 = vmatprep.subr.mxu0 0.0
    %2487 = vmatpush1.msra.mxu0 0.0
    %2488 = vmatprep.subr.mxu0 0.0
    %2489 = vmatpush1.msra.mxu0 0.0
    %2490 = vmatprep.subr.mxu0 0.0
    %2491 = vmatpush1.msra.mxu0 0.0
    %2492 = vmatprep.subr.mxu0 0.0
    %2493 = vmatpush1.msra.mxu0 0.0
    %2494 = vmatprep.subr.mxu0 0.0
    %2495 = vmatpush1.msra.mxu0 0.0
    %2496 = vmatprep.subr.mxu0 0.0
    %2497 = vmatpush1.msra.mxu0 0.0
    %2498 = vmatprep.subr.mxu0 0.0
    %2499 = vmatpush1.msra.mxu0 0.0
    %2500 = vmatprep.subr.mxu0 0.0
    %2501 = vmatpush1.msra.mxu0 0.0
    %2502 = vmatprep.subr.mxu0 0.0
    %2503 = vmatpush1.msra.mxu0 0.0
    %2504 = vmatprep.subr.mxu0 0.0
    %2505 = vmatpush1.msra.mxu0 0.0
    %2506 = vmatprep.subr.mxu0 0.0
    %2507 = vmatpush1.msra.mxu0 0.0
    %2508 = vmatprep.subr.mxu0 0.0
    %2509 = vmatpush1.msra.mxu0 0.0
    %2510 = vmatprep.subr.mxu0 0.0
    %2511 = vmatpush1.msra.mxu0 0.0
    %2512 = vmatprep.subr.mxu0 0.0
    %2513 = vmatpush1.msra.mxu0 0.0
    %2514 = vmatprep.subr.mxu0 0.0
    %2515 = vmatpush1.msra.mxu0 0.0
    %2516 = vmatprep.subr.mxu0 0.0
    %2517 = vmatpush1.msra.mxu0 0.0
    %2518 = vmatprep.subr.mxu0 0.0
    %2519 = vmatpush1.msra.mxu0 0.0
    %2520 = vmatprep.subr.mxu0 0.0
    %2521 = vmatpush1.msra.mxu0 0.0
    %2522 = vmatprep.subr.mxu0 0.0
    %2523 = vmatpush1.msra.mxu0 0.0
    %2524 = vmatprep.subr.mxu0 0.0
    %2525 = vmatpush1.msra.mxu0 0.0
    %2526 = vmatprep.subr.mxu0 0.0
    %2527 = vmatpush1.msra.mxu0 0.0
    %2528 = vmatprep.subr.mxu0 0.0
    %2529 = vmatpush1.msra.mxu0 0.0
    %2530 = vmatprep.mubr.f32.mxu0 0.0
    %2531 = vmatmul.mubr.f32.gmra.mrb[0].mxu0 %v2464
    %v2532 = vpop.f32.mrb[0].mxu0
    %v2533 = vadd.f32 0.0, %v2532
    %v2534 = vpop.f32.mrb[0].mxu0
    %2535 = vdwg.mxu0
    %v2536 = vmul.f32 %v2533, %v2189
    %v2537 = vsel %vm412, %v2536, 0.0
    %v2538 = vrot.slane %v2537, 4
    %v2539 = vadd.f32 %v2537, %v2538
    %v2540 = vrot.slane %v2539, 2
    %v2541 = vadd.f32 %v2539, %v2540
    %v2542 = vrot.slane %v2541, 1
    %v2543 = vadd.f32 %v2541, %v2542
    %v2544 = vsel %vm1740, %v2367, %v2543
    %s2545 = scalar_lea.vmem %s13, 384
    %v2546 = vld [vmem:[%s2545] sm:$0xff]
    %v2547 = vld [vmem:[%s2545 + $0x8] sm:$0xff]
    %v2548 = vld [vmem:[%s2545 + $0x10] sm:$0xff]
    %v2549 = vld [vmem:[%s2545 + $0x18] sm:$0xff]
    %v2550 = vld [vmem:[%s2545 + $0x20] sm:$0xff]
    %v2551 = vld [vmem:[%s2545 + $0x28] sm:$0xff]
    %v2552 = vld [vmem:[%s2545 + $0x30] sm:$0xff]
    %v2553 = vld [vmem:[%s2545 + $0x38] sm:$0xff]
    %v2554 = vld [vmem:[%s2545 + $0x40] sm:$0xff]
    %v2555 = vld [vmem:[%s2545 + $0x48] sm:$0xff]
    %v2556 = vld [vmem:[%s2545 + $0x50] sm:$0xff]
    %v2557 = vld [vmem:[%s2545 + $0x58] sm:$0xff]
    %v2558 = vld [vmem:[%s2545 + $0x60] sm:$0xff]
    %v2559 = vld [vmem:[%s2545 + $0x68] sm:$0xff]
    %v2560 = vld [vmem:[%s2545 + $0x70] sm:$0xff]
    %v2561 = vld [vmem:[%s2545 + $0x78] sm:$0xff]
    %v2562 = vlaneseq
    %v2563 = vshrl.u32 %v2562, 7
    %v2564 = vsub.s32 3, %v2563
    %v2565 = vrot.slane %v1919, %v2564
    %2566 = vmatprep.subr.mxu0 0.0
    %2567 = vmatpush1.msra.mxu0 %v2546
    %2568 = vmatprep.subr.mxu0 0.0
    %2569 = vmatpush1.msra.mxu0 %v2547
    %2570 = vmatprep.subr.mxu0 0.0
    %2571 = vmatpush1.msra.mxu0 %v2548
    %2572 = vmatprep.subr.mxu0 0.0
    %2573 = vmatpush1.msra.mxu0 %v2549
    %2574 = vmatprep.subr.mxu0 0.0
    %2575 = vmatpush1.msra.mxu0 %v2550
    %2576 = vmatprep.subr.mxu0 0.0
    %2577 = vmatpush1.msra.mxu0 %v2551
    %2578 = vmatprep.subr.mxu0 0.0
    %2579 = vmatpush1.msra.mxu0 %v2552
    %2580 = vmatprep.subr.mxu0 0.0
    %2581 = vmatpush1.msra.mxu0 %v2553
    %2582 = vmatprep.subr.mxu0 0.0
    %2583 = vmatpush1.msra.mxu0 %v2554
    %2584 = vmatprep.subr.mxu0 0.0
    %2585 = vmatpush1.msra.mxu0 %v2555
    %2586 = vmatprep.subr.mxu0 0.0
    %2587 = vmatpush1.msra.mxu0 %v2556
    %2588 = vmatprep.subr.mxu0 0.0
    %2589 = vmatpush1.msra.mxu0 %v2557
    %2590 = vmatprep.subr.mxu0 0.0
    %2591 = vmatpush1.msra.mxu0 %v2558
    %2592 = vmatprep.subr.mxu0 0.0
    %2593 = vmatpush1.msra.mxu0 %v2559
    %2594 = vmatprep.subr.mxu0 0.0
    %2595 = vmatpush1.msra.mxu0 %v2560
    %2596 = vmatprep.subr.mxu0 0.0
    %2597 = vmatpush1.msra.mxu0 %v2561
    %2598 = vmatprep.subr.mxu0 0.0
    %2599 = vmatpush1.msra.mxu0 0.0
    %2600 = vmatprep.subr.mxu0 0.0
    %2601 = vmatpush1.msra.mxu0 0.0
    %2602 = vmatprep.subr.mxu0 0.0
    %2603 = vmatpush1.msra.mxu0 0.0
    %2604 = vmatprep.subr.mxu0 0.0
    %2605 = vmatpush1.msra.mxu0 0.0
    %2606 = vmatprep.subr.mxu0 0.0
    %2607 = vmatpush1.msra.mxu0 0.0
    %2608 = vmatprep.subr.mxu0 0.0
    %2609 = vmatpush1.msra.mxu0 0.0
    %2610 = vmatprep.subr.mxu0 0.0
    %2611 = vmatpush1.msra.mxu0 0.0
    %2612 = vmatprep.subr.mxu0 0.0
    %2613 = vmatpush1.msra.mxu0 0.0
    %2614 = vmatprep.subr.mxu0 0.0
    %2615 = vmatpush1.msra.mxu0 0.0
    %2616 = vmatprep.subr.mxu0 0.0
    %2617 = vmatpush1.msra.mxu0 0.0
    %2618 = vmatprep.subr.mxu0 0.0
    %2619 = vmatpush1.msra.mxu0 0.0
    %2620 = vmatprep.subr.mxu0 0.0
    %2621 = vmatpush1.msra.mxu0 0.0
    %2622 = vmatprep.subr.mxu0 0.0
    %2623 = vmatpush1.msra.mxu0 0.0
    %2624 = vmatprep.subr.mxu0 0.0
    %2625 = vmatpush1.msra.mxu0 0.0
    %2626 = vmatprep.subr.mxu0 0.0
    %2627 = vmatpush1.msra.mxu0 0.0
    %2628 = vmatprep.subr.mxu0 0.0
    %2629 = vmatpush1.msra.mxu0 0.0
    %2630 = vmatprep.mubr.f32.mxu0 0.0
    %2631 = vmatmul.mubr.f32.gmra.mrb[0].mxu0 %v2544
    %v2632 = vpop.f32.mrb[0].mxu0
    %v2633 = vadd.f32 %v2565, %v2632
    %v2634 = vpop.f32.mrb[0].mxu0
    %2635 = vdwg.mxu0
    %v2636 = vld [vmem:[%s15] sm:$0xff]
    %v2637 = vld [vmem:[%s15 + $0x8] sm:$0xff]
    %v2638 = vld [vmem:[%s15 + $0x10] sm:$0xff]
    %v2639 = vld [vmem:[%s15 + $0x18] sm:$0xff]
    %v2640 = vld [vmem:[%s15 + $0x20] sm:$0xff]
    %v2641 = vld [vmem:[%s15 + $0x28] sm:$0xff]
    %v2642 = vld [vmem:[%s15 + $0x30] sm:$0xff]
    %v2643 = vld [vmem:[%s15 + $0x38] sm:$0xff]
    %v2644 = vld [vmem:[%s15 + $0x40] sm:$0xff]
    %v2645 = vld [vmem:[%s15 + $0x48] sm:$0xff]
    %v2646 = vld [vmem:[%s15 + $0x50] sm:$0xff]
    %v2647 = vld [vmem:[%s15 + $0x58] sm:$0xff]
    %v2648 = vld [vmem:[%s15 + $0x60] sm:$0xff]
    %v2649 = vld [vmem:[%s15 + $0x68] sm:$0xff]
    %v2650 = vld [vmem:[%s15 + $0x70] sm:$0xff]
    %v2651 = vld [vmem:[%s15 + $0x78] sm:$0xff]
    %v2652 = vld [vmem:[%s16] sm:$0x1]
    %v2654 = vlaneseq
    %v2655 = vshrl.u32 %v2654, 7
    %v2656 = vsub.s32 0, %v2655
    %v2657 = vrot.slane %v2652, %v2656
    %2659 = vmatprep.subr.mxu0 0.0
    %2660 = vmatpush1.msra.mxu0 %v2636
    %2661 = vmatprep.subr.mxu0 0.0
    %2662 = vmatpush1.msra.mxu0 %v2637
    %2663 = vmatprep.subr.mxu0 0.0
    %2664 = vmatpush1.msra.mxu0 %v2638
    %2665 = vmatprep.subr.mxu0 0.0
    %2666 = vmatpush1.msra.mxu0 %v2639
    %2667 = vmatprep.subr.mxu0 0.0
    %2668 = vmatpush1.msra.mxu0 %v2640
    %2669 = vmatprep.subr.mxu0 0.0
    %2670 = vmatpush1.msra.mxu0 %v2641
    %2671 = vmatprep.subr.mxu0 0.0
    %2672 = vmatpush1.msra.mxu0 %v2642
    %2673 = vmatprep.subr.mxu0 0.0
    %2674 = vmatpush1.msra.mxu0 %v2643
    %2675 = vmatprep.subr.mxu0 0.0
    %2676 = vmatpush1.msra.mxu0 %v2644
    %2677 = vmatprep.subr.mxu0 0.0
    %2678 = vmatpush1.msra.mxu0 %v2645
    %2679 = vmatprep.subr.mxu0 0.0
    %2680 = vmatpush1.msra.mxu0 %v2646
    %2681 = vmatprep.subr.mxu0 0.0
    %2682 = vmatpush1.msra.mxu0 %v2647
    %2683 = vmatprep.subr.mxu0 0.0
    %2684 = vmatpush1.msra.mxu0 %v2648
    %2685 = vmatprep.subr.mxu0 0.0
    %2686 = vmatpush1.msra.mxu0 %v2649
    %2687 = vmatprep.subr.mxu0 0.0
    %2688 = vmatpush1.msra.mxu0 %v2650
    %2689 = vmatprep.subr.mxu0 0.0
    %2690 = vmatpush1.msra.mxu0 %v2651
    %2691 = vmatprep.subr.mxu0 0.0
    %2692 = vmatpush1.msra.mxu0 0.0
    %2693 = vmatprep.subr.mxu0 0.0
    %2694 = vmatpush1.msra.mxu0 0.0
    %2695 = vmatprep.subr.mxu0 0.0
    %2696 = vmatpush1.msra.mxu0 0.0
    %2697 = vmatprep.subr.mxu0 0.0
    %2698 = vmatpush1.msra.mxu0 0.0
    %2699 = vmatprep.subr.mxu0 0.0
    %2700 = vmatpush1.msra.mxu0 0.0
    %2701 = vmatprep.subr.mxu0 0.0
    %2702 = vmatpush1.msra.mxu0 0.0
    %2703 = vmatprep.subr.mxu0 0.0
    %2704 = vmatpush1.msra.mxu0 0.0
    %2705 = vmatprep.subr.mxu0 0.0
    %2706 = vmatpush1.msra.mxu0 0.0
    %2707 = vmatprep.subr.mxu0 0.0
    %2708 = vmatpush1.msra.mxu0 0.0
    %2709 = vmatprep.subr.mxu0 0.0
    %2710 = vmatpush1.msra.mxu0 0.0
    %2711 = vmatprep.subr.mxu0 0.0
    %2712 = vmatpush1.msra.mxu0 0.0
    %2713 = vmatprep.subr.mxu0 0.0
    %2714 = vmatpush1.msra.mxu0 0.0
    %2715 = vmatprep.subr.mxu0 0.0
    %2716 = vmatpush1.msra.mxu0 0.0
    %2717 = vmatprep.subr.mxu0 0.0
    %2718 = vmatpush1.msra.mxu0 0.0
    %2719 = vmatprep.subr.mxu0 0.0
    %2720 = vmatpush1.msra.mxu0 0.0
    %2721 = vmatprep.subr.mxu0 0.0
    %2722 = vmatpush1.msra.mxu0 0.0
    %2723 = vmatprep.mubr.f32.mxu0 0.0
    %2724 = vmatmul.mubr.f32.gmra.mrb[0].mxu0 %v2633
    %v2725 = vpop.f32.mrb[0].mxu0
    %v2726 = vadd.f32 %v2657, %v2725
    %v2727 = vpop.f32.mrb[0].mxu0
    %2728 = vdwg.mxu0
    %v2729 = vmax.f32 %v2726, 0.0
    %v2730 = vld [vmem:[%s17] sm:$0xff]
    %v2731 = vld [vmem:[%s17 + $0x8] sm:$0xff]
    %v2732 = vld [vmem:[%s17 + $0x10] sm:$0xff]
    %v2733 = vld [vmem:[%s17 + $0x18] sm:$0xff]
    %v2734 = vld [vmem:[%s17 + $0x20] sm:$0xff]
    %v2735 = vld [vmem:[%s17 + $0x28] sm:$0xff]
    %v2736 = vld [vmem:[%s17 + $0x30] sm:$0xff]
    %v2737 = vld [vmem:[%s17 + $0x38] sm:$0xff]
    %v2738 = vld [vmem:[%s18] sm:$0x1]
    %v2740 = vlaneseq
    %v2741 = vshrl.u32 %v2740, 7
    %v2742 = vsub.s32 0, %v2741
    %v2743 = vrot.slane %v2738, %v2742
    %vm2745 = vcmask 523264
    %v2747 = vsel %vm2745, %v2729, 0
    %2749 = vmatprep.subr.mxu0 0.0
    %2750 = vmatpush1.msra.mxu0 %v2730
    %2751 = vmatprep.subr.mxu0 0.0
    %2752 = vmatpush1.msra.mxu0 %v2731
    %2753 = vmatprep.subr.mxu0 0.0
    %2754 = vmatpush1.msra.mxu0 %v2732
    %2755 = vmatprep.subr.mxu0 0.0
    %2756 = vmatpush1.msra.mxu0 %v2733
    %2757 = vmatprep.subr.mxu0 0.0
    %2758 = vmatpush1.msra.mxu0 %v2734
    %2759 = vmatprep.subr.mxu0 0.0
    %2760 = vmatpush1.msra.mxu0 %v2735
    %2761 = vmatprep.subr.mxu0 0.0
    %2762 = vmatpush1.msra.mxu0 %v2736
    %2763 = vmatprep.subr.mxu0 0.0
    %2764 = vmatpush1.msra.mxu0 %v2737
    %2765 = vmatprep.subr.mxu0 0.0
    %2766 = vmatpush1.msra.mxu0 0.0
    %2767 = vmatprep.subr.mxu0 0.0
    %2768 = vmatpush1.msra.mxu0 0.0
    %2769 = vmatprep.subr.mxu0 0.0
    %2770 = vmatpush1.msra.mxu0 0.0
    %2771 = vmatprep.subr.mxu0 0.0
    %2772 = vmatpush1.msra.mxu0 0.0
    %2773 = vmatprep.subr.mxu0 0.0
    %2774 = vmatpush1.msra.mxu0 0.0
    %2775 = vmatprep.subr.mxu0 0.0
    %2776 = vmatpush1.msra.mxu0 0.0
    %2777 = vmatprep.subr.mxu0 0.0
    %2778 = vmatpush1.msra.mxu0 0.0
    %2779 = vmatprep.subr.mxu0 0.0
    %2780 = vmatpush1.msra.mxu0 0.0
    %2781 = vmatprep.subr.mxu0 0.0
    %2782 = vmatpush1.msra.mxu0 0.0
    %2783 = vmatprep.subr.mxu0 0.0
    %2784 = vmatpush1.msra.mxu0 0.0
    %2785 = vmatprep.subr.mxu0 0.0
    %2786 = vmatpush1.msra.mxu0 0.0
    %2787 = vmatprep.subr.mxu0 0.0
    %2788 = vmatpush1.msra.mxu0 0.0
    %2789 = vmatprep.subr.mxu0 0.0
    %2790 = vmatpush1.msra.mxu0 0.0
    %2791 = vmatprep.subr.mxu0 0.0
    %2792 = vmatpush1.msra.mxu0 0.0
    %2793 = vmatprep.subr.mxu0 0.0
    %2794 = vmatpush1.msra.mxu0 0.0
    %2795 = vmatprep.subr.mxu0 0.0
    %2796 = vmatpush1.msra.mxu0 0.0
    %2797 = vmatprep.subr.mxu0 0.0
    %2798 = vmatpush1.msra.mxu0 0.0
    %2799 = vmatprep.subr.mxu0 0.0
    %2800 = vmatpush1.msra.mxu0 0.0
    %2801 = vmatprep.subr.mxu0 0.0
    %2802 = vmatpush1.msra.mxu0 0.0
    %2803 = vmatprep.subr.mxu0 0.0
    %2804 = vmatpush1.msra.mxu0 0.0
    %2805 = vmatprep.subr.mxu0 0.0
    %2806 = vmatpush1.msra.mxu0 0.0
    %2807 = vmatprep.subr.mxu0 0.0
    %2808 = vmatpush1.msra.mxu0 0.0
    %2809 = vmatprep.subr.mxu0 0.0
    %2810 = vmatpush1.msra.mxu0 0.0
    %2811 = vmatprep.subr.mxu0 0.0
    %2812 = vmatpush1.msra.mxu0 0.0
    %2813 = vmatprep.mubr.f32.mxu0 0.0
    %2814 = vmatmul.mubr.f32.gmra.mrb[0].mxu0 %v2747
    %v2815 = vpop.f32.mrb[0].mxu0
    %v2816 = vadd.f32 %v2743, %v2815
    %v2817 = vpop.f32.mrb[0].mxu0
    %2818 = vdwg.mxu0
    %vm2819 = vcmask 9216
    %2820 = vst.msk [vmem:[#allocation2] sm:$0x3] %vm2819, %v2816
    // Predicated region
    $region78: #{multi_modal_attention_forward.1} parent=1 // pred_check
      _
    $region79: #{multi_modal_attention_forward.1} parent=1 // pred_check_branch
      %2822 = sbr.rel (0) target = $region81
    $region80: #{multi_modal_attention_forward.1} parent=1 // pred_region
      %s2824 = ssub.s32 32, 32
      %2825 = vsyncadd [#allocation3], %s2824
      %s2827 = sshll.u32 [#allocation2], 4
      %s2828 = int_to_ptr.vmem [resolvable:$true] %s2827
      %2830 = dma.vmem_to_hbm [thread:$0]  %s2828, 32, %s19, [#allocation3]
    $region81: #{multi_modal_attention_forward.1} parent=1 // pred_fallthru
      _
    // Predicated region
    $region82: #{multi_modal_attention_forward.1} parent=1 // pred_check
      _
    $region83: #{multi_modal_attention_forward.1} parent=1 // pred_check_branch
      %2832 = sbr.rel (0) target = $region85
    $region84: #{multi_modal_attention_forward.1} parent=1 // pred_region
      %2833 = dma.done [#allocation3], 32
    $region85: #{multi_modal_attention_forward.1} parent=1 // pred_fallthru
      _
    %2834 = vsyncpa [#allocation3], 1

</llo_original>
